<compile_context>
chip_gen: v7x
topology: tpu7x:2x2x1
jax: 0.10.0
libtpu: 0.0.40
codegen_flags: <defaults>
</compile_context>

<pallas_src>
import jax
import jax.numpy as jnp
from jax.experimental import pallas as pl
from jax.experimental.pallas import tpu as pltpu

VGG16_FEAT_DIM = 512   # vgg16_bn .features output channels
GEM_EPS = 1e-6         # GeM default eps


def _roundup(a, m):
    return (a + m - 1) // m * m


# ------------- kernels: x tile is (TB, C, HW); reduce over HW (lane axis) ----

def _avg_kernel(x_ref, o_ref):
    x = x_ref[...].astype(jnp.float32)                      # (TB, C, HW)
    o_ref[...] = jnp.mean(x, axis=-1).astype(o_ref.dtype)   # (TB, C) lane-dense


def _max_kernel(x_ref, o_ref):
    # max is exact in the input dtype; cast only at the store.
    o_ref[...] = jnp.max(x_ref[...], axis=-1).astype(o_ref.dtype)


def _avg_max_kernel(x_ref, o_ref):
    x = x_ref[...]
    c = x.shape[1]
    avg = jnp.mean(x.astype(jnp.float32), axis=-1)          # (TB, C), f32 acc
    mx = jnp.max(x, axis=-1)                                 # (TB, C)
    # torch.cat((avg, max), dim=1) via two direct lane-dense half-stores.
    o_ref[:, :c] = avg.astype(o_ref.dtype)
    o_ref[:, c:] = mx.astype(o_ref.dtype)


def _gem_kernel(p_ref, invp_ref, x_ref, o_ref):
    x = x_ref[...].astype(jnp.float32)                      # (TB, C, HW)
    p = p_ref[...].astype(jnp.float32)[None, :, :]          # (1, C, 1) -> HW bcast
    xc = jnp.maximum(x, GEM_EPS)                            # clamp(min=eps)
    xp = jnp.exp(jnp.log(xc) * p)                           # x.pow(p), per-channel p
    pooled = jnp.mean(xp, axis=-1)                          # avg_pool2d -> (TB, C)
    inv_p = invp_ref[...].astype(jnp.float32)               # (1, C), lane-aligned
    o_ref[...] = jnp.exp(jnp.log(pooled) * inv_p).astype(o_ref.dtype)


# ------------- wrapper --------------------------------------------------------

def ft_net_vgg16_forward(feat_nchw, pool="avg", gem_p=None, block_b=32):
    """ft_net_VGG16.forward tail: pool the vgg16_bn feature map, flatten.

    feat_nchw: (B, 512, H, W) backbone feature map (PyTorch NCHW layout).
    Returns (B, 512) for 'avg'/'max'/'gem', (B, 1024) for 'avg+max'.
    """
    B, C, H, W = feat_nchw.shape
    HW = H * W
    # Free reshape only (no transpose, no pad): the kernel reduces over HW on
    # the lane axis and stores (B, C) with C=512 lane-dense.
    x = feat_nchw.reshape(B, C, HW)

    # Batch tile: 8-aligned, >= 2 grid steps whenever B > 8 (v7x megacore),
    # capped at block_b.
    if B <= 8:
        TB = B
    else:
        TB = max(8, min(block_b, 8 * pl.cdiv(pl.cdiv(B, 2), 8)))
    grid = (pl.cdiv(B, TB),)

    cout = 2 * C if pool == "avg+max" else C
    itemsize = jnp.dtype(feat_nchw.dtype).itemsize

    x_spec = pl.BlockSpec((TB, C, HW), lambda b: (b, 0, 0))
    out_spec = pl.BlockSpec((TB, cout), lambda b: (b, 0))
    out_shape = jax.ShapeDtypeStruct((B, cout), feat_nchw.dtype)

    # Scoped-VMEM budget from the real (lane/sublane padded) tile footprint,
    # double-buffered, plus the tiny resident GeM params and slack.
    x_tile_bytes = TB * _roundup(C, 16) * _roundup(HW, 128) * itemsize
    o_tile_bytes = TB * _roundup(cout, 128) * itemsize
    p_tile_bytes = (_roundup(C, 8) * 128 + 8 * _roundup(C, 128)) * 4
    need = 2 * (x_tile_bytes + o_tile_bytes + p_tile_bytes) + (2 << 20)
    vmem_limit = int(min(max(need, 16 << 20), 48 << 20))

    cparams = pltpu.CompilerParams(dimension_semantics=("parallel",),
                                   vmem_limit_bytes=vmem_limit)

    nelem = B * C * HW
    bytes_acc = nelem * itemsize + B * cout * itemsize
    if pool == "gem":
        flops, trans = 3 * nelem, 2 * nelem
    elif pool == "avg+max":
        flops, trans = 2 * nelem, 0
    else:
        flops, trans = nelem, 0
    cost = pl.CostEstimate(flops=flops, transcendentals=trans,
                           bytes_accessed=bytes_acc)

    if pool == "avg":
        y = pl.pallas_call(_avg_kernel, grid=grid, in_specs=[x_spec],
                           out_specs=out_spec, out_shape=out_shape,
                           compiler_params=cparams, cost_estimate=cost)(x)
    elif pool == "max":
        y = pl.pallas_call(_max_kernel, grid=grid, in_specs=[x_spec],
                           out_specs=out_spec, out_shape=out_shape,
                           compiler_params=cparams, cost_estimate=cost)(x)
    elif pool == "avg+max":
        y = pl.pallas_call(_avg_max_kernel, grid=grid, in_specs=[x_spec],
                           out_specs=out_spec, out_shape=out_shape,
                           compiler_params=cparams, cost_estimate=cost)(x)
    elif pool == "gem":
        if gem_p is None:
            gem_p = jnp.full((C,), 3.0, jnp.float32)        # GeM init: p = 3
        p_flat = jnp.asarray(gem_p, jnp.float32).reshape(C)
        p_col = p_flat.reshape(C, 1)                        # broadcast over HW lanes
        inv_p_row = (1.0 / p_flat).reshape(1, C)            # lane-aligned with output
        p_spec = pl.BlockSpec((C, 1), lambda b: (0, 0))     # VMEM-resident
        invp_spec = pl.BlockSpec((1, C), lambda b: (0, 0))  # VMEM-resident
        y = pl.pallas_call(_gem_kernel, grid=grid,
                           in_specs=[p_spec, invp_spec, x_spec],
                           out_specs=out_spec, out_shape=out_shape,
                           compiler_params=cparams, cost_estimate=cost
                           )(p_col, inv_p_row, x)
    else:
        raise ValueError(f"unknown pool mode: {pool}")
    return y


# ------------- pure-JAX reference (correctness check) -------------------------

def _ref_forward(feat, pool, gem_p=None):
    x = feat.astype(jnp.float32)
    B, C, H, W = x.shape
    if pool == "avg":
        return x.mean(axis=(2, 3))
    if pool == "max":
        return x.max(axis=(2, 3))
    if pool == "avg+max":
        return jnp.concatenate([x.mean(axis=(2, 3)), x.max(axis=(2, 3))], axis=1)
    if pool == "gem":
        p = jnp.asarray(gem_p, jnp.float32).reshape(1, C, 1, 1)
        xc = jnp.clip(x, GEM_EPS, None) ** p
        pooled = xc.mean(axis=(2, 3))
        return pooled ** (1.0 / p.reshape(1, C))
    raise ValueError(pool)


if __name__ == "__main__":
    key = jax.random.PRNGKey(0)
    kx, kp, kx2 = jax.random.split(key, 3)

    B, C, H, W = 2, VGG16_FEAT_DIM, 4, 4
    # Backbone (vgg16_bn features) output for this batch, PyTorch NCHW layout.
    feat = jax.random.normal(kx, (B, C, H, W), jnp.float32)
    gem_p = 3.0 + 0.1 * jax.random.normal(kp, (1, C), jnp.float32)

    for mode in ("avg", "max", "avg+max", "gem"):
        y = jax.block_until_ready(
            ft_net_vgg16_forward(feat, pool=mode, gem_p=gem_p))
        ref = _ref_forward(feat, mode, gem_p)
        assert y.shape == ref.shape, (mode, y.shape, ref.shape)
        assert bool(jnp.all(jnp.isfinite(y))), mode
        assert bool(jnp.allclose(y, ref, atol=1e-4, rtol=1e-4)), mode

    # Ragged batch: exercises the un-padded partial last block (grid=2, TB=8).
    B2 = 10
    feat2 = jax.random.normal(kx2, (B2, C, H, W), jnp.float32)
    y2 = jax.block_until_ready(ft_net_vgg16_forward(feat2, pool="avg"))
    ref2 = _ref_forward(feat2, "avg")
    assert y2.shape == ref2.shape, (y2.shape, ref2.shape)
    assert bool(jnp.allclose(y2, ref2, atol=1e-4, rtol=1e-4))

    print("KERNEL_OK")
</pallas_src>

<mosaic_0001>
module attributes {stable_mosaic.version = 11 : i64} {
  func.func @_avg_kernel(%arg0: i32, %arg1: memref<2x512x16xf32, #tpu.memory_space<vmem>>, %arg2: memref<2x512xf32, #tpu.memory_space<vmem>>) attributes {dimension_semantics = [#tpu.dimension_semantics<parallel>], iteration_bounds = array<i64: 1>, scalar_prefetch = 0 : i64, scratch_operands = 0 : i64, tpu.core_type = #tpu.core_type<tc>, window_params = [{transform_indices = @transform_0, window_bounds = array<i64: 2, 512, 16>}, {transform_indices = @transform_1, window_bounds = array<i64: 2, 512>}]} {
    %c0 = arith.constant 0 : index
    %c0_0 = arith.constant 0 : index
    %c0_1 = arith.constant 0 : index
    %0 = vector.load %arg1[%c0, %c0_0, %c0_1] : memref<2x512x16xf32, #tpu.memory_space<vmem>>, vector<2x512x16xf32>
    %cst = arith.constant dense<0.000000e+00> : vector<2x512xf32>
    %1 = vector.multi_reduction <add>, %0, %cst [2] : vector<2x512x16xf32> to vector<2x512xf32>
    %cst_2 = arith.constant 1.600000e+01 : f32
    %2 = vector.broadcast %cst_2 : f32 to vector<2x512xf32>
    %3 = arith.divf %1, %2 : vector<2x512xf32>
    %c0_3 = arith.constant 0 : index
    %c0_4 = arith.constant 0 : index
    %4 = vector.load %arg2[%c0_3, %c0_4] : memref<2x512xf32, #tpu.memory_space<vmem>>, vector<2x512xf32>
    tpu.vector_store %arg2[%c0_3, %c0_4], %3 {strides = array<i32>} : memref<2x512xf32, #tpu.memory_space<vmem>>, vector<2x512xf32>,
    return
  }
  func.func @transform_0(%arg0: i32) -> (i32, i32, i32) {
    %c0_i32 = arith.constant 0 : i32
    %c0_i32_0 = arith.constant 0 : i32
    %c0_i32_1 = arith.constant 0 : i32
    return %arg0, %c0_i32, %c0_i32_0 : i32, i32, i32
  }
  func.func @transform_1(%arg0: i32) -> (i32, i32) {
    %c0_i32 = arith.constant 0 : i32
    %c0_i32_0 = arith.constant 0 : i32
    return %arg0, %c0_i32 : i32, i32
  }
}

</mosaic_0001>

<llo_original>
// kernel: tpu_custom_call.1
$region0: #{tpu_custom_call.1}
  #allocation0 [shape = 'u32[]', space=smem, size = 0x4, offset = 0x4, fixed_abs, tag = 'smem constant byte address 0x4 - core index']
  #allocation1 [shape = 'u32[144,128]{1,0:T(1,128)}', space=vmem, size = 0x12000, scoped, tag = 'internal scratch']
  %s0 = inlined_call_operand.vmem [shape: f32[2,512,16], index: 0, kind: input, shape index: {}]
  %s1 = inlined_call_operand.hbm [shape: f32[2,512], index: 1, kind: output, shape index: {}]
  %s2 = sld [smem:[#allocation0]]
  $region14: #{tpu_custom_call.1} parent=0
    _
  %s4 = ssub.s32 1, %s2
  %s5 = scalar_select 0, %s4, %s2
  $region1: #{tpu_custom_call.1} parent=0
    #allocation2 [shape = 'u8[4096]{0}', space=vmem, size = 0x1000, scoped, tag = 'output window, operand 0, single buffered']
    #allocation3 [shape = 's32[1]{0}', space=sflag, size = 0x4, scoped, tag = 'scoped memory for tpu_custom_call.1']
    %6 = vsyncpa [#allocation3], 0
    // Predicated region
    $region2: #{tpu_custom_call.1} parent=1 // pred_check
      _
    $region3: #{tpu_custom_call.1} parent=1 // pred_check_branch
      %8 = sbr.rel (0) target = $region5
    $region4: #{tpu_custom_call.1} parent=1 // pred_region
      _
    $region5: #{tpu_custom_call.1} parent=1 // pred_fallthru
      _
    %v9 = vld [vmem:[%s0] sm:$0xff]
    %v10 = vld [vmem:[%s0 + $0x8] sm:$0xff]
    %v11 = vld [vmem:[%s0 + $0x10] sm:$0xff]
    %v12 = vld [vmem:[%s0 + $0x18] sm:$0xff]
    %v13 = vld [vmem:[%s0 + $0x20] sm:$0xff]
    %v14 = vld [vmem:[%s0 + $0x28] sm:$0xff]
    %v15 = vld [vmem:[%s0 + $0x30] sm:$0xff]
    %v16 = vld [vmem:[%s0 + $0x38] sm:$0xff]
    %v17 = vld [vmem:[%s0 + $0x40] sm:$0xff]
    %v18 = vld [vmem:[%s0 + $0x48] sm:$0xff]
    %v19 = vld [vmem:[%s0 + $0x50] sm:$0xff]
    %v20 = vld [vmem:[%s0 + $0x58] sm:$0xff]
    %v21 = vld [vmem:[%s0 + $0x60] sm:$0xff]
    %v22 = vld [vmem:[%s0 + $0x68] sm:$0xff]
    %v23 = vld [vmem:[%s0 + $0x70] sm:$0xff]
    %v24 = vld [vmem:[%s0 + $0x78] sm:$0xff]
    %v25 = vld [vmem:[%s0 + $0x80] sm:$0xff]
    %v26 = vld [vmem:[%s0 + $0x88] sm:$0xff]
    %v27 = vld [vmem:[%s0 + $0x90] sm:$0xff]
    %v28 = vld [vmem:[%s0 + $0x98] sm:$0xff]
    %v29 = vld [vmem:[%s0 + $0xa0] sm:$0xff]
    %v30 = vld [vmem:[%s0 + $0xa8] sm:$0xff]
    %v31 = vld [vmem:[%s0 + $0xb0] sm:$0xff]
    %v32 = vld [vmem:[%s0 + $0xb8] sm:$0xff]
    %v33 = vld [vmem:[%s0 + $0xc0] sm:$0xff]
    %v34 = vld [vmem:[%s0 + $0xc8] sm:$0xff]
    %v35 = vld [vmem:[%s0 + $0xd0] sm:$0xff]
    %v36 = vld [vmem:[%s0 + $0xd8] sm:$0xff]
    %v37 = vld [vmem:[%s0 + $0xe0] sm:$0xff]
    %v38 = vld [vmem:[%s0 + $0xe8] sm:$0xff]
    %v39 = vld [vmem:[%s0 + $0xf0] sm:$0xff]
    %v40 = vld [vmem:[%s0 + $0xf8] sm:$0xff]
    %v41 = vld [vmem:[%s0 + $0x100] sm:$0xff]
    %v42 = vld [vmem:[%s0 + $0x108] sm:$0xff]
    %v43 = vld [vmem:[%s0 + $0x110] sm:$0xff]
    %v44 = vld [vmem:[%s0 + $0x118] sm:$0xff]
    %v45 = vld [vmem:[%s0 + $0x120] sm:$0xff]
    %v46 = vld [vmem:[%s0 + $0x128] sm:$0xff]
    %v47 = vld [vmem:[%s0 + $0x130] sm:$0xff]
    %v48 = vld [vmem:[%s0 + $0x138] sm:$0xff]
    %v49 = vld [vmem:[%s0 + $0x140] sm:$0xff]
    %v50 = vld [vmem:[%s0 + $0x148] sm:$0xff]
    %v51 = vld [vmem:[%s0 + $0x150] sm:$0xff]
    %v52 = vld [vmem:[%s0 + $0x158] sm:$0xff]
    %v53 = vld [vmem:[%s0 + $0x160] sm:$0xff]
    %v54 = vld [vmem:[%s0 + $0x168] sm:$0xff]
    %v55 = vld [vmem:[%s0 + $0x170] sm:$0xff]
    %v56 = vld [vmem:[%s0 + $0x178] sm:$0xff]
    %v57 = vld [vmem:[%s0 + $0x180] sm:$0xff]
    %v58 = vld [vmem:[%s0 + $0x188] sm:$0xff]
    %v59 = vld [vmem:[%s0 + $0x190] sm:$0xff]
    %v60 = vld [vmem:[%s0 + $0x198] sm:$0xff]
    %v61 = vld [vmem:[%s0 + $0x1a0] sm:$0xff]
    %v62 = vld [vmem:[%s0 + $0x1a8] sm:$0xff]
    %v63 = vld [vmem:[%s0 + $0x1b0] sm:$0xff]
    %v64 = vld [vmem:[%s0 + $0x1b8] sm:$0xff]
    %v65 = vld [vmem:[%s0 + $0x1c0] sm:$0xff]
    %v66 = vld [vmem:[%s0 + $0x1c8] sm:$0xff]
    %v67 = vld [vmem:[%s0 + $0x1d0] sm:$0xff]
    %v68 = vld [vmem:[%s0 + $0x1d8] sm:$0xff]
    %v69 = vld [vmem:[%s0 + $0x1e0] sm:$0xff]
    %v70 = vld [vmem:[%s0 + $0x1e8] sm:$0xff]
    %v71 = vld [vmem:[%s0 + $0x1f0] sm:$0xff]
    %v72 = vld [vmem:[%s0 + $0x1f8] sm:$0xff]
    %v73 = vld [vmem:[%s0 + $0x200] sm:$0xff]
    %v74 = vld [vmem:[%s0 + $0x208] sm:$0xff]
    %v75 = vld [vmem:[%s0 + $0x210] sm:$0xff]
    %v76 = vld [vmem:[%s0 + $0x218] sm:$0xff]
    %v77 = vld [vmem:[%s0 + $0x220] sm:$0xff]
    %v78 = vld [vmem:[%s0 + $0x228] sm:$0xff]
    %v79 = vld [vmem:[%s0 + $0x230] sm:$0xff]
    %v80 = vld [vmem:[%s0 + $0x238] sm:$0xff]
    %v81 = vld [vmem:[%s0 + $0x240] sm:$0xff]
    %v82 = vld [vmem:[%s0 + $0x248] sm:$0xff]
    %v83 = vld [vmem:[%s0 + $0x250] sm:$0xff]
    %v84 = vld [vmem:[%s0 + $0x258] sm:$0xff]
    %v85 = vld [vmem:[%s0 + $0x260] sm:$0xff]
    %v86 = vld [vmem:[%s0 + $0x268] sm:$0xff]
    %v87 = vld [vmem:[%s0 + $0x270] sm:$0xff]
    %v88 = vld [vmem:[%s0 + $0x278] sm:$0xff]
    %v89 = vld [vmem:[%s0 + $0x280] sm:$0xff]
    %v90 = vld [vmem:[%s0 + $0x288] sm:$0xff]
    %v91 = vld [vmem:[%s0 + $0x290] sm:$0xff]
    %v92 = vld [vmem:[%s0 + $0x298] sm:$0xff]
    %v93 = vld [vmem:[%s0 + $0x2a0] sm:$0xff]
    %v94 = vld [vmem:[%s0 + $0x2a8] sm:$0xff]
    %v95 = vld [vmem:[%s0 + $0x2b0] sm:$0xff]
    %v96 = vld [vmem:[%s0 + $0x2b8] sm:$0xff]
    %v97 = vld [vmem:[%s0 + $0x2c0] sm:$0xff]
    %v98 = vld [vmem:[%s0 + $0x2c8] sm:$0xff]
    %v99 = vld [vmem:[%s0 + $0x2d0] sm:$0xff]
    %v100 = vld [vmem:[%s0 + $0x2d8] sm:$0xff]
    %v101 = vld [vmem:[%s0 + $0x2e0] sm:$0xff]
    %v102 = vld [vmem:[%s0 + $0x2e8] sm:$0xff]
    %v103 = vld [vmem:[%s0 + $0x2f0] sm:$0xff]
    %v104 = vld [vmem:[%s0 + $0x2f8] sm:$0xff]
    %v105 = vld [vmem:[%s0 + $0x300] sm:$0xff]
    %v106 = vld [vmem:[%s0 + $0x308] sm:$0xff]
    %v107 = vld [vmem:[%s0 + $0x310] sm:$0xff]
    %v108 = vld [vmem:[%s0 + $0x318] sm:$0xff]
    %v109 = vld [vmem:[%s0 + $0x320] sm:$0xff]
    %v110 = vld [vmem:[%s0 + $0x328] sm:$0xff]
    %v111 = vld [vmem:[%s0 + $0x330] sm:$0xff]
    %v112 = vld [vmem:[%s0 + $0x338] sm:$0xff]
    %v113 = vld [vmem:[%s0 + $0x340] sm:$0xff]
    %v114 = vld [vmem:[%s0 + $0x348] sm:$0xff]
    %v115 = vld [vmem:[%s0 + $0x350] sm:$0xff]
    %v116 = vld [vmem:[%s0 + $0x358] sm:$0xff]
    %v117 = vld [vmem:[%s0 + $0x360] sm:$0xff]
    %v118 = vld [vmem:[%s0 + $0x368] sm:$0xff]
    %v119 = vld [vmem:[%s0 + $0x370] sm:$0xff]
    %v120 = vld [vmem:[%s0 + $0x378] sm:$0xff]
    %v121 = vld [vmem:[%s0 + $0x380] sm:$0xff]
    %v122 = vld [vmem:[%s0 + $0x388] sm:$0xff]
    %v123 = vld [vmem:[%s0 + $0x390] sm:$0xff]
    %v124 = vld [vmem:[%s0 + $0x398] sm:$0xff]
    %v125 = vld [vmem:[%s0 + $0x3a0] sm:$0xff]
    %v126 = vld [vmem:[%s0 + $0x3a8] sm:$0xff]
    %v127 = vld [vmem:[%s0 + $0x3b0] sm:$0xff]
    %v128 = vld [vmem:[%s0 + $0x3b8] sm:$0xff]
    %v129 = vld [vmem:[%s0 + $0x3c0] sm:$0xff]
    %v130 = vld [vmem:[%s0 + $0x3c8] sm:$0xff]
    %v131 = vld [vmem:[%s0 + $0x3d0] sm:$0xff]
    %v132 = vld [vmem:[%s0 + $0x3d8] sm:$0xff]
    %v133 = vld [vmem:[%s0 + $0x3e0] sm:$0xff]
    %v134 = vld [vmem:[%s0 + $0x3e8] sm:$0xff]
    %v135 = vld [vmem:[%s0 + $0x3f0] sm:$0xff]
    %v136 = vld [vmem:[%s0 + $0x3f8] sm:$0xff]
    %vm137 = vcmask 130048
    %v138 = vsel %vm137, %v9, 0.0
    %139 = vadd.xlane.f32.xlu0 %v138
    %v140 = vpop.xlane.xlu0 %139
    %v141 = vsel %vm137, %v10, 0.0
    %142 = vadd.xlane.f32.xlu0 %v141
    %v143 = vpop.xlane.xlu0 %142
    %v144 = vsel %vm137, %v11, 0.0
    %145 = vadd.xlane.f32.xlu0 %v144
    %v146 = vpop.xlane.xlu0 %145
    %v147 = vsel %vm137, %v12, 0.0
    %148 = vadd.xlane.f32.xlu0 %v147
    %v149 = vpop.xlane.xlu0 %148
    %v150 = vsel %vm137, %v13, 0.0
    %151 = vadd.xlane.f32.xlu0 %v150
    %v152 = vpop.xlane.xlu0 %151
    %v153 = vsel %vm137, %v14, 0.0
    %154 = vadd.xlane.f32.xlu0 %v153
    %v155 = vpop.xlane.xlu0 %154
    %v156 = vsel %vm137, %v15, 0.0
    %157 = vadd.xlane.f32.xlu0 %v156
    %v158 = vpop.xlane.xlu0 %157
    %v159 = vsel %vm137, %v16, 0.0
    %160 = vadd.xlane.f32.xlu0 %v159
    %v161 = vpop.xlane.xlu0 %160
    %v162 = vsel %vm137, %v17, 0.0
    %163 = vadd.xlane.f32.xlu0 %v162
    %v164 = vpop.xlane.xlu0 %163
    %v165 = vsel %vm137, %v18, 0.0
    %166 = vadd.xlane.f32.xlu0 %v165
    %v167 = vpop.xlane.xlu0 %166
    %v168 = vsel %vm137, %v19, 0.0
    %169 = vadd.xlane.f32.xlu0 %v168
    %v170 = vpop.xlane.xlu0 %169
    %v171 = vsel %vm137, %v20, 0.0
    %172 = vadd.xlane.f32.xlu0 %v171
    %v173 = vpop.xlane.xlu0 %172
    %v174 = vsel %vm137, %v21, 0.0
    %175 = vadd.xlane.f32.xlu0 %v174
    %v176 = vpop.xlane.xlu0 %175
    %v177 = vsel %vm137, %v22, 0.0
    %178 = vadd.xlane.f32.xlu0 %v177
    %v179 = vpop.xlane.xlu0 %178
    %v180 = vsel %vm137, %v23, 0.0
    %181 = vadd.xlane.f32.xlu0 %v180
    %v182 = vpop.xlane.xlu0 %181
    %v183 = vsel %vm137, %v24, 0.0
    %184 = vadd.xlane.f32.xlu0 %v183
    %v185 = vpop.xlane.xlu0 %184
    %v186 = vsel %vm137, %v25, 0.0
    %187 = vadd.xlane.f32.xlu0 %v186
    %v188 = vpop.xlane.xlu0 %187
    %v189 = vsel %vm137, %v26, 0.0
    %190 = vadd.xlane.f32.xlu0 %v189
    %v191 = vpop.xlane.xlu0 %190
    %v192 = vsel %vm137, %v27, 0.0
    %193 = vadd.xlane.f32.xlu0 %v192
    %v194 = vpop.xlane.xlu0 %193
    %v195 = vsel %vm137, %v28, 0.0
    %196 = vadd.xlane.f32.xlu0 %v195
    %v197 = vpop.xlane.xlu0 %196
    %v198 = vsel %vm137, %v29, 0.0
    %199 = vadd.xlane.f32.xlu0 %v198
    %v200 = vpop.xlane.xlu0 %199
    %v201 = vsel %vm137, %v30, 0.0
    %202 = vadd.xlane.f32.xlu0 %v201
    %v203 = vpop.xlane.xlu0 %202
    %v204 = vsel %vm137, %v31, 0.0
    %205 = vadd.xlane.f32.xlu0 %v204
    %v206 = vpop.xlane.xlu0 %205
    %v207 = vsel %vm137, %v32, 0.0
    %208 = vadd.xlane.f32.xlu0 %v207
    %v209 = vpop.xlane.xlu0 %208
    %v210 = vsel %vm137, %v33, 0.0
    %211 = vadd.xlane.f32.xlu0 %v210
    %v212 = vpop.xlane.xlu0 %211
    %v213 = vsel %vm137, %v34, 0.0
    %214 = vadd.xlane.f32.xlu0 %v213
    %v215 = vpop.xlane.xlu0 %214
    %v216 = vsel %vm137, %v35, 0.0
    %217 = vadd.xlane.f32.xlu0 %v216
    %v218 = vpop.xlane.xlu0 %217
    %v219 = vsel %vm137, %v36, 0.0
    %220 = vadd.xlane.f32.xlu0 %v219
    %v221 = vpop.xlane.xlu0 %220
    %v222 = vsel %vm137, %v37, 0.0
    %223 = vadd.xlane.f32.xlu0 %v222
    %v224 = vpop.xlane.xlu0 %223
    %v225 = vsel %vm137, %v38, 0.0
    %226 = vadd.xlane.f32.xlu0 %v225
    %v227 = vpop.xlane.xlu0 %226
    %v228 = vsel %vm137, %v39, 0.0
    %229 = vadd.xlane.f32.xlu0 %v228
    %v230 = vpop.xlane.xlu0 %229
    %v231 = vsel %vm137, %v40, 0.0
    %232 = vadd.xlane.f32.xlu0 %v231
    %v233 = vpop.xlane.xlu0 %232
    %v234 = vsel %vm137, %v41, 0.0
    %235 = vadd.xlane.f32.xlu0 %v234
    %v236 = vpop.xlane.xlu0 %235
    %v237 = vsel %vm137, %v42, 0.0
    %238 = vadd.xlane.f32.xlu0 %v237
    %v239 = vpop.xlane.xlu0 %238
    %v240 = vsel %vm137, %v43, 0.0
    %241 = vadd.xlane.f32.xlu0 %v240
    %v242 = vpop.xlane.xlu0 %241
    %v243 = vsel %vm137, %v44, 0.0
    %244 = vadd.xlane.f32.xlu0 %v243
    %v245 = vpop.xlane.xlu0 %244
    %v246 = vsel %vm137, %v45, 0.0
    %247 = vadd.xlane.f32.xlu0 %v246
    %v248 = vpop.xlane.xlu0 %247
    %v249 = vsel %vm137, %v46, 0.0
    %250 = vadd.xlane.f32.xlu0 %v249
    %v251 = vpop.xlane.xlu0 %250
    %v252 = vsel %vm137, %v47, 0.0
    %253 = vadd.xlane.f32.xlu0 %v252
    %v254 = vpop.xlane.xlu0 %253
    %v255 = vsel %vm137, %v48, 0.0
    %256 = vadd.xlane.f32.xlu0 %v255
    %v257 = vpop.xlane.xlu0 %256
    %v258 = vsel %vm137, %v49, 0.0
    %259 = vadd.xlane.f32.xlu0 %v258
    %v260 = vpop.xlane.xlu0 %259
    %v261 = vsel %vm137, %v50, 0.0
    %262 = vadd.xlane.f32.xlu0 %v261
    %v263 = vpop.xlane.xlu0 %262
    %v264 = vsel %vm137, %v51, 0.0
    %265 = vadd.xlane.f32.xlu0 %v264
    %v266 = vpop.xlane.xlu0 %265
    %v267 = vsel %vm137, %v52, 0.0
    %268 = vadd.xlane.f32.xlu0 %v267
    %v269 = vpop.xlane.xlu0 %268
    %v270 = vsel %vm137, %v53, 0.0
    %271 = vadd.xlane.f32.xlu0 %v270
    %v272 = vpop.xlane.xlu0 %271
    %v273 = vsel %vm137, %v54, 0.0
    %274 = vadd.xlane.f32.xlu0 %v273
    %v275 = vpop.xlane.xlu0 %274
    %v276 = vsel %vm137, %v55, 0.0
    %277 = vadd.xlane.f32.xlu0 %v276
    %v278 = vpop.xlane.xlu0 %277
    %v279 = vsel %vm137, %v56, 0.0
    %280 = vadd.xlane.f32.xlu0 %v279
    %v281 = vpop.xlane.xlu0 %280
    %v282 = vsel %vm137, %v57, 0.0
    %283 = vadd.xlane.f32.xlu0 %v282
    %v284 = vpop.xlane.xlu0 %283
    %v285 = vsel %vm137, %v58, 0.0
    %286 = vadd.xlane.f32.xlu0 %v285
    %v287 = vpop.xlane.xlu0 %286
    %v288 = vsel %vm137, %v59, 0.0
    %289 = vadd.xlane.f32.xlu0 %v288
    %v290 = vpop.xlane.xlu0 %289
    %v291 = vsel %vm137, %v60, 0.0
    %292 = vadd.xlane.f32.xlu0 %v291
    %v293 = vpop.xlane.xlu0 %292
    %v294 = vsel %vm137, %v61, 0.0
    %295 = vadd.xlane.f32.xlu0 %v294
    %v296 = vpop.xlane.xlu0 %295
    %v297 = vsel %vm137, %v62, 0.0
    %298 = vadd.xlane.f32.xlu0 %v297
    %v299 = vpop.xlane.xlu0 %298
    %v300 = vsel %vm137, %v63, 0.0
    %301 = vadd.xlane.f32.xlu0 %v300
    %v302 = vpop.xlane.xlu0 %301
    %v303 = vsel %vm137, %v64, 0.0
    %304 = vadd.xlane.f32.xlu0 %v303
    %v305 = vpop.xlane.xlu0 %304
    %v306 = vsel %vm137, %v65, 0.0
    %307 = vadd.xlane.f32.xlu0 %v306
    %v308 = vpop.xlane.xlu0 %307
    %v309 = vsel %vm137, %v66, 0.0
    %310 = vadd.xlane.f32.xlu0 %v309
    %v311 = vpop.xlane.xlu0 %310
    %v312 = vsel %vm137, %v67, 0.0
    %313 = vadd.xlane.f32.xlu0 %v312
    %v314 = vpop.xlane.xlu0 %313
    %v315 = vsel %vm137, %v68, 0.0
    %316 = vadd.xlane.f32.xlu0 %v315
    %v317 = vpop.xlane.xlu0 %316
    %v318 = vsel %vm137, %v69, 0.0
    %319 = vadd.xlane.f32.xlu0 %v318
    %v320 = vpop.xlane.xlu0 %319
    %v321 = vsel %vm137, %v70, 0.0
    %322 = vadd.xlane.f32.xlu0 %v321
    %v323 = vpop.xlane.xlu0 %322
    %v324 = vsel %vm137, %v71, 0.0
    %325 = vadd.xlane.f32.xlu0 %v324
    %v326 = vpop.xlane.xlu0 %325
    %v327 = vsel %vm137, %v72, 0.0
    %328 = vadd.xlane.f32.xlu0 %v327
    %v329 = vpop.xlane.xlu0 %328
    %v330 = vsel %vm137, %v73, 0.0
    %331 = vadd.xlane.f32.xlu0 %v330
    %v332 = vpop.xlane.xlu0 %331
    %v333 = vsel %vm137, %v74, 0.0
    %334 = vadd.xlane.f32.xlu0 %v333
    %v335 = vpop.xlane.xlu0 %334
    %v336 = vsel %vm137, %v75, 0.0
    %337 = vadd.xlane.f32.xlu0 %v336
    %v338 = vpop.xlane.xlu0 %337
    %v339 = vsel %vm137, %v76, 0.0
    %340 = vadd.xlane.f32.xlu0 %v339
    %v341 = vpop.xlane.xlu0 %340
    %v342 = vsel %vm137, %v77, 0.0
    %343 = vadd.xlane.f32.xlu0 %v342
    %v344 = vpop.xlane.xlu0 %343
    %v345 = vsel %vm137, %v78, 0.0
    %346 = vadd.xlane.f32.xlu0 %v345
    %v347 = vpop.xlane.xlu0 %346
    %v348 = vsel %vm137, %v79, 0.0
    %349 = vadd.xlane.f32.xlu0 %v348
    %v350 = vpop.xlane.xlu0 %349
    %v351 = vsel %vm137, %v80, 0.0
    %352 = vadd.xlane.f32.xlu0 %v351
    %v353 = vpop.xlane.xlu0 %352
    %v354 = vsel %vm137, %v81, 0.0
    %355 = vadd.xlane.f32.xlu0 %v354
    %v356 = vpop.xlane.xlu0 %355
    %v357 = vsel %vm137, %v82, 0.0
    %358 = vadd.xlane.f32.xlu0 %v357
    %v359 = vpop.xlane.xlu0 %358
    %v360 = vsel %vm137, %v83, 0.0
    %361 = vadd.xlane.f32.xlu0 %v360
    %v362 = vpop.xlane.xlu0 %361
    %v363 = vsel %vm137, %v84, 0.0
    %364 = vadd.xlane.f32.xlu0 %v363
    %v365 = vpop.xlane.xlu0 %364
    %v366 = vsel %vm137, %v85, 0.0
    %367 = vadd.xlane.f32.xlu0 %v366
    %v368 = vpop.xlane.xlu0 %367
    %v369 = vsel %vm137, %v86, 0.0
    %370 = vadd.xlane.f32.xlu0 %v369
    %v371 = vpop.xlane.xlu0 %370
    %v372 = vsel %vm137, %v87, 0.0
    %373 = vadd.xlane.f32.xlu0 %v372
    %v374 = vpop.xlane.xlu0 %373
    %v375 = vsel %vm137, %v88, 0.0
    %376 = vadd.xlane.f32.xlu0 %v375
    %v377 = vpop.xlane.xlu0 %376
    %v378 = vsel %vm137, %v89, 0.0
    %379 = vadd.xlane.f32.xlu0 %v378
    %v380 = vpop.xlane.xlu0 %379
    %v381 = vsel %vm137, %v90, 0.0
    %382 = vadd.xlane.f32.xlu0 %v381
    %v383 = vpop.xlane.xlu0 %382
    %v384 = vsel %vm137, %v91, 0.0
    %385 = vadd.xlane.f32.xlu0 %v384
    %v386 = vpop.xlane.xlu0 %385
    %v387 = vsel %vm137, %v92, 0.0
    %388 = vadd.xlane.f32.xlu0 %v387
    %v389 = vpop.xlane.xlu0 %388
    %v390 = vsel %vm137, %v93, 0.0
    %391 = vadd.xlane.f32.xlu0 %v390
    %v392 = vpop.xlane.xlu0 %391
    %v393 = vsel %vm137, %v94, 0.0
    %394 = vadd.xlane.f32.xlu0 %v393
    %v395 = vpop.xlane.xlu0 %394
    %v396 = vsel %vm137, %v95, 0.0
    %397 = vadd.xlane.f32.xlu0 %v396
    %v398 = vpop.xlane.xlu0 %397
    %v399 = vsel %vm137, %v96, 0.0
    %400 = vadd.xlane.f32.xlu0 %v399
    %v401 = vpop.xlane.xlu0 %400
    %v402 = vsel %vm137, %v97, 0.0
    %403 = vadd.xlane.f32.xlu0 %v402
    %v404 = vpop.xlane.xlu0 %403
    %v405 = vsel %vm137, %v98, 0.0
    %406 = vadd.xlane.f32.xlu0 %v405
    %v407 = vpop.xlane.xlu0 %406
    %v408 = vsel %vm137, %v99, 0.0
    %409 = vadd.xlane.f32.xlu0 %v408
    %v410 = vpop.xlane.xlu0 %409
    %v411 = vsel %vm137, %v100, 0.0
    %412 = vadd.xlane.f32.xlu0 %v411
    %v413 = vpop.xlane.xlu0 %412
    %v414 = vsel %vm137, %v101, 0.0
    %415 = vadd.xlane.f32.xlu0 %v414
    %v416 = vpop.xlane.xlu0 %415
    %v417 = vsel %vm137, %v102, 0.0
    %418 = vadd.xlane.f32.xlu0 %v417
    %v419 = vpop.xlane.xlu0 %418
    %v420 = vsel %vm137, %v103, 0.0
    %421 = vadd.xlane.f32.xlu0 %v420
    %v422 = vpop.xlane.xlu0 %421
    %v423 = vsel %vm137, %v104, 0.0
    %424 = vadd.xlane.f32.xlu0 %v423
    %v425 = vpop.xlane.xlu0 %424
    %v426 = vsel %vm137, %v105, 0.0
    %427 = vadd.xlane.f32.xlu0 %v426
    %v428 = vpop.xlane.xlu0 %427
    %v429 = vsel %vm137, %v106, 0.0
    %430 = vadd.xlane.f32.xlu0 %v429
    %v431 = vpop.xlane.xlu0 %430
    %v432 = vsel %vm137, %v107, 0.0
    %433 = vadd.xlane.f32.xlu0 %v432
    %v434 = vpop.xlane.xlu0 %433
    %v435 = vsel %vm137, %v108, 0.0
    %436 = vadd.xlane.f32.xlu0 %v435
    %v437 = vpop.xlane.xlu0 %436
    %v438 = vsel %vm137, %v109, 0.0
    %439 = vadd.xlane.f32.xlu0 %v438
    %v440 = vpop.xlane.xlu0 %439
    %v441 = vsel %vm137, %v110, 0.0
    %442 = vadd.xlane.f32.xlu0 %v441
    %v443 = vpop.xlane.xlu0 %442
    %v444 = vsel %vm137, %v111, 0.0
    %445 = vadd.xlane.f32.xlu0 %v444
    %v446 = vpop.xlane.xlu0 %445
    %v447 = vsel %vm137, %v112, 0.0
    %448 = vadd.xlane.f32.xlu0 %v447
    %v449 = vpop.xlane.xlu0 %448
    %v450 = vsel %vm137, %v113, 0.0
    %451 = vadd.xlane.f32.xlu0 %v450
    %v452 = vpop.xlane.xlu0 %451
    %v453 = vsel %vm137, %v114, 0.0
    %454 = vadd.xlane.f32.xlu0 %v453
    %v455 = vpop.xlane.xlu0 %454
    %v456 = vsel %vm137, %v115, 0.0
    %457 = vadd.xlane.f32.xlu0 %v456
    %v458 = vpop.xlane.xlu0 %457
    %v459 = vsel %vm137, %v116, 0.0
    %460 = vadd.xlane.f32.xlu0 %v459
    %v461 = vpop.xlane.xlu0 %460
    %v462 = vsel %vm137, %v117, 0.0
    %463 = vadd.xlane.f32.xlu0 %v462
    %v464 = vpop.xlane.xlu0 %463
    %v465 = vsel %vm137, %v118, 0.0
    %466 = vadd.xlane.f32.xlu0 %v465
    %v467 = vpop.xlane.xlu0 %466
    %v468 = vsel %vm137, %v119, 0.0
    %469 = vadd.xlane.f32.xlu0 %v468
    %v470 = vpop.xlane.xlu0 %469
    %v471 = vsel %vm137, %v120, 0.0
    %472 = vadd.xlane.f32.xlu0 %v471
    %v473 = vpop.xlane.xlu0 %472
    %v474 = vsel %vm137, %v121, 0.0
    %475 = vadd.xlane.f32.xlu0 %v474
    %v476 = vpop.xlane.xlu0 %475
    %v477 = vsel %vm137, %v122, 0.0
    %478 = vadd.xlane.f32.xlu0 %v477
    %v479 = vpop.xlane.xlu0 %478
    %v480 = vsel %vm137, %v123, 0.0
    %481 = vadd.xlane.f32.xlu0 %v480
    %v482 = vpop.xlane.xlu0 %481
    %v483 = vsel %vm137, %v124, 0.0
    %484 = vadd.xlane.f32.xlu0 %v483
    %v485 = vpop.xlane.xlu0 %484
    %v486 = vsel %vm137, %v125, 0.0
    %487 = vadd.xlane.f32.xlu0 %v486
    %v488 = vpop.xlane.xlu0 %487
    %v489 = vsel %vm137, %v126, 0.0
    %490 = vadd.xlane.f32.xlu0 %v489
    %v491 = vpop.xlane.xlu0 %490
    %v492 = vsel %vm137, %v127, 0.0
    %493 = vadd.xlane.f32.xlu0 %v492
    %v494 = vpop.xlane.xlu0 %493
    %v495 = vsel %vm137, %v128, 0.0
    %496 = vadd.xlane.f32.xlu0 %v495
    %v497 = vpop.xlane.xlu0 %496
    %v498 = vsel %vm137, %v129, 0.0
    %499 = vadd.xlane.f32.xlu0 %v498
    %v500 = vpop.xlane.xlu0 %499
    %v501 = vsel %vm137, %v130, 0.0
    %502 = vadd.xlane.f32.xlu0 %v501
    %v503 = vpop.xlane.xlu0 %502
    %v504 = vsel %vm137, %v131, 0.0
    %505 = vadd.xlane.f32.xlu0 %v504
    %v506 = vpop.xlane.xlu0 %505
    %v507 = vsel %vm137, %v132, 0.0
    %508 = vadd.xlane.f32.xlu0 %v507
    %v509 = vpop.xlane.xlu0 %508
    %v510 = vsel %vm137, %v133, 0.0
    %511 = vadd.xlane.f32.xlu0 %v510
    %v512 = vpop.xlane.xlu0 %511
    %v513 = vsel %vm137, %v134, 0.0
    %514 = vadd.xlane.f32.xlu0 %v513
    %v515 = vpop.xlane.xlu0 %514
    %v516 = vsel %vm137, %v135, 0.0
    %517 = vadd.xlane.f32.xlu0 %v516
    %v518 = vpop.xlane.xlu0 %517
    %v519 = vsel %vm137, %v136, 0.0
    %520 = vadd.xlane.f32.xlu0 %v519
    %v521 = vpop.xlane.xlu0 %520
    %v522 = vrcp.pop 16.0
    %v523 = vmul.f32 %v140, %v522
    %v524 = vmul.f32 %v143, %v522
    %v525 = vmul.f32 %v146, %v522
    %v526 = vmul.f32 %v149, %v522
    %v527 = vmul.f32 %v152, %v522
    %v528 = vmul.f32 %v155, %v522
    %v529 = vmul.f32 %v158, %v522
    %v530 = vmul.f32 %v161, %v522
    %v531 = vmul.f32 %v164, %v522
    %v532 = vmul.f32 %v167, %v522
    %v533 = vmul.f32 %v170, %v522
    %v534 = vmul.f32 %v173, %v522
    %v535 = vmul.f32 %v176, %v522
    %v536 = vmul.f32 %v179, %v522
    %v537 = vmul.f32 %v182, %v522
    %v538 = vmul.f32 %v185, %v522
    %v539 = vmul.f32 %v188, %v522
    %v540 = vmul.f32 %v191, %v522
    %v541 = vmul.f32 %v194, %v522
    %v542 = vmul.f32 %v197, %v522
    %v543 = vmul.f32 %v200, %v522
    %v544 = vmul.f32 %v203, %v522
    %v545 = vmul.f32 %v206, %v522
    %v546 = vmul.f32 %v209, %v522
    %v547 = vmul.f32 %v212, %v522
    %v548 = vmul.f32 %v215, %v522
    %v549 = vmul.f32 %v218, %v522
    %v550 = vmul.f32 %v221, %v522
    %v551 = vmul.f32 %v224, %v522
    %v552 = vmul.f32 %v227, %v522
    %v553 = vmul.f32 %v230, %v522
    %v554 = vmul.f32 %v233, %v522
    %v555 = vmul.f32 %v236, %v522
    %v556 = vmul.f32 %v239, %v522
    %v557 = vmul.f32 %v242, %v522
    %v558 = vmul.f32 %v245, %v522
    %v559 = vmul.f32 %v248, %v522
    %v560 = vmul.f32 %v251, %v522
    %v561 = vmul.f32 %v254, %v522
    %v562 = vmul.f32 %v257, %v522
    %v563 = vmul.f32 %v260, %v522
    %v564 = vmul.f32 %v263, %v522
    %v565 = vmul.f32 %v266, %v522
    %v566 = vmul.f32 %v269, %v522
    %v567 = vmul.f32 %v272, %v522
    %v568 = vmul.f32 %v275, %v522
    %v569 = vmul.f32 %v278, %v522
    %v570 = vmul.f32 %v281, %v522
    %v571 = vmul.f32 %v284, %v522
    %v572 = vmul.f32 %v287, %v522
    %v573 = vmul.f32 %v290, %v522
    %v574 = vmul.f32 %v293, %v522
    %v575 = vmul.f32 %v296, %v522
    %v576 = vmul.f32 %v299, %v522
    %v577 = vmul.f32 %v302, %v522
    %v578 = vmul.f32 %v305, %v522
    %v579 = vmul.f32 %v308, %v522
    %v580 = vmul.f32 %v311, %v522
    %v581 = vmul.f32 %v314, %v522
    %v582 = vmul.f32 %v317, %v522
    %v583 = vmul.f32 %v320, %v522
    %v584 = vmul.f32 %v323, %v522
    %v585 = vmul.f32 %v326, %v522
    %v586 = vmul.f32 %v329, %v522
    %v587 = vmul.f32 %v332, %v522
    %v588 = vmul.f32 %v335, %v522
    %v589 = vmul.f32 %v338, %v522
    %v590 = vmul.f32 %v341, %v522
    %v591 = vmul.f32 %v344, %v522
    %v592 = vmul.f32 %v347, %v522
    %v593 = vmul.f32 %v350, %v522
    %v594 = vmul.f32 %v353, %v522
    %v595 = vmul.f32 %v356, %v522
    %v596 = vmul.f32 %v359, %v522
    %v597 = vmul.f32 %v362, %v522
    %v598 = vmul.f32 %v365, %v522
    %v599 = vmul.f32 %v368, %v522
    %v600 = vmul.f32 %v371, %v522
    %v601 = vmul.f32 %v374, %v522
    %v602 = vmul.f32 %v377, %v522
    %v603 = vmul.f32 %v380, %v522
    %v604 = vmul.f32 %v383, %v522
    %v605 = vmul.f32 %v386, %v522
    %v606 = vmul.f32 %v389, %v522
    %v607 = vmul.f32 %v392, %v522
    %v608 = vmul.f32 %v395, %v522
    %v609 = vmul.f32 %v398, %v522
    %v610 = vmul.f32 %v401, %v522
    %v611 = vmul.f32 %v404, %v522
    %v612 = vmul.f32 %v407, %v522
    %v613 = vmul.f32 %v410, %v522
    %v614 = vmul.f32 %v413, %v522
    %v615 = vmul.f32 %v416, %v522
    %v616 = vmul.f32 %v419, %v522
    %v617 = vmul.f32 %v422, %v522
    %v618 = vmul.f32 %v425, %v522
    %v619 = vmul.f32 %v428, %v522
    %v620 = vmul.f32 %v431, %v522
    %v621 = vmul.f32 %v434, %v522
    %v622 = vmul.f32 %v437, %v522
    %v623 = vmul.f32 %v440, %v522
    %v624 = vmul.f32 %v443, %v522
    %v625 = vmul.f32 %v446, %v522
    %v626 = vmul.f32 %v449, %v522
    %v627 = vmul.f32 %v452, %v522
    %v628 = vmul.f32 %v455, %v522
    %v629 = vmul.f32 %v458, %v522
    %v630 = vmul.f32 %v461, %v522
    %v631 = vmul.f32 %v464, %v522
    %v632 = vmul.f32 %v467, %v522
    %v633 = vmul.f32 %v470, %v522
    %v634 = vmul.f32 %v473, %v522
    %v635 = vmul.f32 %v476, %v522
    %v636 = vmul.f32 %v479, %v522
    %v637 = vmul.f32 %v482, %v522
    %v638 = vmul.f32 %v485, %v522
    %v639 = vmul.f32 %v488, %v522
    %v640 = vmul.f32 %v491, %v522
    %v641 = vmul.f32 %v494, %v522
    %v642 = vmul.f32 %v497, %v522
    %v643 = vmul.f32 %v500, %v522
    %v644 = vmul.f32 %v503, %v522
    %v645 = vmul.f32 %v506, %v522
    %v646 = vmul.f32 %v509, %v522
    %v647 = vmul.f32 %v512, %v522
    %v648 = vmul.f32 %v515, %v522
    %v649 = vmul.f32 %v518, %v522
    %v650 = vmul.f32 %v521, %v522
    %v780 = vunpack.c.l.s4 269488144
    %v781 = vunpack.c.0.s8 %v780
    %v782 = vlaneseq
    %v783 = vshrl.u32 %v782, 7
    %v784 = vsub.s32 %v781, %v783
    %v785 = vrot.slane %v523, %v784
    %v787 = vunpack.c.l.s4 842150450
    %v788 = vunpack.c.0.s8 %v787
    %v789 = vlaneseq
    %v790 = vshrl.u32 %v789, 7
    %v791 = vsub.s32 %v788, %v790
    %v792 = vrot.slane %v523, %v791
    %v794 = vunpack.c.l.s4 1414812756
    %v795 = vunpack.c.0.s8 %v794
    %v796 = vlaneseq
    %v797 = vshrl.u32 %v796, 7
    %v798 = vsub.s32 %v795, %v797
    %v799 = vrot.slane %v523, %v798
    %v801 = vunpack.c.l.s4 1987475062
    %v802 = vunpack.c.0.s8 %v801
    %v803 = vlaneseq
    %v804 = vshrl.u32 %v803, 7
    %v805 = vsub.s32 %v802, %v804
    %v806 = vrot.slane %v523, %v805
    %v808 = vunpack.c.l.s4 269488144
    %v809 = vunpack.c.0.s8 %v808
    %v810 = vlaneseq
    %v811 = vshrl.u32 %v810, 7
    %v812 = vsub.s32 %v809, %v811
    %v813 = vrot.slane %v524, %v812
    %v815 = vunpack.c.l.s4 842150450
    %v816 = vunpack.c.0.s8 %v815
    %v817 = vlaneseq
    %v818 = vshrl.u32 %v817, 7
    %v819 = vsub.s32 %v816, %v818
    %v820 = vrot.slane %v524, %v819
    %v822 = vunpack.c.l.s4 1414812756
    %v823 = vunpack.c.0.s8 %v822
    %v824 = vlaneseq
    %v825 = vshrl.u32 %v824, 7
    %v826 = vsub.s32 %v823, %v825
    %v827 = vrot.slane %v524, %v826
    %v829 = vunpack.c.l.s4 1987475062
    %v830 = vunpack.c.0.s8 %v829
    %v831 = vlaneseq
    %v832 = vshrl.u32 %v831, 7
    %v833 = vsub.s32 %v830, %v832
    %v834 = vrot.slane %v524, %v833
    %v836 = vunpack.c.l.s4 269488144
    %v837 = vunpack.c.0.s8 %v836
    %v838 = vlaneseq
    %v839 = vshrl.u32 %v838, 7
    %v840 = vsub.s32 %v837, %v839
    %v841 = vrot.slane %v525, %v840
    %v843 = vunpack.c.l.s4 842150450
    %v844 = vunpack.c.0.s8 %v843
    %v845 = vlaneseq
    %v846 = vshrl.u32 %v845, 7
    %v847 = vsub.s32 %v844, %v846
    %v848 = vrot.slane %v525, %v847
    %v850 = vunpack.c.l.s4 1414812756
    %v851 = vunpack.c.0.s8 %v850
    %v852 = vlaneseq
    %v853 = vshrl.u32 %v852, 7
    %v854 = vsub.s32 %v851, %v853
    %v855 = vrot.slane %v525, %v854
    %v857 = vunpack.c.l.s4 1987475062
    %v858 = vunpack.c.0.s8 %v857
    %v859 = vlaneseq
    %v860 = vshrl.u32 %v859, 7
    %v861 = vsub.s32 %v858, %v860
    %v862 = vrot.slane %v525, %v861
    %v864 = vunpack.c.l.s4 269488144
    %v865 = vunpack.c.0.s8 %v864
    %v866 = vlaneseq
    %v867 = vshrl.u32 %v866, 7
    %v868 = vsub.s32 %v865, %v867
    %v869 = vrot.slane %v526, %v868
    %v871 = vunpack.c.l.s4 842150450
    %v872 = vunpack.c.0.s8 %v871
    %v873 = vlaneseq
    %v874 = vshrl.u32 %v873, 7
    %v875 = vsub.s32 %v872, %v874
    %v876 = vrot.slane %v526, %v875
    %v878 = vunpack.c.l.s4 1414812756
    %v879 = vunpack.c.0.s8 %v878
    %v880 = vlaneseq
    %v881 = vshrl.u32 %v880, 7
    %v882 = vsub.s32 %v879, %v881
    %v883 = vrot.slane %v526, %v882
    %v885 = vunpack.c.l.s4 1987475062
    %v886 = vunpack.c.0.s8 %v885
    %v887 = vlaneseq
    %v888 = vshrl.u32 %v887, 7
    %v889 = vsub.s32 %v886, %v888
    %v890 = vrot.slane %v526, %v889
    %v892 = vunpack.c.l.s4 269488144
    %v893 = vunpack.c.0.s8 %v892
    %v894 = vlaneseq
    %v895 = vshrl.u32 %v894, 7
    %v896 = vsub.s32 %v893, %v895
    %v897 = vrot.slane %v527, %v896
    %v899 = vunpack.c.l.s4 842150450
    %v900 = vunpack.c.0.s8 %v899
    %v901 = vlaneseq
    %v902 = vshrl.u32 %v901, 7
    %v903 = vsub.s32 %v900, %v902
    %v904 = vrot.slane %v527, %v903
    %v906 = vunpack.c.l.s4 1414812756
    %v907 = vunpack.c.0.s8 %v906
    %v908 = vlaneseq
    %v909 = vshrl.u32 %v908, 7
    %v910 = vsub.s32 %v907, %v909
    %v911 = vrot.slane %v527, %v910
    %v913 = vunpack.c.l.s4 1987475062
    %v914 = vunpack.c.0.s8 %v913
    %v915 = vlaneseq
    %v916 = vshrl.u32 %v915, 7
    %v917 = vsub.s32 %v914, %v916
    %v918 = vrot.slane %v527, %v917
    %v920 = vunpack.c.l.s4 269488144
    %v921 = vunpack.c.0.s8 %v920
    %v922 = vlaneseq
    %v923 = vshrl.u32 %v922, 7
    %v924 = vsub.s32 %v921, %v923
    %v925 = vrot.slane %v528, %v924
    %v927 = vunpack.c.l.s4 842150450
    %v928 = vunpack.c.0.s8 %v927
    %v929 = vlaneseq
    %v930 = vshrl.u32 %v929, 7
    %v931 = vsub.s32 %v928, %v930
    %v932 = vrot.slane %v528, %v931
    %v934 = vunpack.c.l.s4 1414812756
    %v935 = vunpack.c.0.s8 %v934
    %v936 = vlaneseq
    %v937 = vshrl.u32 %v936, 7
    %v938 = vsub.s32 %v935, %v937
    %v939 = vrot.slane %v528, %v938
    %v941 = vunpack.c.l.s4 1987475062
    %v942 = vunpack.c.0.s8 %v941
    %v943 = vlaneseq
    %v944 = vshrl.u32 %v943, 7
    %v945 = vsub.s32 %v942, %v944
    %v946 = vrot.slane %v528, %v945
    %v948 = vunpack.c.l.s4 269488144
    %v949 = vunpack.c.0.s8 %v948
    %v950 = vlaneseq
    %v951 = vshrl.u32 %v950, 7
    %v952 = vsub.s32 %v949, %v951
    %v953 = vrot.slane %v529, %v952
    %v955 = vunpack.c.l.s4 842150450
    %v956 = vunpack.c.0.s8 %v955
    %v957 = vlaneseq
    %v958 = vshrl.u32 %v957, 7
    %v959 = vsub.s32 %v956, %v958
    %v960 = vrot.slane %v529, %v959
    %v962 = vunpack.c.l.s4 1414812756
    %v963 = vunpack.c.0.s8 %v962
    %v964 = vlaneseq
    %v965 = vshrl.u32 %v964, 7
    %v966 = vsub.s32 %v963, %v965
    %v967 = vrot.slane %v529, %v966
    %v969 = vunpack.c.l.s4 1987475062
    %v970 = vunpack.c.0.s8 %v969
    %v971 = vlaneseq
    %v972 = vshrl.u32 %v971, 7
    %v973 = vsub.s32 %v970, %v972
    %v974 = vrot.slane %v529, %v973
    %v976 = vunpack.c.l.s4 269488144
    %v977 = vunpack.c.0.s8 %v976
    %v978 = vlaneseq
    %v979 = vshrl.u32 %v978, 7
    %v980 = vsub.s32 %v977, %v979
    %v981 = vrot.slane %v530, %v980
    %v983 = vunpack.c.l.s4 842150450
    %v984 = vunpack.c.0.s8 %v983
    %v985 = vlaneseq
    %v986 = vshrl.u32 %v985, 7
    %v987 = vsub.s32 %v984, %v986
    %v988 = vrot.slane %v530, %v987
    %v990 = vunpack.c.l.s4 1414812756
    %v991 = vunpack.c.0.s8 %v990
    %v992 = vlaneseq
    %v993 = vshrl.u32 %v992, 7
    %v994 = vsub.s32 %v991, %v993
    %v995 = vrot.slane %v530, %v994
    %v997 = vunpack.c.l.s4 1987475062
    %v998 = vunpack.c.0.s8 %v997
    %v999 = vlaneseq
    %v1000 = vshrl.u32 %v999, 7
    %v1001 = vsub.s32 %v998, %v1000
    %v1002 = vrot.slane %v530, %v1001
    %v1004 = vunpack.c.l.s4 269488144
    %v1005 = vunpack.c.0.s8 %v1004
    %v1006 = vlaneseq
    %v1007 = vshrl.u32 %v1006, 7
    %v1008 = vsub.s32 %v1005, %v1007
    %v1009 = vrot.slane %v531, %v1008
    %v1011 = vunpack.c.l.s4 842150450
    %v1012 = vunpack.c.0.s8 %v1011
    %v1013 = vlaneseq
    %v1014 = vshrl.u32 %v1013, 7
    %v1015 = vsub.s32 %v1012, %v1014
    %v1016 = vrot.slane %v531, %v1015
    %v1018 = vunpack.c.l.s4 1414812756
    %v1019 = vunpack.c.0.s8 %v1018
    %v1020 = vlaneseq
    %v1021 = vshrl.u32 %v1020, 7
    %v1022 = vsub.s32 %v1019, %v1021
    %v1023 = vrot.slane %v531, %v1022
    %v1025 = vunpack.c.l.s4 1987475062
    %v1026 = vunpack.c.0.s8 %v1025
    %v1027 = vlaneseq
    %v1028 = vshrl.u32 %v1027, 7
    %v1029 = vsub.s32 %v1026, %v1028
    %v1030 = vrot.slane %v531, %v1029
    %v1032 = vunpack.c.l.s4 269488144
    %v1033 = vunpack.c.0.s8 %v1032
    %v1034 = vlaneseq
    %v1035 = vshrl.u32 %v1034, 7
    %v1036 = vsub.s32 %v1033, %v1035
    %v1037 = vrot.slane %v532, %v1036
    %v1039 = vunpack.c.l.s4 842150450
    %v1040 = vunpack.c.0.s8 %v1039
    %v1041 = vlaneseq
    %v1042 = vshrl.u32 %v1041, 7
    %v1043 = vsub.s32 %v1040, %v1042
    %v1044 = vrot.slane %v532, %v1043
    %v1046 = vunpack.c.l.s4 1414812756
    %v1047 = vunpack.c.0.s8 %v1046
    %v1048 = vlaneseq
    %v1049 = vshrl.u32 %v1048, 7
    %v1050 = vsub.s32 %v1047, %v1049
    %v1051 = vrot.slane %v532, %v1050
    %v1053 = vunpack.c.l.s4 1987475062
    %v1054 = vunpack.c.0.s8 %v1053
    %v1055 = vlaneseq
    %v1056 = vshrl.u32 %v1055, 7
    %v1057 = vsub.s32 %v1054, %v1056
    %v1058 = vrot.slane %v532, %v1057
    %v1060 = vunpack.c.l.s4 269488144
    %v1061 = vunpack.c.0.s8 %v1060
    %v1062 = vlaneseq
    %v1063 = vshrl.u32 %v1062, 7
    %v1064 = vsub.s32 %v1061, %v1063
    %v1065 = vrot.slane %v533, %v1064
    %v1067 = vunpack.c.l.s4 842150450
    %v1068 = vunpack.c.0.s8 %v1067
    %v1069 = vlaneseq
    %v1070 = vshrl.u32 %v1069, 7
    %v1071 = vsub.s32 %v1068, %v1070
    %v1072 = vrot.slane %v533, %v1071
    %v1074 = vunpack.c.l.s4 1414812756
    %v1075 = vunpack.c.0.s8 %v1074
    %v1076 = vlaneseq
    %v1077 = vshrl.u32 %v1076, 7
    %v1078 = vsub.s32 %v1075, %v1077
    %v1079 = vrot.slane %v533, %v1078
    %v1081 = vunpack.c.l.s4 1987475062
    %v1082 = vunpack.c.0.s8 %v1081
    %v1083 = vlaneseq
    %v1084 = vshrl.u32 %v1083, 7
    %v1085 = vsub.s32 %v1082, %v1084
    %v1086 = vrot.slane %v533, %v1085
    %v1088 = vunpack.c.l.s4 269488144
    %v1089 = vunpack.c.0.s8 %v1088
    %v1090 = vlaneseq
    %v1091 = vshrl.u32 %v1090, 7
    %v1092 = vsub.s32 %v1089, %v1091
    %v1093 = vrot.slane %v534, %v1092
    %v1095 = vunpack.c.l.s4 842150450
    %v1096 = vunpack.c.0.s8 %v1095
    %v1097 = vlaneseq
    %v1098 = vshrl.u32 %v1097, 7
    %v1099 = vsub.s32 %v1096, %v1098
    %v1100 = vrot.slane %v534, %v1099
    %v1102 = vunpack.c.l.s4 1414812756
    %v1103 = vunpack.c.0.s8 %v1102
    %v1104 = vlaneseq
    %v1105 = vshrl.u32 %v1104, 7
    %v1106 = vsub.s32 %v1103, %v1105
    %v1107 = vrot.slane %v534, %v1106
    %v1109 = vunpack.c.l.s4 1987475062
    %v1110 = vunpack.c.0.s8 %v1109
    %v1111 = vlaneseq
    %v1112 = vshrl.u32 %v1111, 7
    %v1113 = vsub.s32 %v1110, %v1112
    %v1114 = vrot.slane %v534, %v1113
    %v1116 = vunpack.c.l.s4 269488144
    %v1117 = vunpack.c.0.s8 %v1116
    %v1118 = vlaneseq
    %v1119 = vshrl.u32 %v1118, 7
    %v1120 = vsub.s32 %v1117, %v1119
    %v1121 = vrot.slane %v535, %v1120
    %v1123 = vunpack.c.l.s4 842150450
    %v1124 = vunpack.c.0.s8 %v1123
    %v1125 = vlaneseq
    %v1126 = vshrl.u32 %v1125, 7
    %v1127 = vsub.s32 %v1124, %v1126
    %v1128 = vrot.slane %v535, %v1127
    %v1130 = vunpack.c.l.s4 1414812756
    %v1131 = vunpack.c.0.s8 %v1130
    %v1132 = vlaneseq
    %v1133 = vshrl.u32 %v1132, 7
    %v1134 = vsub.s32 %v1131, %v1133
    %v1135 = vrot.slane %v535, %v1134
    %v1137 = vunpack.c.l.s4 1987475062
    %v1138 = vunpack.c.0.s8 %v1137
    %v1139 = vlaneseq
    %v1140 = vshrl.u32 %v1139, 7
    %v1141 = vsub.s32 %v1138, %v1140
    %v1142 = vrot.slane %v535, %v1141
    %v1144 = vunpack.c.l.s4 269488144
    %v1145 = vunpack.c.0.s8 %v1144
    %v1146 = vlaneseq
    %v1147 = vshrl.u32 %v1146, 7
    %v1148 = vsub.s32 %v1145, %v1147
    %v1149 = vrot.slane %v536, %v1148
    %v1151 = vunpack.c.l.s4 842150450
    %v1152 = vunpack.c.0.s8 %v1151
    %v1153 = vlaneseq
    %v1154 = vshrl.u32 %v1153, 7
    %v1155 = vsub.s32 %v1152, %v1154
    %v1156 = vrot.slane %v536, %v1155
    %v1158 = vunpack.c.l.s4 1414812756
    %v1159 = vunpack.c.0.s8 %v1158
    %v1160 = vlaneseq
    %v1161 = vshrl.u32 %v1160, 7
    %v1162 = vsub.s32 %v1159, %v1161
    %v1163 = vrot.slane %v536, %v1162
    %v1165 = vunpack.c.l.s4 1987475062
    %v1166 = vunpack.c.0.s8 %v1165
    %v1167 = vlaneseq
    %v1168 = vshrl.u32 %v1167, 7
    %v1169 = vsub.s32 %v1166, %v1168
    %v1170 = vrot.slane %v536, %v1169
    %v1172 = vunpack.c.l.s4 269488144
    %v1173 = vunpack.c.0.s8 %v1172
    %v1174 = vlaneseq
    %v1175 = vshrl.u32 %v1174, 7
    %v1176 = vsub.s32 %v1173, %v1175
    %v1177 = vrot.slane %v537, %v1176
    %v1179 = vunpack.c.l.s4 842150450
    %v1180 = vunpack.c.0.s8 %v1179
    %v1181 = vlaneseq
    %v1182 = vshrl.u32 %v1181, 7
    %v1183 = vsub.s32 %v1180, %v1182
    %v1184 = vrot.slane %v537, %v1183
    %v1186 = vunpack.c.l.s4 1414812756
    %v1187 = vunpack.c.0.s8 %v1186
    %v1188 = vlaneseq
    %v1189 = vshrl.u32 %v1188, 7
    %v1190 = vsub.s32 %v1187, %v1189
    %v1191 = vrot.slane %v537, %v1190
    %v1193 = vunpack.c.l.s4 1987475062
    %v1194 = vunpack.c.0.s8 %v1193
    %v1195 = vlaneseq
    %v1196 = vshrl.u32 %v1195, 7
    %v1197 = vsub.s32 %v1194, %v1196
    %v1198 = vrot.slane %v537, %v1197
    %v1200 = vunpack.c.l.s4 269488144
    %v1201 = vunpack.c.0.s8 %v1200
    %v1202 = vlaneseq
    %v1203 = vshrl.u32 %v1202, 7
    %v1204 = vsub.s32 %v1201, %v1203
    %v1205 = vrot.slane %v538, %v1204
    %v1207 = vunpack.c.l.s4 842150450
    %v1208 = vunpack.c.0.s8 %v1207
    %v1209 = vlaneseq
    %v1210 = vshrl.u32 %v1209, 7
    %v1211 = vsub.s32 %v1208, %v1210
    %v1212 = vrot.slane %v538, %v1211
    %v1214 = vunpack.c.l.s4 1414812756
    %v1215 = vunpack.c.0.s8 %v1214
    %v1216 = vlaneseq
    %v1217 = vshrl.u32 %v1216, 7
    %v1218 = vsub.s32 %v1215, %v1217
    %v1219 = vrot.slane %v538, %v1218
    %v1221 = vunpack.c.l.s4 1987475062
    %v1222 = vunpack.c.0.s8 %v1221
    %v1223 = vlaneseq
    %v1224 = vshrl.u32 %v1223, 7
    %v1225 = vsub.s32 %v1222, %v1224
    %v1226 = vrot.slane %v538, %v1225
    %v1228 = vunpack.c.l.s4 269488144
    %v1229 = vunpack.c.0.s8 %v1228
    %v1230 = vlaneseq
    %v1231 = vshrl.u32 %v1230, 7
    %v1232 = vsub.s32 %v1229, %v1231
    %v1233 = vrot.slane %v539, %v1232
    %v1235 = vunpack.c.l.s4 842150450
    %v1236 = vunpack.c.0.s8 %v1235
    %v1237 = vlaneseq
    %v1238 = vshrl.u32 %v1237, 7
    %v1239 = vsub.s32 %v1236, %v1238
    %v1240 = vrot.slane %v539, %v1239
    %v1242 = vunpack.c.l.s4 1414812756
    %v1243 = vunpack.c.0.s8 %v1242
    %v1244 = vlaneseq
    %v1245 = vshrl.u32 %v1244, 7
    %v1246 = vsub.s32 %v1243, %v1245
    %v1247 = vrot.slane %v539, %v1246
    %v1249 = vunpack.c.l.s4 1987475062
    %v1250 = vunpack.c.0.s8 %v1249
    %v1251 = vlaneseq
    %v1252 = vshrl.u32 %v1251, 7
    %v1253 = vsub.s32 %v1250, %v1252
    %v1254 = vrot.slane %v539, %v1253
    %v1256 = vunpack.c.l.s4 269488144
    %v1257 = vunpack.c.0.s8 %v1256
    %v1258 = vlaneseq
    %v1259 = vshrl.u32 %v1258, 7
    %v1260 = vsub.s32 %v1257, %v1259
    %v1261 = vrot.slane %v540, %v1260
    %v1263 = vunpack.c.l.s4 842150450
    %v1264 = vunpack.c.0.s8 %v1263
    %v1265 = vlaneseq
    %v1266 = vshrl.u32 %v1265, 7
    %v1267 = vsub.s32 %v1264, %v1266
    %v1268 = vrot.slane %v540, %v1267
    %v1270 = vunpack.c.l.s4 1414812756
    %v1271 = vunpack.c.0.s8 %v1270
    %v1272 = vlaneseq
    %v1273 = vshrl.u32 %v1272, 7
    %v1274 = vsub.s32 %v1271, %v1273
    %v1275 = vrot.slane %v540, %v1274
    %v1277 = vunpack.c.l.s4 1987475062
    %v1278 = vunpack.c.0.s8 %v1277
    %v1279 = vlaneseq
    %v1280 = vshrl.u32 %v1279, 7
    %v1281 = vsub.s32 %v1278, %v1280
    %v1282 = vrot.slane %v540, %v1281
    %v1284 = vunpack.c.l.s4 269488144
    %v1285 = vunpack.c.0.s8 %v1284
    %v1286 = vlaneseq
    %v1287 = vshrl.u32 %v1286, 7
    %v1288 = vsub.s32 %v1285, %v1287
    %v1289 = vrot.slane %v541, %v1288
    %v1291 = vunpack.c.l.s4 842150450
    %v1292 = vunpack.c.0.s8 %v1291
    %v1293 = vlaneseq
    %v1294 = vshrl.u32 %v1293, 7
    %v1295 = vsub.s32 %v1292, %v1294
    %v1296 = vrot.slane %v541, %v1295
    %v1298 = vunpack.c.l.s4 1414812756
    %v1299 = vunpack.c.0.s8 %v1298
    %v1300 = vlaneseq
    %v1301 = vshrl.u32 %v1300, 7
    %v1302 = vsub.s32 %v1299, %v1301
    %v1303 = vrot.slane %v541, %v1302
    %v1305 = vunpack.c.l.s4 1987475062
    %v1306 = vunpack.c.0.s8 %v1305
    %v1307 = vlaneseq
    %v1308 = vshrl.u32 %v1307, 7
    %v1309 = vsub.s32 %v1306, %v1308
    %v1310 = vrot.slane %v541, %v1309
    %v1312 = vunpack.c.l.s4 269488144
    %v1313 = vunpack.c.0.s8 %v1312
    %v1314 = vlaneseq
    %v1315 = vshrl.u32 %v1314, 7
    %v1316 = vsub.s32 %v1313, %v1315
    %v1317 = vrot.slane %v542, %v1316
    %v1319 = vunpack.c.l.s4 842150450
    %v1320 = vunpack.c.0.s8 %v1319
    %v1321 = vlaneseq
    %v1322 = vshrl.u32 %v1321, 7
    %v1323 = vsub.s32 %v1320, %v1322
    %v1324 = vrot.slane %v542, %v1323
    %v1326 = vunpack.c.l.s4 1414812756
    %v1327 = vunpack.c.0.s8 %v1326
    %v1328 = vlaneseq
    %v1329 = vshrl.u32 %v1328, 7
    %v1330 = vsub.s32 %v1327, %v1329
    %v1331 = vrot.slane %v542, %v1330
    %v1333 = vunpack.c.l.s4 1987475062
    %v1334 = vunpack.c.0.s8 %v1333
    %v1335 = vlaneseq
    %v1336 = vshrl.u32 %v1335, 7
    %v1337 = vsub.s32 %v1334, %v1336
    %v1338 = vrot.slane %v542, %v1337
    %v1340 = vunpack.c.l.s4 269488144
    %v1341 = vunpack.c.0.s8 %v1340
    %v1342 = vlaneseq
    %v1343 = vshrl.u32 %v1342, 7
    %v1344 = vsub.s32 %v1341, %v1343
    %v1345 = vrot.slane %v543, %v1344
    %v1347 = vunpack.c.l.s4 842150450
    %v1348 = vunpack.c.0.s8 %v1347
    %v1349 = vlaneseq
    %v1350 = vshrl.u32 %v1349, 7
    %v1351 = vsub.s32 %v1348, %v1350
    %v1352 = vrot.slane %v543, %v1351
    %v1354 = vunpack.c.l.s4 1414812756
    %v1355 = vunpack.c.0.s8 %v1354
    %v1356 = vlaneseq
    %v1357 = vshrl.u32 %v1356, 7
    %v1358 = vsub.s32 %v1355, %v1357
    %v1359 = vrot.slane %v543, %v1358
    %v1361 = vunpack.c.l.s4 1987475062
    %v1362 = vunpack.c.0.s8 %v1361
    %v1363 = vlaneseq
    %v1364 = vshrl.u32 %v1363, 7
    %v1365 = vsub.s32 %v1362, %v1364
    %v1366 = vrot.slane %v543, %v1365
    %v1368 = vunpack.c.l.s4 269488144
    %v1369 = vunpack.c.0.s8 %v1368
    %v1370 = vlaneseq
    %v1371 = vshrl.u32 %v1370, 7
    %v1372 = vsub.s32 %v1369, %v1371
    %v1373 = vrot.slane %v544, %v1372
    %v1375 = vunpack.c.l.s4 842150450
    %v1376 = vunpack.c.0.s8 %v1375
    %v1377 = vlaneseq
    %v1378 = vshrl.u32 %v1377, 7
    %v1379 = vsub.s32 %v1376, %v1378
    %v1380 = vrot.slane %v544, %v1379
    %v1382 = vunpack.c.l.s4 1414812756
    %v1383 = vunpack.c.0.s8 %v1382
    %v1384 = vlaneseq
    %v1385 = vshrl.u32 %v1384, 7
    %v1386 = vsub.s32 %v1383, %v1385
    %v1387 = vrot.slane %v544, %v1386
    %v1389 = vunpack.c.l.s4 1987475062
    %v1390 = vunpack.c.0.s8 %v1389
    %v1391 = vlaneseq
    %v1392 = vshrl.u32 %v1391, 7
    %v1393 = vsub.s32 %v1390, %v1392
    %v1394 = vrot.slane %v544, %v1393
    %v1396 = vunpack.c.l.s4 269488144
    %v1397 = vunpack.c.0.s8 %v1396
    %v1398 = vlaneseq
    %v1399 = vshrl.u32 %v1398, 7
    %v1400 = vsub.s32 %v1397, %v1399
    %v1401 = vrot.slane %v545, %v1400
    %v1403 = vunpack.c.l.s4 842150450
    %v1404 = vunpack.c.0.s8 %v1403
    %v1405 = vlaneseq
    %v1406 = vshrl.u32 %v1405, 7
    %v1407 = vsub.s32 %v1404, %v1406
    %v1408 = vrot.slane %v545, %v1407
    %v1410 = vunpack.c.l.s4 1414812756
    %v1411 = vunpack.c.0.s8 %v1410
    %v1412 = vlaneseq
    %v1413 = vshrl.u32 %v1412, 7
    %v1414 = vsub.s32 %v1411, %v1413
    %v1415 = vrot.slane %v545, %v1414
    %v1417 = vunpack.c.l.s4 1987475062
    %v1418 = vunpack.c.0.s8 %v1417
    %v1419 = vlaneseq
    %v1420 = vshrl.u32 %v1419, 7
    %v1421 = vsub.s32 %v1418, %v1420
    %v1422 = vrot.slane %v545, %v1421
    %v1424 = vunpack.c.l.s4 269488144
    %v1425 = vunpack.c.0.s8 %v1424
    %v1426 = vlaneseq
    %v1427 = vshrl.u32 %v1426, 7
    %v1428 = vsub.s32 %v1425, %v1427
    %v1429 = vrot.slane %v546, %v1428
    %v1431 = vunpack.c.l.s4 842150450
    %v1432 = vunpack.c.0.s8 %v1431
    %v1433 = vlaneseq
    %v1434 = vshrl.u32 %v1433, 7
    %v1435 = vsub.s32 %v1432, %v1434
    %v1436 = vrot.slane %v546, %v1435
    %v1438 = vunpack.c.l.s4 1414812756
    %v1439 = vunpack.c.0.s8 %v1438
    %v1440 = vlaneseq
    %v1441 = vshrl.u32 %v1440, 7
    %v1442 = vsub.s32 %v1439, %v1441
    %v1443 = vrot.slane %v546, %v1442
    %v1445 = vunpack.c.l.s4 1987475062
    %v1446 = vunpack.c.0.s8 %v1445
    %v1447 = vlaneseq
    %v1448 = vshrl.u32 %v1447, 7
    %v1449 = vsub.s32 %v1446, %v1448
    %v1450 = vrot.slane %v546, %v1449
    %v1452 = vunpack.c.l.s4 269488144
    %v1453 = vunpack.c.0.s8 %v1452
    %v1454 = vlaneseq
    %v1455 = vshrl.u32 %v1454, 7
    %v1456 = vsub.s32 %v1453, %v1455
    %v1457 = vrot.slane %v547, %v1456
    %v1459 = vunpack.c.l.s4 842150450
    %v1460 = vunpack.c.0.s8 %v1459
    %v1461 = vlaneseq
    %v1462 = vshrl.u32 %v1461, 7
    %v1463 = vsub.s32 %v1460, %v1462
    %v1464 = vrot.slane %v547, %v1463
    %v1466 = vunpack.c.l.s4 1414812756
    %v1467 = vunpack.c.0.s8 %v1466
    %v1468 = vlaneseq
    %v1469 = vshrl.u32 %v1468, 7
    %v1470 = vsub.s32 %v1467, %v1469
    %v1471 = vrot.slane %v547, %v1470
    %v1473 = vunpack.c.l.s4 1987475062
    %v1474 = vunpack.c.0.s8 %v1473
    %v1475 = vlaneseq
    %v1476 = vshrl.u32 %v1475, 7
    %v1477 = vsub.s32 %v1474, %v1476
    %v1478 = vrot.slane %v547, %v1477
    %v1480 = vunpack.c.l.s4 269488144
    %v1481 = vunpack.c.0.s8 %v1480
    %v1482 = vlaneseq
    %v1483 = vshrl.u32 %v1482, 7
    %v1484 = vsub.s32 %v1481, %v1483
    %v1485 = vrot.slane %v548, %v1484
    %v1487 = vunpack.c.l.s4 842150450
    %v1488 = vunpack.c.0.s8 %v1487
    %v1489 = vlaneseq
    %v1490 = vshrl.u32 %v1489, 7
    %v1491 = vsub.s32 %v1488, %v1490
    %v1492 = vrot.slane %v548, %v1491
    %v1494 = vunpack.c.l.s4 1414812756
    %v1495 = vunpack.c.0.s8 %v1494
    %v1496 = vlaneseq
    %v1497 = vshrl.u32 %v1496, 7
    %v1498 = vsub.s32 %v1495, %v1497
    %v1499 = vrot.slane %v548, %v1498
    %v1501 = vunpack.c.l.s4 1987475062
    %v1502 = vunpack.c.0.s8 %v1501
    %v1503 = vlaneseq
    %v1504 = vshrl.u32 %v1503, 7
    %v1505 = vsub.s32 %v1502, %v1504
    %v1506 = vrot.slane %v548, %v1505
    %v1508 = vunpack.c.l.s4 269488144
    %v1509 = vunpack.c.0.s8 %v1508
    %v1510 = vlaneseq
    %v1511 = vshrl.u32 %v1510, 7
    %v1512 = vsub.s32 %v1509, %v1511
    %v1513 = vrot.slane %v549, %v1512
    %v1515 = vunpack.c.l.s4 842150450
    %v1516 = vunpack.c.0.s8 %v1515
    %v1517 = vlaneseq
    %v1518 = vshrl.u32 %v1517, 7
    %v1519 = vsub.s32 %v1516, %v1518
    %v1520 = vrot.slane %v549, %v1519
    %v1522 = vunpack.c.l.s4 1414812756
    %v1523 = vunpack.c.0.s8 %v1522
    %v1524 = vlaneseq
    %v1525 = vshrl.u32 %v1524, 7
    %v1526 = vsub.s32 %v1523, %v1525
    %v1527 = vrot.slane %v549, %v1526
    %v1529 = vunpack.c.l.s4 1987475062
    %v1530 = vunpack.c.0.s8 %v1529
    %v1531 = vlaneseq
    %v1532 = vshrl.u32 %v1531, 7
    %v1533 = vsub.s32 %v1530, %v1532
    %v1534 = vrot.slane %v549, %v1533
    %v1536 = vunpack.c.l.s4 269488144
    %v1537 = vunpack.c.0.s8 %v1536
    %v1538 = vlaneseq
    %v1539 = vshrl.u32 %v1538, 7
    %v1540 = vsub.s32 %v1537, %v1539
    %v1541 = vrot.slane %v550, %v1540
    %v1543 = vunpack.c.l.s4 842150450
    %v1544 = vunpack.c.0.s8 %v1543
    %v1545 = vlaneseq
    %v1546 = vshrl.u32 %v1545, 7
    %v1547 = vsub.s32 %v1544, %v1546
    %v1548 = vrot.slane %v550, %v1547
    %v1550 = vunpack.c.l.s4 1414812756
    %v1551 = vunpack.c.0.s8 %v1550
    %v1552 = vlaneseq
    %v1553 = vshrl.u32 %v1552, 7
    %v1554 = vsub.s32 %v1551, %v1553
    %v1555 = vrot.slane %v550, %v1554
    %v1557 = vunpack.c.l.s4 1987475062
    %v1558 = vunpack.c.0.s8 %v1557
    %v1559 = vlaneseq
    %v1560 = vshrl.u32 %v1559, 7
    %v1561 = vsub.s32 %v1558, %v1560
    %v1562 = vrot.slane %v550, %v1561
    %v1564 = vunpack.c.l.s4 269488144
    %v1565 = vunpack.c.0.s8 %v1564
    %v1566 = vlaneseq
    %v1567 = vshrl.u32 %v1566, 7
    %v1568 = vsub.s32 %v1565, %v1567
    %v1569 = vrot.slane %v551, %v1568
    %v1571 = vunpack.c.l.s4 842150450
    %v1572 = vunpack.c.0.s8 %v1571
    %v1573 = vlaneseq
    %v1574 = vshrl.u32 %v1573, 7
    %v1575 = vsub.s32 %v1572, %v1574
    %v1576 = vrot.slane %v551, %v1575
    %v1578 = vunpack.c.l.s4 1414812756
    %v1579 = vunpack.c.0.s8 %v1578
    %v1580 = vlaneseq
    %v1581 = vshrl.u32 %v1580, 7
    %v1582 = vsub.s32 %v1579, %v1581
    %v1583 = vrot.slane %v551, %v1582
    %v1585 = vunpack.c.l.s4 1987475062
    %v1586 = vunpack.c.0.s8 %v1585
    %v1587 = vlaneseq
    %v1588 = vshrl.u32 %v1587, 7
    %v1589 = vsub.s32 %v1586, %v1588
    %v1590 = vrot.slane %v551, %v1589
    %v1592 = vunpack.c.l.s4 269488144
    %v1593 = vunpack.c.0.s8 %v1592
    %v1594 = vlaneseq
    %v1595 = vshrl.u32 %v1594, 7
    %v1596 = vsub.s32 %v1593, %v1595
    %v1597 = vrot.slane %v552, %v1596
    %v1599 = vunpack.c.l.s4 842150450
    %v1600 = vunpack.c.0.s8 %v1599
    %v1601 = vlaneseq
    %v1602 = vshrl.u32 %v1601, 7
    %v1603 = vsub.s32 %v1600, %v1602
    %v1604 = vrot.slane %v552, %v1603
    %v1606 = vunpack.c.l.s4 1414812756
    %v1607 = vunpack.c.0.s8 %v1606
    %v1608 = vlaneseq
    %v1609 = vshrl.u32 %v1608, 7
    %v1610 = vsub.s32 %v1607, %v1609
    %v1611 = vrot.slane %v552, %v1610
    %v1613 = vunpack.c.l.s4 1987475062
    %v1614 = vunpack.c.0.s8 %v1613
    %v1615 = vlaneseq
    %v1616 = vshrl.u32 %v1615, 7
    %v1617 = vsub.s32 %v1614, %v1616
    %v1618 = vrot.slane %v552, %v1617
    %v1620 = vunpack.c.l.s4 269488144
    %v1621 = vunpack.c.0.s8 %v1620
    %v1622 = vlaneseq
    %v1623 = vshrl.u32 %v1622, 7
    %v1624 = vsub.s32 %v1621, %v1623
    %v1625 = vrot.slane %v553, %v1624
    %v1627 = vunpack.c.l.s4 842150450
    %v1628 = vunpack.c.0.s8 %v1627
    %v1629 = vlaneseq
    %v1630 = vshrl.u32 %v1629, 7
    %v1631 = vsub.s32 %v1628, %v1630
    %v1632 = vrot.slane %v553, %v1631
    %v1634 = vunpack.c.l.s4 1414812756
    %v1635 = vunpack.c.0.s8 %v1634
    %v1636 = vlaneseq
    %v1637 = vshrl.u32 %v1636, 7
    %v1638 = vsub.s32 %v1635, %v1637
    %v1639 = vrot.slane %v553, %v1638
    %v1641 = vunpack.c.l.s4 1987475062
    %v1642 = vunpack.c.0.s8 %v1641
    %v1643 = vlaneseq
    %v1644 = vshrl.u32 %v1643, 7
    %v1645 = vsub.s32 %v1642, %v1644
    %v1646 = vrot.slane %v553, %v1645
    %v1648 = vunpack.c.l.s4 269488144
    %v1649 = vunpack.c.0.s8 %v1648
    %v1650 = vlaneseq
    %v1651 = vshrl.u32 %v1650, 7
    %v1652 = vsub.s32 %v1649, %v1651
    %v1653 = vrot.slane %v554, %v1652
    %v1655 = vunpack.c.l.s4 842150450
    %v1656 = vunpack.c.0.s8 %v1655
    %v1657 = vlaneseq
    %v1658 = vshrl.u32 %v1657, 7
    %v1659 = vsub.s32 %v1656, %v1658
    %v1660 = vrot.slane %v554, %v1659
    %v1662 = vunpack.c.l.s4 1414812756
    %v1663 = vunpack.c.0.s8 %v1662
    %v1664 = vlaneseq
    %v1665 = vshrl.u32 %v1664, 7
    %v1666 = vsub.s32 %v1663, %v1665
    %v1667 = vrot.slane %v554, %v1666
    %v1669 = vunpack.c.l.s4 1987475062
    %v1670 = vunpack.c.0.s8 %v1669
    %v1671 = vlaneseq
    %v1672 = vshrl.u32 %v1671, 7
    %v1673 = vsub.s32 %v1670, %v1672
    %v1674 = vrot.slane %v554, %v1673
    %v1676 = vunpack.c.l.s4 269488144
    %v1677 = vunpack.c.0.s8 %v1676
    %v1678 = vlaneseq
    %v1679 = vshrl.u32 %v1678, 7
    %v1680 = vsub.s32 %v1677, %v1679
    %v1681 = vrot.slane %v555, %v1680
    %v1683 = vunpack.c.l.s4 842150450
    %v1684 = vunpack.c.0.s8 %v1683
    %v1685 = vlaneseq
    %v1686 = vshrl.u32 %v1685, 7
    %v1687 = vsub.s32 %v1684, %v1686
    %v1688 = vrot.slane %v555, %v1687
    %v1690 = vunpack.c.l.s4 1414812756
    %v1691 = vunpack.c.0.s8 %v1690
    %v1692 = vlaneseq
    %v1693 = vshrl.u32 %v1692, 7
    %v1694 = vsub.s32 %v1691, %v1693
    %v1695 = vrot.slane %v555, %v1694
    %v1697 = vunpack.c.l.s4 1987475062
    %v1698 = vunpack.c.0.s8 %v1697
    %v1699 = vlaneseq
    %v1700 = vshrl.u32 %v1699, 7
    %v1701 = vsub.s32 %v1698, %v1700
    %v1702 = vrot.slane %v555, %v1701
    %v1704 = vunpack.c.l.s4 269488144
    %v1705 = vunpack.c.0.s8 %v1704
    %v1706 = vlaneseq
    %v1707 = vshrl.u32 %v1706, 7
    %v1708 = vsub.s32 %v1705, %v1707
    %v1709 = vrot.slane %v556, %v1708
    %v1711 = vunpack.c.l.s4 842150450
    %v1712 = vunpack.c.0.s8 %v1711
    %v1713 = vlaneseq
    %v1714 = vshrl.u32 %v1713, 7
    %v1715 = vsub.s32 %v1712, %v1714
    %v1716 = vrot.slane %v556, %v1715
    %v1718 = vunpack.c.l.s4 1414812756
    %v1719 = vunpack.c.0.s8 %v1718
    %v1720 = vlaneseq
    %v1721 = vshrl.u32 %v1720, 7
    %v1722 = vsub.s32 %v1719, %v1721
    %v1723 = vrot.slane %v556, %v1722
    %v1725 = vunpack.c.l.s4 1987475062
    %v1726 = vunpack.c.0.s8 %v1725
    %v1727 = vlaneseq
    %v1728 = vshrl.u32 %v1727, 7
    %v1729 = vsub.s32 %v1726, %v1728
    %v1730 = vrot.slane %v556, %v1729
    %v1732 = vunpack.c.l.s4 269488144
    %v1733 = vunpack.c.0.s8 %v1732
    %v1734 = vlaneseq
    %v1735 = vshrl.u32 %v1734, 7
    %v1736 = vsub.s32 %v1733, %v1735
    %v1737 = vrot.slane %v557, %v1736
    %v1739 = vunpack.c.l.s4 842150450
    %v1740 = vunpack.c.0.s8 %v1739
    %v1741 = vlaneseq
    %v1742 = vshrl.u32 %v1741, 7
    %v1743 = vsub.s32 %v1740, %v1742
    %v1744 = vrot.slane %v557, %v1743
    %v1746 = vunpack.c.l.s4 1414812756
    %v1747 = vunpack.c.0.s8 %v1746
    %v1748 = vlaneseq
    %v1749 = vshrl.u32 %v1748, 7
    %v1750 = vsub.s32 %v1747, %v1749
    %v1751 = vrot.slane %v557, %v1750
    %v1753 = vunpack.c.l.s4 1987475062
    %v1754 = vunpack.c.0.s8 %v1753
    %v1755 = vlaneseq
    %v1756 = vshrl.u32 %v1755, 7
    %v1757 = vsub.s32 %v1754, %v1756
    %v1758 = vrot.slane %v557, %v1757
    %v1760 = vunpack.c.l.s4 269488144
    %v1761 = vunpack.c.0.s8 %v1760
    %v1762 = vlaneseq
    %v1763 = vshrl.u32 %v1762, 7
    %v1764 = vsub.s32 %v1761, %v1763
    %v1765 = vrot.slane %v558, %v1764
    %v1767 = vunpack.c.l.s4 842150450
    %v1768 = vunpack.c.0.s8 %v1767
    %v1769 = vlaneseq
    %v1770 = vshrl.u32 %v1769, 7
    %v1771 = vsub.s32 %v1768, %v1770
    %v1772 = vrot.slane %v558, %v1771
    %v1774 = vunpack.c.l.s4 1414812756
    %v1775 = vunpack.c.0.s8 %v1774
    %v1776 = vlaneseq
    %v1777 = vshrl.u32 %v1776, 7
    %v1778 = vsub.s32 %v1775, %v1777
    %v1779 = vrot.slane %v558, %v1778
    %v1781 = vunpack.c.l.s4 1987475062
    %v1782 = vunpack.c.0.s8 %v1781
    %v1783 = vlaneseq
    %v1784 = vshrl.u32 %v1783, 7
    %v1785 = vsub.s32 %v1782, %v1784
    %v1786 = vrot.slane %v558, %v1785
    %v1788 = vunpack.c.l.s4 269488144
    %v1789 = vunpack.c.0.s8 %v1788
    %v1790 = vlaneseq
    %v1791 = vshrl.u32 %v1790, 7
    %v1792 = vsub.s32 %v1789, %v1791
    %v1793 = vrot.slane %v559, %v1792
    %v1795 = vunpack.c.l.s4 842150450
    %v1796 = vunpack.c.0.s8 %v1795
    %v1797 = vlaneseq
    %v1798 = vshrl.u32 %v1797, 7
    %v1799 = vsub.s32 %v1796, %v1798
    %v1800 = vrot.slane %v559, %v1799
    %v1802 = vunpack.c.l.s4 1414812756
    %v1803 = vunpack.c.0.s8 %v1802
    %v1804 = vlaneseq
    %v1805 = vshrl.u32 %v1804, 7
    %v1806 = vsub.s32 %v1803, %v1805
    %v1807 = vrot.slane %v559, %v1806
    %v1809 = vunpack.c.l.s4 1987475062
    %v1810 = vunpack.c.0.s8 %v1809
    %v1811 = vlaneseq
    %v1812 = vshrl.u32 %v1811, 7
    %v1813 = vsub.s32 %v1810, %v1812
    %v1814 = vrot.slane %v559, %v1813
    %v1816 = vunpack.c.l.s4 269488144
    %v1817 = vunpack.c.0.s8 %v1816
    %v1818 = vlaneseq
    %v1819 = vshrl.u32 %v1818, 7
    %v1820 = vsub.s32 %v1817, %v1819
    %v1821 = vrot.slane %v560, %v1820
    %v1823 = vunpack.c.l.s4 842150450
    %v1824 = vunpack.c.0.s8 %v1823
    %v1825 = vlaneseq
    %v1826 = vshrl.u32 %v1825, 7
    %v1827 = vsub.s32 %v1824, %v1826
    %v1828 = vrot.slane %v560, %v1827
    %v1830 = vunpack.c.l.s4 1414812756
    %v1831 = vunpack.c.0.s8 %v1830
    %v1832 = vlaneseq
    %v1833 = vshrl.u32 %v1832, 7
    %v1834 = vsub.s32 %v1831, %v1833
    %v1835 = vrot.slane %v560, %v1834
    %v1837 = vunpack.c.l.s4 1987475062
    %v1838 = vunpack.c.0.s8 %v1837
    %v1839 = vlaneseq
    %v1840 = vshrl.u32 %v1839, 7
    %v1841 = vsub.s32 %v1838, %v1840
    %v1842 = vrot.slane %v560, %v1841
    %v1844 = vunpack.c.l.s4 269488144
    %v1845 = vunpack.c.0.s8 %v1844
    %v1846 = vlaneseq
    %v1847 = vshrl.u32 %v1846, 7
    %v1848 = vsub.s32 %v1845, %v1847
    %v1849 = vrot.slane %v561, %v1848
    %v1851 = vunpack.c.l.s4 842150450
    %v1852 = vunpack.c.0.s8 %v1851
    %v1853 = vlaneseq
    %v1854 = vshrl.u32 %v1853, 7
    %v1855 = vsub.s32 %v1852, %v1854
    %v1856 = vrot.slane %v561, %v1855
    %v1858 = vunpack.c.l.s4 1414812756
    %v1859 = vunpack.c.0.s8 %v1858
    %v1860 = vlaneseq
    %v1861 = vshrl.u32 %v1860, 7
    %v1862 = vsub.s32 %v1859, %v1861
    %v1863 = vrot.slane %v561, %v1862
    %v1865 = vunpack.c.l.s4 1987475062
    %v1866 = vunpack.c.0.s8 %v1865
    %v1867 = vlaneseq
    %v1868 = vshrl.u32 %v1867, 7
    %v1869 = vsub.s32 %v1866, %v1868
    %v1870 = vrot.slane %v561, %v1869
    %v1872 = vunpack.c.l.s4 269488144
    %v1873 = vunpack.c.0.s8 %v1872
    %v1874 = vlaneseq
    %v1875 = vshrl.u32 %v1874, 7
    %v1876 = vsub.s32 %v1873, %v1875
    %v1877 = vrot.slane %v562, %v1876
    %v1879 = vunpack.c.l.s4 842150450
    %v1880 = vunpack.c.0.s8 %v1879
    %v1881 = vlaneseq
    %v1882 = vshrl.u32 %v1881, 7
    %v1883 = vsub.s32 %v1880, %v1882
    %v1884 = vrot.slane %v562, %v1883
    %v1886 = vunpack.c.l.s4 1414812756
    %v1887 = vunpack.c.0.s8 %v1886
    %v1888 = vlaneseq
    %v1889 = vshrl.u32 %v1888, 7
    %v1890 = vsub.s32 %v1887, %v1889
    %v1891 = vrot.slane %v562, %v1890
    %v1893 = vunpack.c.l.s4 1987475062
    %v1894 = vunpack.c.0.s8 %v1893
    %v1895 = vlaneseq
    %v1896 = vshrl.u32 %v1895, 7
    %v1897 = vsub.s32 %v1894, %v1896
    %v1898 = vrot.slane %v562, %v1897
    %v1900 = vunpack.c.l.s4 269488144
    %v1901 = vunpack.c.0.s8 %v1900
    %v1902 = vlaneseq
    %v1903 = vshrl.u32 %v1902, 7
    %v1904 = vsub.s32 %v1901, %v1903
    %v1905 = vrot.slane %v563, %v1904
    %v1907 = vunpack.c.l.s4 842150450
    %v1908 = vunpack.c.0.s8 %v1907
    %v1909 = vlaneseq
    %v1910 = vshrl.u32 %v1909, 7
    %v1911 = vsub.s32 %v1908, %v1910
    %v1912 = vrot.slane %v563, %v1911
    %v1914 = vunpack.c.l.s4 1414812756
    %v1915 = vunpack.c.0.s8 %v1914
    %v1916 = vlaneseq
    %v1917 = vshrl.u32 %v1916, 7
    %v1918 = vsub.s32 %v1915, %v1917
    %v1919 = vrot.slane %v563, %v1918
    %v1921 = vunpack.c.l.s4 1987475062
    %v1922 = vunpack.c.0.s8 %v1921
    %v1923 = vlaneseq
    %v1924 = vshrl.u32 %v1923, 7
    %v1925 = vsub.s32 %v1922, %v1924
    %v1926 = vrot.slane %v563, %v1925
    %v1928 = vunpack.c.l.s4 269488144
    %v1929 = vunpack.c.0.s8 %v1928
    %v1930 = vlaneseq
    %v1931 = vshrl.u32 %v1930, 7
    %v1932 = vsub.s32 %v1929, %v1931
    %v1933 = vrot.slane %v564, %v1932
    %v1935 = vunpack.c.l.s4 842150450
    %v1936 = vunpack.c.0.s8 %v1935
    %v1937 = vlaneseq
    %v1938 = vshrl.u32 %v1937, 7
    %v1939 = vsub.s32 %v1936, %v1938
    %v1940 = vrot.slane %v564, %v1939
    %v1942 = vunpack.c.l.s4 1414812756
    %v1943 = vunpack.c.0.s8 %v1942
    %v1944 = vlaneseq
    %v1945 = vshrl.u32 %v1944, 7
    %v1946 = vsub.s32 %v1943, %v1945
    %v1947 = vrot.slane %v564, %v1946
    %v1949 = vunpack.c.l.s4 1987475062
    %v1950 = vunpack.c.0.s8 %v1949
    %v1951 = vlaneseq
    %v1952 = vshrl.u32 %v1951, 7
    %v1953 = vsub.s32 %v1950, %v1952
    %v1954 = vrot.slane %v564, %v1953
    %v1956 = vunpack.c.l.s4 269488144
    %v1957 = vunpack.c.0.s8 %v1956
    %v1958 = vlaneseq
    %v1959 = vshrl.u32 %v1958, 7
    %v1960 = vsub.s32 %v1957, %v1959
    %v1961 = vrot.slane %v565, %v1960
    %v1963 = vunpack.c.l.s4 842150450
    %v1964 = vunpack.c.0.s8 %v1963
    %v1965 = vlaneseq
    %v1966 = vshrl.u32 %v1965, 7
    %v1967 = vsub.s32 %v1964, %v1966
    %v1968 = vrot.slane %v565, %v1967
    %v1970 = vunpack.c.l.s4 1414812756
    %v1971 = vunpack.c.0.s8 %v1970
    %v1972 = vlaneseq
    %v1973 = vshrl.u32 %v1972, 7
    %v1974 = vsub.s32 %v1971, %v1973
    %v1975 = vrot.slane %v565, %v1974
    %v1977 = vunpack.c.l.s4 1987475062
    %v1978 = vunpack.c.0.s8 %v1977
    %v1979 = vlaneseq
    %v1980 = vshrl.u32 %v1979, 7
    %v1981 = vsub.s32 %v1978, %v1980
    %v1982 = vrot.slane %v565, %v1981
    %v1984 = vunpack.c.l.s4 269488144
    %v1985 = vunpack.c.0.s8 %v1984
    %v1986 = vlaneseq
    %v1987 = vshrl.u32 %v1986, 7
    %v1988 = vsub.s32 %v1985, %v1987
    %v1989 = vrot.slane %v566, %v1988
    %v1991 = vunpack.c.l.s4 842150450
    %v1992 = vunpack.c.0.s8 %v1991
    %v1993 = vlaneseq
    %v1994 = vshrl.u32 %v1993, 7
    %v1995 = vsub.s32 %v1992, %v1994
    %v1996 = vrot.slane %v566, %v1995
    %v1998 = vunpack.c.l.s4 1414812756
    %v1999 = vunpack.c.0.s8 %v1998
    %v2000 = vlaneseq
    %v2001 = vshrl.u32 %v2000, 7
    %v2002 = vsub.s32 %v1999, %v2001
    %v2003 = vrot.slane %v566, %v2002
    %v2005 = vunpack.c.l.s4 1987475062
    %v2006 = vunpack.c.0.s8 %v2005
    %v2007 = vlaneseq
    %v2008 = vshrl.u32 %v2007, 7
    %v2009 = vsub.s32 %v2006, %v2008
    %v2010 = vrot.slane %v566, %v2009
    %v2012 = vunpack.c.l.s4 269488144
    %v2013 = vunpack.c.0.s8 %v2012
    %v2014 = vlaneseq
    %v2015 = vshrl.u32 %v2014, 7
    %v2016 = vsub.s32 %v2013, %v2015
    %v2017 = vrot.slane %v567, %v2016
    %v2019 = vunpack.c.l.s4 842150450
    %v2020 = vunpack.c.0.s8 %v2019
    %v2021 = vlaneseq
    %v2022 = vshrl.u32 %v2021, 7
    %v2023 = vsub.s32 %v2020, %v2022
    %v2024 = vrot.slane %v567, %v2023
    %v2026 = vunpack.c.l.s4 1414812756
    %v2027 = vunpack.c.0.s8 %v2026
    %v2028 = vlaneseq
    %v2029 = vshrl.u32 %v2028, 7
    %v2030 = vsub.s32 %v2027, %v2029
    %v2031 = vrot.slane %v567, %v2030
    %v2033 = vunpack.c.l.s4 1987475062
    %v2034 = vunpack.c.0.s8 %v2033
    %v2035 = vlaneseq
    %v2036 = vshrl.u32 %v2035, 7
    %v2037 = vsub.s32 %v2034, %v2036
    %v2038 = vrot.slane %v567, %v2037
    %v2040 = vunpack.c.l.s4 269488144
    %v2041 = vunpack.c.0.s8 %v2040
    %v2042 = vlaneseq
    %v2043 = vshrl.u32 %v2042, 7
    %v2044 = vsub.s32 %v2041, %v2043
    %v2045 = vrot.slane %v568, %v2044
    %v2047 = vunpack.c.l.s4 842150450
    %v2048 = vunpack.c.0.s8 %v2047
    %v2049 = vlaneseq
    %v2050 = vshrl.u32 %v2049, 7
    %v2051 = vsub.s32 %v2048, %v2050
    %v2052 = vrot.slane %v568, %v2051
    %v2054 = vunpack.c.l.s4 1414812756
    %v2055 = vunpack.c.0.s8 %v2054
    %v2056 = vlaneseq
    %v2057 = vshrl.u32 %v2056, 7
    %v2058 = vsub.s32 %v2055, %v2057
    %v2059 = vrot.slane %v568, %v2058
    %v2061 = vunpack.c.l.s4 1987475062
    %v2062 = vunpack.c.0.s8 %v2061
    %v2063 = vlaneseq
    %v2064 = vshrl.u32 %v2063, 7
    %v2065 = vsub.s32 %v2062, %v2064
    %v2066 = vrot.slane %v568, %v2065
    %v2068 = vunpack.c.l.s4 269488144
    %v2069 = vunpack.c.0.s8 %v2068
    %v2070 = vlaneseq
    %v2071 = vshrl.u32 %v2070, 7
    %v2072 = vsub.s32 %v2069, %v2071
    %v2073 = vrot.slane %v569, %v2072
    %v2075 = vunpack.c.l.s4 842150450
    %v2076 = vunpack.c.0.s8 %v2075
    %v2077 = vlaneseq
    %v2078 = vshrl.u32 %v2077, 7
    %v2079 = vsub.s32 %v2076, %v2078
    %v2080 = vrot.slane %v569, %v2079
    %v2082 = vunpack.c.l.s4 1414812756
    %v2083 = vunpack.c.0.s8 %v2082
    %v2084 = vlaneseq
    %v2085 = vshrl.u32 %v2084, 7
    %v2086 = vsub.s32 %v2083, %v2085
    %v2087 = vrot.slane %v569, %v2086
    %v2089 = vunpack.c.l.s4 1987475062
    %v2090 = vunpack.c.0.s8 %v2089
    %v2091 = vlaneseq
    %v2092 = vshrl.u32 %v2091, 7
    %v2093 = vsub.s32 %v2090, %v2092
    %v2094 = vrot.slane %v569, %v2093
    %v2096 = vunpack.c.l.s4 269488144
    %v2097 = vunpack.c.0.s8 %v2096
    %v2098 = vlaneseq
    %v2099 = vshrl.u32 %v2098, 7
    %v2100 = vsub.s32 %v2097, %v2099
    %v2101 = vrot.slane %v570, %v2100
    %v2103 = vunpack.c.l.s4 842150450
    %v2104 = vunpack.c.0.s8 %v2103
    %v2105 = vlaneseq
    %v2106 = vshrl.u32 %v2105, 7
    %v2107 = vsub.s32 %v2104, %v2106
    %v2108 = vrot.slane %v570, %v2107
    %v2110 = vunpack.c.l.s4 1414812756
    %v2111 = vunpack.c.0.s8 %v2110
    %v2112 = vlaneseq
    %v2113 = vshrl.u32 %v2112, 7
    %v2114 = vsub.s32 %v2111, %v2113
    %v2115 = vrot.slane %v570, %v2114
    %v2117 = vunpack.c.l.s4 1987475062
    %v2118 = vunpack.c.0.s8 %v2117
    %v2119 = vlaneseq
    %v2120 = vshrl.u32 %v2119, 7
    %v2121 = vsub.s32 %v2118, %v2120
    %v2122 = vrot.slane %v570, %v2121
    %v2124 = vunpack.c.l.s4 269488144
    %v2125 = vunpack.c.0.s8 %v2124
    %v2126 = vlaneseq
    %v2127 = vshrl.u32 %v2126, 7
    %v2128 = vsub.s32 %v2125, %v2127
    %v2129 = vrot.slane %v571, %v2128
    %v2131 = vunpack.c.l.s4 842150450
    %v2132 = vunpack.c.0.s8 %v2131
    %v2133 = vlaneseq
    %v2134 = vshrl.u32 %v2133, 7
    %v2135 = vsub.s32 %v2132, %v2134
    %v2136 = vrot.slane %v571, %v2135
    %v2138 = vunpack.c.l.s4 1414812756
    %v2139 = vunpack.c.0.s8 %v2138
    %v2140 = vlaneseq
    %v2141 = vshrl.u32 %v2140, 7
    %v2142 = vsub.s32 %v2139, %v2141
    %v2143 = vrot.slane %v571, %v2142
    %v2145 = vunpack.c.l.s4 1987475062
    %v2146 = vunpack.c.0.s8 %v2145
    %v2147 = vlaneseq
    %v2148 = vshrl.u32 %v2147, 7
    %v2149 = vsub.s32 %v2146, %v2148
    %v2150 = vrot.slane %v571, %v2149
    %v2152 = vunpack.c.l.s4 269488144
    %v2153 = vunpack.c.0.s8 %v2152
    %v2154 = vlaneseq
    %v2155 = vshrl.u32 %v2154, 7
    %v2156 = vsub.s32 %v2153, %v2155
    %v2157 = vrot.slane %v572, %v2156
    %v2159 = vunpack.c.l.s4 842150450
    %v2160 = vunpack.c.0.s8 %v2159
    %v2161 = vlaneseq
    %v2162 = vshrl.u32 %v2161, 7
    %v2163 = vsub.s32 %v2160, %v2162
    %v2164 = vrot.slane %v572, %v2163
    %v2166 = vunpack.c.l.s4 1414812756
    %v2167 = vunpack.c.0.s8 %v2166
    %v2168 = vlaneseq
    %v2169 = vshrl.u32 %v2168, 7
    %v2170 = vsub.s32 %v2167, %v2169
    %v2171 = vrot.slane %v572, %v2170
    %v2173 = vunpack.c.l.s4 1987475062
    %v2174 = vunpack.c.0.s8 %v2173
    %v2175 = vlaneseq
    %v2176 = vshrl.u32 %v2175, 7
    %v2177 = vsub.s32 %v2174, %v2176
    %v2178 = vrot.slane %v572, %v2177
    %v2180 = vunpack.c.l.s4 269488144
    %v2181 = vunpack.c.0.s8 %v2180
    %v2182 = vlaneseq
    %v2183 = vshrl.u32 %v2182, 7
    %v2184 = vsub.s32 %v2181, %v2183
    %v2185 = vrot.slane %v573, %v2184
    %v2187 = vunpack.c.l.s4 842150450
    %v2188 = vunpack.c.0.s8 %v2187
    %v2189 = vlaneseq
    %v2190 = vshrl.u32 %v2189, 7
    %v2191 = vsub.s32 %v2188, %v2190
    %v2192 = vrot.slane %v573, %v2191
    %v2194 = vunpack.c.l.s4 1414812756
    %v2195 = vunpack.c.0.s8 %v2194
    %v2196 = vlaneseq
    %v2197 = vshrl.u32 %v2196, 7
    %v2198 = vsub.s32 %v2195, %v2197
    %v2199 = vrot.slane %v573, %v2198
    %v2201 = vunpack.c.l.s4 1987475062
    %v2202 = vunpack.c.0.s8 %v2201
    %v2203 = vlaneseq
    %v2204 = vshrl.u32 %v2203, 7
    %v2205 = vsub.s32 %v2202, %v2204
    %v2206 = vrot.slane %v573, %v2205
    %v2208 = vunpack.c.l.s4 269488144
    %v2209 = vunpack.c.0.s8 %v2208
    %v2210 = vlaneseq
    %v2211 = vshrl.u32 %v2210, 7
    %v2212 = vsub.s32 %v2209, %v2211
    %v2213 = vrot.slane %v574, %v2212
    %v2215 = vunpack.c.l.s4 842150450
    %v2216 = vunpack.c.0.s8 %v2215
    %v2217 = vlaneseq
    %v2218 = vshrl.u32 %v2217, 7
    %v2219 = vsub.s32 %v2216, %v2218
    %v2220 = vrot.slane %v574, %v2219
    %v2222 = vunpack.c.l.s4 1414812756
    %v2223 = vunpack.c.0.s8 %v2222
    %v2224 = vlaneseq
    %v2225 = vshrl.u32 %v2224, 7
    %v2226 = vsub.s32 %v2223, %v2225
    %v2227 = vrot.slane %v574, %v2226
    %v2229 = vunpack.c.l.s4 1987475062
    %v2230 = vunpack.c.0.s8 %v2229
    %v2231 = vlaneseq
    %v2232 = vshrl.u32 %v2231, 7
    %v2233 = vsub.s32 %v2230, %v2232
    %v2234 = vrot.slane %v574, %v2233
    %v2236 = vunpack.c.l.s4 269488144
    %v2237 = vunpack.c.0.s8 %v2236
    %v2238 = vlaneseq
    %v2239 = vshrl.u32 %v2238, 7
    %v2240 = vsub.s32 %v2237, %v2239
    %v2241 = vrot.slane %v575, %v2240
    %v2243 = vunpack.c.l.s4 842150450
    %v2244 = vunpack.c.0.s8 %v2243
    %v2245 = vlaneseq
    %v2246 = vshrl.u32 %v2245, 7
    %v2247 = vsub.s32 %v2244, %v2246
    %v2248 = vrot.slane %v575, %v2247
    %v2250 = vunpack.c.l.s4 1414812756
    %v2251 = vunpack.c.0.s8 %v2250
    %v2252 = vlaneseq
    %v2253 = vshrl.u32 %v2252, 7
    %v2254 = vsub.s32 %v2251, %v2253
    %v2255 = vrot.slane %v575, %v2254
    %v2257 = vunpack.c.l.s4 1987475062
    %v2258 = vunpack.c.0.s8 %v2257
    %v2259 = vlaneseq
    %v2260 = vshrl.u32 %v2259, 7
    %v2261 = vsub.s32 %v2258, %v2260
    %v2262 = vrot.slane %v575, %v2261
    %v2264 = vunpack.c.l.s4 269488144
    %v2265 = vunpack.c.0.s8 %v2264
    %v2266 = vlaneseq
    %v2267 = vshrl.u32 %v2266, 7
    %v2268 = vsub.s32 %v2265, %v2267
    %v2269 = vrot.slane %v576, %v2268
    %v2271 = vunpack.c.l.s4 842150450
    %v2272 = vunpack.c.0.s8 %v2271
    %v2273 = vlaneseq
    %v2274 = vshrl.u32 %v2273, 7
    %v2275 = vsub.s32 %v2272, %v2274
    %v2276 = vrot.slane %v576, %v2275
    %v2278 = vunpack.c.l.s4 1414812756
    %v2279 = vunpack.c.0.s8 %v2278
    %v2280 = vlaneseq
    %v2281 = vshrl.u32 %v2280, 7
    %v2282 = vsub.s32 %v2279, %v2281
    %v2283 = vrot.slane %v576, %v2282
    %v2285 = vunpack.c.l.s4 1987475062
    %v2286 = vunpack.c.0.s8 %v2285
    %v2287 = vlaneseq
    %v2288 = vshrl.u32 %v2287, 7
    %v2289 = vsub.s32 %v2286, %v2288
    %v2290 = vrot.slane %v576, %v2289
    %v2292 = vunpack.c.l.s4 269488144
    %v2293 = vunpack.c.0.s8 %v2292
    %v2294 = vlaneseq
    %v2295 = vshrl.u32 %v2294, 7
    %v2296 = vsub.s32 %v2293, %v2295
    %v2297 = vrot.slane %v577, %v2296
    %v2299 = vunpack.c.l.s4 842150450
    %v2300 = vunpack.c.0.s8 %v2299
    %v2301 = vlaneseq
    %v2302 = vshrl.u32 %v2301, 7
    %v2303 = vsub.s32 %v2300, %v2302
    %v2304 = vrot.slane %v577, %v2303
    %v2306 = vunpack.c.l.s4 1414812756
    %v2307 = vunpack.c.0.s8 %v2306
    %v2308 = vlaneseq
    %v2309 = vshrl.u32 %v2308, 7
    %v2310 = vsub.s32 %v2307, %v2309
    %v2311 = vrot.slane %v577, %v2310
    %v2313 = vunpack.c.l.s4 1987475062
    %v2314 = vunpack.c.0.s8 %v2313
    %v2315 = vlaneseq
    %v2316 = vshrl.u32 %v2315, 7
    %v2317 = vsub.s32 %v2314, %v2316
    %v2318 = vrot.slane %v577, %v2317
    %v2320 = vunpack.c.l.s4 269488144
    %v2321 = vunpack.c.0.s8 %v2320
    %v2322 = vlaneseq
    %v2323 = vshrl.u32 %v2322, 7
    %v2324 = vsub.s32 %v2321, %v2323
    %v2325 = vrot.slane %v578, %v2324
    %v2327 = vunpack.c.l.s4 842150450
    %v2328 = vunpack.c.0.s8 %v2327
    %v2329 = vlaneseq
    %v2330 = vshrl.u32 %v2329, 7
    %v2331 = vsub.s32 %v2328, %v2330
    %v2332 = vrot.slane %v578, %v2331
    %v2334 = vunpack.c.l.s4 1414812756
    %v2335 = vunpack.c.0.s8 %v2334
    %v2336 = vlaneseq
    %v2337 = vshrl.u32 %v2336, 7
    %v2338 = vsub.s32 %v2335, %v2337
    %v2339 = vrot.slane %v578, %v2338
    %v2341 = vunpack.c.l.s4 1987475062
    %v2342 = vunpack.c.0.s8 %v2341
    %v2343 = vlaneseq
    %v2344 = vshrl.u32 %v2343, 7
    %v2345 = vsub.s32 %v2342, %v2344
    %v2346 = vrot.slane %v578, %v2345
    %v2348 = vunpack.c.l.s4 269488144
    %v2349 = vunpack.c.0.s8 %v2348
    %v2350 = vlaneseq
    %v2351 = vshrl.u32 %v2350, 7
    %v2352 = vsub.s32 %v2349, %v2351
    %v2353 = vrot.slane %v579, %v2352
    %v2355 = vunpack.c.l.s4 842150450
    %v2356 = vunpack.c.0.s8 %v2355
    %v2357 = vlaneseq
    %v2358 = vshrl.u32 %v2357, 7
    %v2359 = vsub.s32 %v2356, %v2358
    %v2360 = vrot.slane %v579, %v2359
    %v2362 = vunpack.c.l.s4 1414812756
    %v2363 = vunpack.c.0.s8 %v2362
    %v2364 = vlaneseq
    %v2365 = vshrl.u32 %v2364, 7
    %v2366 = vsub.s32 %v2363, %v2365
    %v2367 = vrot.slane %v579, %v2366
    %v2369 = vunpack.c.l.s4 1987475062
    %v2370 = vunpack.c.0.s8 %v2369
    %v2371 = vlaneseq
    %v2372 = vshrl.u32 %v2371, 7
    %v2373 = vsub.s32 %v2370, %v2372
    %v2374 = vrot.slane %v579, %v2373
    %v2376 = vunpack.c.l.s4 269488144
    %v2377 = vunpack.c.0.s8 %v2376
    %v2378 = vlaneseq
    %v2379 = vshrl.u32 %v2378, 7
    %v2380 = vsub.s32 %v2377, %v2379
    %v2381 = vrot.slane %v580, %v2380
    %v2383 = vunpack.c.l.s4 842150450
    %v2384 = vunpack.c.0.s8 %v2383
    %v2385 = vlaneseq
    %v2386 = vshrl.u32 %v2385, 7
    %v2387 = vsub.s32 %v2384, %v2386
    %v2388 = vrot.slane %v580, %v2387
    %v2390 = vunpack.c.l.s4 1414812756
    %v2391 = vunpack.c.0.s8 %v2390
    %v2392 = vlaneseq
    %v2393 = vshrl.u32 %v2392, 7
    %v2394 = vsub.s32 %v2391, %v2393
    %v2395 = vrot.slane %v580, %v2394
    %v2397 = vunpack.c.l.s4 1987475062
    %v2398 = vunpack.c.0.s8 %v2397
    %v2399 = vlaneseq
    %v2400 = vshrl.u32 %v2399, 7
    %v2401 = vsub.s32 %v2398, %v2400
    %v2402 = vrot.slane %v580, %v2401
    %v2404 = vunpack.c.l.s4 269488144
    %v2405 = vunpack.c.0.s8 %v2404
    %v2406 = vlaneseq
    %v2407 = vshrl.u32 %v2406, 7
    %v2408 = vsub.s32 %v2405, %v2407
    %v2409 = vrot.slane %v581, %v2408
    %v2411 = vunpack.c.l.s4 842150450
    %v2412 = vunpack.c.0.s8 %v2411
    %v2413 = vlaneseq
    %v2414 = vshrl.u32 %v2413, 7
    %v2415 = vsub.s32 %v2412, %v2414
    %v2416 = vrot.slane %v581, %v2415
    %v2418 = vunpack.c.l.s4 1414812756
    %v2419 = vunpack.c.0.s8 %v2418
    %v2420 = vlaneseq
    %v2421 = vshrl.u32 %v2420, 7
    %v2422 = vsub.s32 %v2419, %v2421
    %v2423 = vrot.slane %v581, %v2422
    %v2425 = vunpack.c.l.s4 1987475062
    %v2426 = vunpack.c.0.s8 %v2425
    %v2427 = vlaneseq
    %v2428 = vshrl.u32 %v2427, 7
    %v2429 = vsub.s32 %v2426, %v2428
    %v2430 = vrot.slane %v581, %v2429
    %v2432 = vunpack.c.l.s4 269488144
    %v2433 = vunpack.c.0.s8 %v2432
    %v2434 = vlaneseq
    %v2435 = vshrl.u32 %v2434, 7
    %v2436 = vsub.s32 %v2433, %v2435
    %v2437 = vrot.slane %v582, %v2436
    %v2439 = vunpack.c.l.s4 842150450
    %v2440 = vunpack.c.0.s8 %v2439
    %v2441 = vlaneseq
    %v2442 = vshrl.u32 %v2441, 7
    %v2443 = vsub.s32 %v2440, %v2442
    %v2444 = vrot.slane %v582, %v2443
    %v2446 = vunpack.c.l.s4 1414812756
    %v2447 = vunpack.c.0.s8 %v2446
    %v2448 = vlaneseq
    %v2449 = vshrl.u32 %v2448, 7
    %v2450 = vsub.s32 %v2447, %v2449
    %v2451 = vrot.slane %v582, %v2450
    %v2453 = vunpack.c.l.s4 1987475062
    %v2454 = vunpack.c.0.s8 %v2453
    %v2455 = vlaneseq
    %v2456 = vshrl.u32 %v2455, 7
    %v2457 = vsub.s32 %v2454, %v2456
    %v2458 = vrot.slane %v582, %v2457
    %v2460 = vunpack.c.l.s4 269488144
    %v2461 = vunpack.c.0.s8 %v2460
    %v2462 = vlaneseq
    %v2463 = vshrl.u32 %v2462, 7
    %v2464 = vsub.s32 %v2461, %v2463
    %v2465 = vrot.slane %v583, %v2464
    %v2467 = vunpack.c.l.s4 842150450
    %v2468 = vunpack.c.0.s8 %v2467
    %v2469 = vlaneseq
    %v2470 = vshrl.u32 %v2469, 7
    %v2471 = vsub.s32 %v2468, %v2470
    %v2472 = vrot.slane %v583, %v2471
    %v2474 = vunpack.c.l.s4 1414812756
    %v2475 = vunpack.c.0.s8 %v2474
    %v2476 = vlaneseq
    %v2477 = vshrl.u32 %v2476, 7
    %v2478 = vsub.s32 %v2475, %v2477
    %v2479 = vrot.slane %v583, %v2478
    %v2481 = vunpack.c.l.s4 1987475062
    %v2482 = vunpack.c.0.s8 %v2481
    %v2483 = vlaneseq
    %v2484 = vshrl.u32 %v2483, 7
    %v2485 = vsub.s32 %v2482, %v2484
    %v2486 = vrot.slane %v583, %v2485
    %v2488 = vunpack.c.l.s4 269488144
    %v2489 = vunpack.c.0.s8 %v2488
    %v2490 = vlaneseq
    %v2491 = vshrl.u32 %v2490, 7
    %v2492 = vsub.s32 %v2489, %v2491
    %v2493 = vrot.slane %v584, %v2492
    %v2495 = vunpack.c.l.s4 842150450
    %v2496 = vunpack.c.0.s8 %v2495
    %v2497 = vlaneseq
    %v2498 = vshrl.u32 %v2497, 7
    %v2499 = vsub.s32 %v2496, %v2498
    %v2500 = vrot.slane %v584, %v2499
    %v2502 = vunpack.c.l.s4 1414812756
    %v2503 = vunpack.c.0.s8 %v2502
    %v2504 = vlaneseq
    %v2505 = vshrl.u32 %v2504, 7
    %v2506 = vsub.s32 %v2503, %v2505
    %v2507 = vrot.slane %v584, %v2506
    %v2509 = vunpack.c.l.s4 1987475062
    %v2510 = vunpack.c.0.s8 %v2509
    %v2511 = vlaneseq
    %v2512 = vshrl.u32 %v2511, 7
    %v2513 = vsub.s32 %v2510, %v2512
    %v2514 = vrot.slane %v584, %v2513
    %v2516 = vunpack.c.l.s4 269488144
    %v2517 = vunpack.c.0.s8 %v2516
    %v2518 = vlaneseq
    %v2519 = vshrl.u32 %v2518, 7
    %v2520 = vsub.s32 %v2517, %v2519
    %v2521 = vrot.slane %v585, %v2520
    %v2523 = vunpack.c.l.s4 842150450
    %v2524 = vunpack.c.0.s8 %v2523
    %v2525 = vlaneseq
    %v2526 = vshrl.u32 %v2525, 7
    %v2527 = vsub.s32 %v2524, %v2526
    %v2528 = vrot.slane %v585, %v2527
    %v2530 = vunpack.c.l.s4 1414812756
    %v2531 = vunpack.c.0.s8 %v2530
    %v2532 = vlaneseq
    %v2533 = vshrl.u32 %v2532, 7
    %v2534 = vsub.s32 %v2531, %v2533
    %v2535 = vrot.slane %v585, %v2534
    %v2537 = vunpack.c.l.s4 1987475062
    %v2538 = vunpack.c.0.s8 %v2537
    %v2539 = vlaneseq
    %v2540 = vshrl.u32 %v2539, 7
    %v2541 = vsub.s32 %v2538, %v2540
    %v2542 = vrot.slane %v585, %v2541
    %v2544 = vunpack.c.l.s4 269488144
    %v2545 = vunpack.c.0.s8 %v2544
    %v2546 = vlaneseq
    %v2547 = vshrl.u32 %v2546, 7
    %v2548 = vsub.s32 %v2545, %v2547
    %v2549 = vrot.slane %v586, %v2548
    %v2551 = vunpack.c.l.s4 842150450
    %v2552 = vunpack.c.0.s8 %v2551
    %v2553 = vlaneseq
    %v2554 = vshrl.u32 %v2553, 7
    %v2555 = vsub.s32 %v2552, %v2554
    %v2556 = vrot.slane %v586, %v2555
    %v2558 = vunpack.c.l.s4 1414812756
    %v2559 = vunpack.c.0.s8 %v2558
    %v2560 = vlaneseq
    %v2561 = vshrl.u32 %v2560, 7
    %v2562 = vsub.s32 %v2559, %v2561
    %v2563 = vrot.slane %v586, %v2562
    %v2565 = vunpack.c.l.s4 1987475062
    %v2566 = vunpack.c.0.s8 %v2565
    %v2567 = vlaneseq
    %v2568 = vshrl.u32 %v2567, 7
    %v2569 = vsub.s32 %v2566, %v2568
    %v2570 = vrot.slane %v586, %v2569
    %v2572 = vunpack.c.l.s4 269488144
    %v2573 = vunpack.c.0.s8 %v2572
    %v2574 = vlaneseq
    %v2575 = vshrl.u32 %v2574, 7
    %v2576 = vsub.s32 %v2573, %v2575
    %v2577 = vrot.slane %v587, %v2576
    %v2579 = vunpack.c.l.s4 842150450
    %v2580 = vunpack.c.0.s8 %v2579
    %v2581 = vlaneseq
    %v2582 = vshrl.u32 %v2581, 7
    %v2583 = vsub.s32 %v2580, %v2582
    %v2584 = vrot.slane %v587, %v2583
    %v2586 = vunpack.c.l.s4 1414812756
    %v2587 = vunpack.c.0.s8 %v2586
    %v2588 = vlaneseq
    %v2589 = vshrl.u32 %v2588, 7
    %v2590 = vsub.s32 %v2587, %v2589
    %v2591 = vrot.slane %v587, %v2590
    %v2593 = vunpack.c.l.s4 1987475062
    %v2594 = vunpack.c.0.s8 %v2593
    %v2595 = vlaneseq
    %v2596 = vshrl.u32 %v2595, 7
    %v2597 = vsub.s32 %v2594, %v2596
    %v2598 = vrot.slane %v587, %v2597
    %v2600 = vunpack.c.l.s4 269488144
    %v2601 = vunpack.c.0.s8 %v2600
    %v2602 = vlaneseq
    %v2603 = vshrl.u32 %v2602, 7
    %v2604 = vsub.s32 %v2601, %v2603
    %v2605 = vrot.slane %v588, %v2604
    %v2607 = vunpack.c.l.s4 842150450
    %v2608 = vunpack.c.0.s8 %v2607
    %v2609 = vlaneseq
    %v2610 = vshrl.u32 %v2609, 7
    %v2611 = vsub.s32 %v2608, %v2610
    %v2612 = vrot.slane %v588, %v2611
    %v2614 = vunpack.c.l.s4 1414812756
    %v2615 = vunpack.c.0.s8 %v2614
    %v2616 = vlaneseq
    %v2617 = vshrl.u32 %v2616, 7
    %v2618 = vsub.s32 %v2615, %v2617
    %v2619 = vrot.slane %v588, %v2618
    %v2621 = vunpack.c.l.s4 1987475062
    %v2622 = vunpack.c.0.s8 %v2621
    %v2623 = vlaneseq
    %v2624 = vshrl.u32 %v2623, 7
    %v2625 = vsub.s32 %v2622, %v2624
    %v2626 = vrot.slane %v588, %v2625
    %v2628 = vunpack.c.l.s4 269488144
    %v2629 = vunpack.c.0.s8 %v2628
    %v2630 = vlaneseq
    %v2631 = vshrl.u32 %v2630, 7
    %v2632 = vsub.s32 %v2629, %v2631
    %v2633 = vrot.slane %v589, %v2632
    %v2635 = vunpack.c.l.s4 842150450
    %v2636 = vunpack.c.0.s8 %v2635
    %v2637 = vlaneseq
    %v2638 = vshrl.u32 %v2637, 7
    %v2639 = vsub.s32 %v2636, %v2638
    %v2640 = vrot.slane %v589, %v2639
    %v2642 = vunpack.c.l.s4 1414812756
    %v2643 = vunpack.c.0.s8 %v2642
    %v2644 = vlaneseq
    %v2645 = vshrl.u32 %v2644, 7
    %v2646 = vsub.s32 %v2643, %v2645
    %v2647 = vrot.slane %v589, %v2646
    %v2649 = vunpack.c.l.s4 1987475062
    %v2650 = vunpack.c.0.s8 %v2649
    %v2651 = vlaneseq
    %v2652 = vshrl.u32 %v2651, 7
    %v2653 = vsub.s32 %v2650, %v2652
    %v2654 = vrot.slane %v589, %v2653
    %v2656 = vunpack.c.l.s4 269488144
    %v2657 = vunpack.c.0.s8 %v2656
    %v2658 = vlaneseq
    %v2659 = vshrl.u32 %v2658, 7
    %v2660 = vsub.s32 %v2657, %v2659
    %v2661 = vrot.slane %v590, %v2660
    %v2663 = vunpack.c.l.s4 842150450
    %v2664 = vunpack.c.0.s8 %v2663
    %v2665 = vlaneseq
    %v2666 = vshrl.u32 %v2665, 7
    %v2667 = vsub.s32 %v2664, %v2666
    %v2668 = vrot.slane %v590, %v2667
    %v2670 = vunpack.c.l.s4 1414812756
    %v2671 = vunpack.c.0.s8 %v2670
    %v2672 = vlaneseq
    %v2673 = vshrl.u32 %v2672, 7
    %v2674 = vsub.s32 %v2671, %v2673
    %v2675 = vrot.slane %v590, %v2674
    %v2677 = vunpack.c.l.s4 1987475062
    %v2678 = vunpack.c.0.s8 %v2677
    %v2679 = vlaneseq
    %v2680 = vshrl.u32 %v2679, 7
    %v2681 = vsub.s32 %v2678, %v2680
    %v2682 = vrot.slane %v590, %v2681
    %v2684 = vunpack.c.l.s4 269488144
    %v2685 = vunpack.c.0.s8 %v2684
    %v2686 = vlaneseq
    %v2687 = vshrl.u32 %v2686, 7
    %v2688 = vsub.s32 %v2685, %v2687
    %v2689 = vrot.slane %v591, %v2688
    %v2691 = vunpack.c.l.s4 842150450
    %v2692 = vunpack.c.0.s8 %v2691
    %v2693 = vlaneseq
    %v2694 = vshrl.u32 %v2693, 7
    %v2695 = vsub.s32 %v2692, %v2694
    %v2696 = vrot.slane %v591, %v2695
    %v2698 = vunpack.c.l.s4 1414812756
    %v2699 = vunpack.c.0.s8 %v2698
    %v2700 = vlaneseq
    %v2701 = vshrl.u32 %v2700, 7
    %v2702 = vsub.s32 %v2699, %v2701
    %v2703 = vrot.slane %v591, %v2702
    %v2705 = vunpack.c.l.s4 1987475062
    %v2706 = vunpack.c.0.s8 %v2705
    %v2707 = vlaneseq
    %v2708 = vshrl.u32 %v2707, 7
    %v2709 = vsub.s32 %v2706, %v2708
    %v2710 = vrot.slane %v591, %v2709
    %v2712 = vunpack.c.l.s4 269488144
    %v2713 = vunpack.c.0.s8 %v2712
    %v2714 = vlaneseq
    %v2715 = vshrl.u32 %v2714, 7
    %v2716 = vsub.s32 %v2713, %v2715
    %v2717 = vrot.slane %v592, %v2716
    %v2719 = vunpack.c.l.s4 842150450
    %v2720 = vunpack.c.0.s8 %v2719
    %v2721 = vlaneseq
    %v2722 = vshrl.u32 %v2721, 7
    %v2723 = vsub.s32 %v2720, %v2722
    %v2724 = vrot.slane %v592, %v2723
    %v2726 = vunpack.c.l.s4 1414812756
    %v2727 = vunpack.c.0.s8 %v2726
    %v2728 = vlaneseq
    %v2729 = vshrl.u32 %v2728, 7
    %v2730 = vsub.s32 %v2727, %v2729
    %v2731 = vrot.slane %v592, %v2730
    %v2733 = vunpack.c.l.s4 1987475062
    %v2734 = vunpack.c.0.s8 %v2733
    %v2735 = vlaneseq
    %v2736 = vshrl.u32 %v2735, 7
    %v2737 = vsub.s32 %v2734, %v2736
    %v2738 = vrot.slane %v592, %v2737
    %v2740 = vunpack.c.l.s4 269488144
    %v2741 = vunpack.c.0.s8 %v2740
    %v2742 = vlaneseq
    %v2743 = vshrl.u32 %v2742, 7
    %v2744 = vsub.s32 %v2741, %v2743
    %v2745 = vrot.slane %v593, %v2744
    %v2747 = vunpack.c.l.s4 842150450
    %v2748 = vunpack.c.0.s8 %v2747
    %v2749 = vlaneseq
    %v2750 = vshrl.u32 %v2749, 7
    %v2751 = vsub.s32 %v2748, %v2750
    %v2752 = vrot.slane %v593, %v2751
    %v2754 = vunpack.c.l.s4 1414812756
    %v2755 = vunpack.c.0.s8 %v2754
    %v2756 = vlaneseq
    %v2757 = vshrl.u32 %v2756, 7
    %v2758 = vsub.s32 %v2755, %v2757
    %v2759 = vrot.slane %v593, %v2758
    %v2761 = vunpack.c.l.s4 1987475062
    %v2762 = vunpack.c.0.s8 %v2761
    %v2763 = vlaneseq
    %v2764 = vshrl.u32 %v2763, 7
    %v2765 = vsub.s32 %v2762, %v2764
    %v2766 = vrot.slane %v593, %v2765
    %v2768 = vunpack.c.l.s4 269488144
    %v2769 = vunpack.c.0.s8 %v2768
    %v2770 = vlaneseq
    %v2771 = vshrl.u32 %v2770, 7
    %v2772 = vsub.s32 %v2769, %v2771
    %v2773 = vrot.slane %v594, %v2772
    %v2775 = vunpack.c.l.s4 842150450
    %v2776 = vunpack.c.0.s8 %v2775
    %v2777 = vlaneseq
    %v2778 = vshrl.u32 %v2777, 7
    %v2779 = vsub.s32 %v2776, %v2778
    %v2780 = vrot.slane %v594, %v2779
    %v2782 = vunpack.c.l.s4 1414812756
    %v2783 = vunpack.c.0.s8 %v2782
    %v2784 = vlaneseq
    %v2785 = vshrl.u32 %v2784, 7
    %v2786 = vsub.s32 %v2783, %v2785
    %v2787 = vrot.slane %v594, %v2786
    %v2789 = vunpack.c.l.s4 1987475062
    %v2790 = vunpack.c.0.s8 %v2789
    %v2791 = vlaneseq
    %v2792 = vshrl.u32 %v2791, 7
    %v2793 = vsub.s32 %v2790, %v2792
    %v2794 = vrot.slane %v594, %v2793
    %v2796 = vunpack.c.l.s4 269488144
    %v2797 = vunpack.c.0.s8 %v2796
    %v2798 = vlaneseq
    %v2799 = vshrl.u32 %v2798, 7
    %v2800 = vsub.s32 %v2797, %v2799
    %v2801 = vrot.slane %v595, %v2800
    %v2803 = vunpack.c.l.s4 842150450
    %v2804 = vunpack.c.0.s8 %v2803
    %v2805 = vlaneseq
    %v2806 = vshrl.u32 %v2805, 7
    %v2807 = vsub.s32 %v2804, %v2806
    %v2808 = vrot.slane %v595, %v2807
    %v2810 = vunpack.c.l.s4 1414812756
    %v2811 = vunpack.c.0.s8 %v2810
    %v2812 = vlaneseq
    %v2813 = vshrl.u32 %v2812, 7
    %v2814 = vsub.s32 %v2811, %v2813
    %v2815 = vrot.slane %v595, %v2814
    %v2817 = vunpack.c.l.s4 1987475062
    %v2818 = vunpack.c.0.s8 %v2817
    %v2819 = vlaneseq
    %v2820 = vshrl.u32 %v2819, 7
    %v2821 = vsub.s32 %v2818, %v2820
    %v2822 = vrot.slane %v595, %v2821
    %v2824 = vunpack.c.l.s4 269488144
    %v2825 = vunpack.c.0.s8 %v2824
    %v2826 = vlaneseq
    %v2827 = vshrl.u32 %v2826, 7
    %v2828 = vsub.s32 %v2825, %v2827
    %v2829 = vrot.slane %v596, %v2828
    %v2831 = vunpack.c.l.s4 842150450
    %v2832 = vunpack.c.0.s8 %v2831
    %v2833 = vlaneseq
    %v2834 = vshrl.u32 %v2833, 7
    %v2835 = vsub.s32 %v2832, %v2834
    %v2836 = vrot.slane %v596, %v2835
    %v2838 = vunpack.c.l.s4 1414812756
    %v2839 = vunpack.c.0.s8 %v2838
    %v2840 = vlaneseq
    %v2841 = vshrl.u32 %v2840, 7
    %v2842 = vsub.s32 %v2839, %v2841
    %v2843 = vrot.slane %v596, %v2842
    %v2845 = vunpack.c.l.s4 1987475062
    %v2846 = vunpack.c.0.s8 %v2845
    %v2847 = vlaneseq
    %v2848 = vshrl.u32 %v2847, 7
    %v2849 = vsub.s32 %v2846, %v2848
    %v2850 = vrot.slane %v596, %v2849
    %v2852 = vunpack.c.l.s4 269488144
    %v2853 = vunpack.c.0.s8 %v2852
    %v2854 = vlaneseq
    %v2855 = vshrl.u32 %v2854, 7
    %v2856 = vsub.s32 %v2853, %v2855
    %v2857 = vrot.slane %v597, %v2856
    %v2859 = vunpack.c.l.s4 842150450
    %v2860 = vunpack.c.0.s8 %v2859
    %v2861 = vlaneseq
    %v2862 = vshrl.u32 %v2861, 7
    %v2863 = vsub.s32 %v2860, %v2862
    %v2864 = vrot.slane %v597, %v2863
    %v2866 = vunpack.c.l.s4 1414812756
    %v2867 = vunpack.c.0.s8 %v2866
    %v2868 = vlaneseq
    %v2869 = vshrl.u32 %v2868, 7
    %v2870 = vsub.s32 %v2867, %v2869
    %v2871 = vrot.slane %v597, %v2870
    %v2873 = vunpack.c.l.s4 1987475062
    %v2874 = vunpack.c.0.s8 %v2873
    %v2875 = vlaneseq
    %v2876 = vshrl.u32 %v2875, 7
    %v2877 = vsub.s32 %v2874, %v2876
    %v2878 = vrot.slane %v597, %v2877
    %v2880 = vunpack.c.l.s4 269488144
    %v2881 = vunpack.c.0.s8 %v2880
    %v2882 = vlaneseq
    %v2883 = vshrl.u32 %v2882, 7
    %v2884 = vsub.s32 %v2881, %v2883
    %v2885 = vrot.slane %v598, %v2884
    %v2887 = vunpack.c.l.s4 842150450
    %v2888 = vunpack.c.0.s8 %v2887
    %v2889 = vlaneseq
    %v2890 = vshrl.u32 %v2889, 7
    %v2891 = vsub.s32 %v2888, %v2890
    %v2892 = vrot.slane %v598, %v2891
    %v2894 = vunpack.c.l.s4 1414812756
    %v2895 = vunpack.c.0.s8 %v2894
    %v2896 = vlaneseq
    %v2897 = vshrl.u32 %v2896, 7
    %v2898 = vsub.s32 %v2895, %v2897
    %v2899 = vrot.slane %v598, %v2898
    %v2901 = vunpack.c.l.s4 1987475062
    %v2902 = vunpack.c.0.s8 %v2901
    %v2903 = vlaneseq
    %v2904 = vshrl.u32 %v2903, 7
    %v2905 = vsub.s32 %v2902, %v2904
    %v2906 = vrot.slane %v598, %v2905
    %v2908 = vunpack.c.l.s4 269488144
    %v2909 = vunpack.c.0.s8 %v2908
    %v2910 = vlaneseq
    %v2911 = vshrl.u32 %v2910, 7
    %v2912 = vsub.s32 %v2909, %v2911
    %v2913 = vrot.slane %v599, %v2912
    %v2915 = vunpack.c.l.s4 842150450
    %v2916 = vunpack.c.0.s8 %v2915
    %v2917 = vlaneseq
    %v2918 = vshrl.u32 %v2917, 7
    %v2919 = vsub.s32 %v2916, %v2918
    %v2920 = vrot.slane %v599, %v2919
    %v2922 = vunpack.c.l.s4 1414812756
    %v2923 = vunpack.c.0.s8 %v2922
    %v2924 = vlaneseq
    %v2925 = vshrl.u32 %v2924, 7
    %v2926 = vsub.s32 %v2923, %v2925
    %v2927 = vrot.slane %v599, %v2926
    %v2929 = vunpack.c.l.s4 1987475062
    %v2930 = vunpack.c.0.s8 %v2929
    %v2931 = vlaneseq
    %v2932 = vshrl.u32 %v2931, 7
    %v2933 = vsub.s32 %v2930, %v2932
    %v2934 = vrot.slane %v599, %v2933
    %v2936 = vunpack.c.l.s4 269488144
    %v2937 = vunpack.c.0.s8 %v2936
    %v2938 = vlaneseq
    %v2939 = vshrl.u32 %v2938, 7
    %v2940 = vsub.s32 %v2937, %v2939
    %v2941 = vrot.slane %v600, %v2940
    %v2943 = vunpack.c.l.s4 842150450
    %v2944 = vunpack.c.0.s8 %v2943
    %v2945 = vlaneseq
    %v2946 = vshrl.u32 %v2945, 7
    %v2947 = vsub.s32 %v2944, %v2946
    %v2948 = vrot.slane %v600, %v2947
    %v2950 = vunpack.c.l.s4 1414812756
    %v2951 = vunpack.c.0.s8 %v2950
    %v2952 = vlaneseq
    %v2953 = vshrl.u32 %v2952, 7
    %v2954 = vsub.s32 %v2951, %v2953
    %v2955 = vrot.slane %v600, %v2954
    %v2957 = vunpack.c.l.s4 1987475062
    %v2958 = vunpack.c.0.s8 %v2957
    %v2959 = vlaneseq
    %v2960 = vshrl.u32 %v2959, 7
    %v2961 = vsub.s32 %v2958, %v2960
    %v2962 = vrot.slane %v600, %v2961
    %v2964 = vunpack.c.l.s4 269488144
    %v2965 = vunpack.c.0.s8 %v2964
    %v2966 = vlaneseq
    %v2967 = vshrl.u32 %v2966, 7
    %v2968 = vsub.s32 %v2965, %v2967
    %v2969 = vrot.slane %v601, %v2968
    %v2971 = vunpack.c.l.s4 842150450
    %v2972 = vunpack.c.0.s8 %v2971
    %v2973 = vlaneseq
    %v2974 = vshrl.u32 %v2973, 7
    %v2975 = vsub.s32 %v2972, %v2974
    %v2976 = vrot.slane %v601, %v2975
    %v2978 = vunpack.c.l.s4 1414812756
    %v2979 = vunpack.c.0.s8 %v2978
    %v2980 = vlaneseq
    %v2981 = vshrl.u32 %v2980, 7
    %v2982 = vsub.s32 %v2979, %v2981
    %v2983 = vrot.slane %v601, %v2982
    %v2985 = vunpack.c.l.s4 1987475062
    %v2986 = vunpack.c.0.s8 %v2985
    %v2987 = vlaneseq
    %v2988 = vshrl.u32 %v2987, 7
    %v2989 = vsub.s32 %v2986, %v2988
    %v2990 = vrot.slane %v601, %v2989
    %v2992 = vunpack.c.l.s4 269488144
    %v2993 = vunpack.c.0.s8 %v2992
    %v2994 = vlaneseq
    %v2995 = vshrl.u32 %v2994, 7
    %v2996 = vsub.s32 %v2993, %v2995
    %v2997 = vrot.slane %v602, %v2996
    %v2999 = vunpack.c.l.s4 842150450
    %v3000 = vunpack.c.0.s8 %v2999
    %v3001 = vlaneseq
    %v3002 = vshrl.u32 %v3001, 7
    %v3003 = vsub.s32 %v3000, %v3002
    %v3004 = vrot.slane %v602, %v3003
    %v3006 = vunpack.c.l.s4 1414812756
    %v3007 = vunpack.c.0.s8 %v3006
    %v3008 = vlaneseq
    %v3009 = vshrl.u32 %v3008, 7
    %v3010 = vsub.s32 %v3007, %v3009
    %v3011 = vrot.slane %v602, %v3010
    %v3013 = vunpack.c.l.s4 1987475062
    %v3014 = vunpack.c.0.s8 %v3013
    %v3015 = vlaneseq
    %v3016 = vshrl.u32 %v3015, 7
    %v3017 = vsub.s32 %v3014, %v3016
    %v3018 = vrot.slane %v602, %v3017
    %v3020 = vunpack.c.l.s4 269488144
    %v3021 = vunpack.c.0.s8 %v3020
    %v3022 = vlaneseq
    %v3023 = vshrl.u32 %v3022, 7
    %v3024 = vsub.s32 %v3021, %v3023
    %v3025 = vrot.slane %v603, %v3024
    %v3027 = vunpack.c.l.s4 842150450
    %v3028 = vunpack.c.0.s8 %v3027
    %v3029 = vlaneseq
    %v3030 = vshrl.u32 %v3029, 7
    %v3031 = vsub.s32 %v3028, %v3030
    %v3032 = vrot.slane %v603, %v3031
    %v3034 = vunpack.c.l.s4 1414812756
    %v3035 = vunpack.c.0.s8 %v3034
    %v3036 = vlaneseq
    %v3037 = vshrl.u32 %v3036, 7
    %v3038 = vsub.s32 %v3035, %v3037
    %v3039 = vrot.slane %v603, %v3038
    %v3041 = vunpack.c.l.s4 1987475062
    %v3042 = vunpack.c.0.s8 %v3041
    %v3043 = vlaneseq
    %v3044 = vshrl.u32 %v3043, 7
    %v3045 = vsub.s32 %v3042, %v3044
    %v3046 = vrot.slane %v603, %v3045
    %v3048 = vunpack.c.l.s4 269488144
    %v3049 = vunpack.c.0.s8 %v3048
    %v3050 = vlaneseq
    %v3051 = vshrl.u32 %v3050, 7
    %v3052 = vsub.s32 %v3049, %v3051
    %v3053 = vrot.slane %v604, %v3052
    %v3055 = vunpack.c.l.s4 842150450
    %v3056 = vunpack.c.0.s8 %v3055
    %v3057 = vlaneseq
    %v3058 = vshrl.u32 %v3057, 7
    %v3059 = vsub.s32 %v3056, %v3058
    %v3060 = vrot.slane %v604, %v3059
    %v3062 = vunpack.c.l.s4 1414812756
    %v3063 = vunpack.c.0.s8 %v3062
    %v3064 = vlaneseq
    %v3065 = vshrl.u32 %v3064, 7
    %v3066 = vsub.s32 %v3063, %v3065
    %v3067 = vrot.slane %v604, %v3066
    %v3069 = vunpack.c.l.s4 1987475062
    %v3070 = vunpack.c.0.s8 %v3069
    %v3071 = vlaneseq
    %v3072 = vshrl.u32 %v3071, 7
    %v3073 = vsub.s32 %v3070, %v3072
    %v3074 = vrot.slane %v604, %v3073
    %v3076 = vunpack.c.l.s4 269488144
    %v3077 = vunpack.c.0.s8 %v3076
    %v3078 = vlaneseq
    %v3079 = vshrl.u32 %v3078, 7
    %v3080 = vsub.s32 %v3077, %v3079
    %v3081 = vrot.slane %v605, %v3080
    %v3083 = vunpack.c.l.s4 842150450
    %v3084 = vunpack.c.0.s8 %v3083
    %v3085 = vlaneseq
    %v3086 = vshrl.u32 %v3085, 7
    %v3087 = vsub.s32 %v3084, %v3086
    %v3088 = vrot.slane %v605, %v3087
    %v3090 = vunpack.c.l.s4 1414812756
    %v3091 = vunpack.c.0.s8 %v3090
    %v3092 = vlaneseq
    %v3093 = vshrl.u32 %v3092, 7
    %v3094 = vsub.s32 %v3091, %v3093
    %v3095 = vrot.slane %v605, %v3094
    %v3097 = vunpack.c.l.s4 1987475062
    %v3098 = vunpack.c.0.s8 %v3097
    %v3099 = vlaneseq
    %v3100 = vshrl.u32 %v3099, 7
    %v3101 = vsub.s32 %v3098, %v3100
    %v3102 = vrot.slane %v605, %v3101
    %v3104 = vunpack.c.l.s4 269488144
    %v3105 = vunpack.c.0.s8 %v3104
    %v3106 = vlaneseq
    %v3107 = vshrl.u32 %v3106, 7
    %v3108 = vsub.s32 %v3105, %v3107
    %v3109 = vrot.slane %v606, %v3108
    %v3111 = vunpack.c.l.s4 842150450
    %v3112 = vunpack.c.0.s8 %v3111
    %v3113 = vlaneseq
    %v3114 = vshrl.u32 %v3113, 7
    %v3115 = vsub.s32 %v3112, %v3114
    %v3116 = vrot.slane %v606, %v3115
    %v3118 = vunpack.c.l.s4 1414812756
    %v3119 = vunpack.c.0.s8 %v3118
    %v3120 = vlaneseq
    %v3121 = vshrl.u32 %v3120, 7
    %v3122 = vsub.s32 %v3119, %v3121
    %v3123 = vrot.slane %v606, %v3122
    %v3125 = vunpack.c.l.s4 1987475062
    %v3126 = vunpack.c.0.s8 %v3125
    %v3127 = vlaneseq
    %v3128 = vshrl.u32 %v3127, 7
    %v3129 = vsub.s32 %v3126, %v3128
    %v3130 = vrot.slane %v606, %v3129
    %v3132 = vunpack.c.l.s4 269488144
    %v3133 = vunpack.c.0.s8 %v3132
    %v3134 = vlaneseq
    %v3135 = vshrl.u32 %v3134, 7
    %v3136 = vsub.s32 %v3133, %v3135
    %v3137 = vrot.slane %v607, %v3136
    %v3139 = vunpack.c.l.s4 842150450
    %v3140 = vunpack.c.0.s8 %v3139
    %v3141 = vlaneseq
    %v3142 = vshrl.u32 %v3141, 7
    %v3143 = vsub.s32 %v3140, %v3142
    %v3144 = vrot.slane %v607, %v3143
    %v3146 = vunpack.c.l.s4 1414812756
    %v3147 = vunpack.c.0.s8 %v3146
    %v3148 = vlaneseq
    %v3149 = vshrl.u32 %v3148, 7
    %v3150 = vsub.s32 %v3147, %v3149
    %v3151 = vrot.slane %v607, %v3150
    %v3153 = vunpack.c.l.s4 1987475062
    %v3154 = vunpack.c.0.s8 %v3153
    %v3155 = vlaneseq
    %v3156 = vshrl.u32 %v3155, 7
    %v3157 = vsub.s32 %v3154, %v3156
    %v3158 = vrot.slane %v607, %v3157
    %v3160 = vunpack.c.l.s4 269488144
    %v3161 = vunpack.c.0.s8 %v3160
    %v3162 = vlaneseq
    %v3163 = vshrl.u32 %v3162, 7
    %v3164 = vsub.s32 %v3161, %v3163
    %v3165 = vrot.slane %v608, %v3164
    %v3167 = vunpack.c.l.s4 842150450
    %v3168 = vunpack.c.0.s8 %v3167
    %v3169 = vlaneseq
    %v3170 = vshrl.u32 %v3169, 7
    %v3171 = vsub.s32 %v3168, %v3170
    %v3172 = vrot.slane %v608, %v3171
    %v3174 = vunpack.c.l.s4 1414812756
    %v3175 = vunpack.c.0.s8 %v3174
    %v3176 = vlaneseq
    %v3177 = vshrl.u32 %v3176, 7
    %v3178 = vsub.s32 %v3175, %v3177
    %v3179 = vrot.slane %v608, %v3178
    %v3181 = vunpack.c.l.s4 1987475062
    %v3182 = vunpack.c.0.s8 %v3181
    %v3183 = vlaneseq
    %v3184 = vshrl.u32 %v3183, 7
    %v3185 = vsub.s32 %v3182, %v3184
    %v3186 = vrot.slane %v608, %v3185
    %v3188 = vunpack.c.l.s4 269488144
    %v3189 = vunpack.c.0.s8 %v3188
    %v3190 = vlaneseq
    %v3191 = vshrl.u32 %v3190, 7
    %v3192 = vsub.s32 %v3189, %v3191
    %v3193 = vrot.slane %v609, %v3192
    %v3195 = vunpack.c.l.s4 842150450
    %v3196 = vunpack.c.0.s8 %v3195
    %v3197 = vlaneseq
    %v3198 = vshrl.u32 %v3197, 7
    %v3199 = vsub.s32 %v3196, %v3198
    %v3200 = vrot.slane %v609, %v3199
    %v3202 = vunpack.c.l.s4 1414812756
    %v3203 = vunpack.c.0.s8 %v3202
    %v3204 = vlaneseq
    %v3205 = vshrl.u32 %v3204, 7
    %v3206 = vsub.s32 %v3203, %v3205
    %v3207 = vrot.slane %v609, %v3206
    %v3209 = vunpack.c.l.s4 1987475062
    %v3210 = vunpack.c.0.s8 %v3209
    %v3211 = vlaneseq
    %v3212 = vshrl.u32 %v3211, 7
    %v3213 = vsub.s32 %v3210, %v3212
    %v3214 = vrot.slane %v609, %v3213
    %v3216 = vunpack.c.l.s4 269488144
    %v3217 = vunpack.c.0.s8 %v3216
    %v3218 = vlaneseq
    %v3219 = vshrl.u32 %v3218, 7
    %v3220 = vsub.s32 %v3217, %v3219
    %v3221 = vrot.slane %v610, %v3220
    %v3223 = vunpack.c.l.s4 842150450
    %v3224 = vunpack.c.0.s8 %v3223
    %v3225 = vlaneseq
    %v3226 = vshrl.u32 %v3225, 7
    %v3227 = vsub.s32 %v3224, %v3226
    %v3228 = vrot.slane %v610, %v3227
    %v3230 = vunpack.c.l.s4 1414812756
    %v3231 = vunpack.c.0.s8 %v3230
    %v3232 = vlaneseq
    %v3233 = vshrl.u32 %v3232, 7
    %v3234 = vsub.s32 %v3231, %v3233
    %v3235 = vrot.slane %v610, %v3234
    %v3237 = vunpack.c.l.s4 1987475062
    %v3238 = vunpack.c.0.s8 %v3237
    %v3239 = vlaneseq
    %v3240 = vshrl.u32 %v3239, 7
    %v3241 = vsub.s32 %v3238, %v3240
    %v3242 = vrot.slane %v610, %v3241
    %v3244 = vunpack.c.l.s4 269488144
    %v3245 = vunpack.c.0.s8 %v3244
    %v3246 = vlaneseq
    %v3247 = vshrl.u32 %v3246, 7
    %v3248 = vsub.s32 %v3245, %v3247
    %v3249 = vrot.slane %v611, %v3248
    %v3251 = vunpack.c.l.s4 842150450
    %v3252 = vunpack.c.0.s8 %v3251
    %v3253 = vlaneseq
    %v3254 = vshrl.u32 %v3253, 7
    %v3255 = vsub.s32 %v3252, %v3254
    %v3256 = vrot.slane %v611, %v3255
    %v3258 = vunpack.c.l.s4 1414812756
    %v3259 = vunpack.c.0.s8 %v3258
    %v3260 = vlaneseq
    %v3261 = vshrl.u32 %v3260, 7
    %v3262 = vsub.s32 %v3259, %v3261
    %v3263 = vrot.slane %v611, %v3262
    %v3265 = vunpack.c.l.s4 1987475062
    %v3266 = vunpack.c.0.s8 %v3265
    %v3267 = vlaneseq
    %v3268 = vshrl.u32 %v3267, 7
    %v3269 = vsub.s32 %v3266, %v3268
    %v3270 = vrot.slane %v611, %v3269
    %v3272 = vunpack.c.l.s4 269488144
    %v3273 = vunpack.c.0.s8 %v3272
    %v3274 = vlaneseq
    %v3275 = vshrl.u32 %v3274, 7
    %v3276 = vsub.s32 %v3273, %v3275
    %v3277 = vrot.slane %v612, %v3276
    %v3279 = vunpack.c.l.s4 842150450
    %v3280 = vunpack.c.0.s8 %v3279
    %v3281 = vlaneseq
    %v3282 = vshrl.u32 %v3281, 7
    %v3283 = vsub.s32 %v3280, %v3282
    %v3284 = vrot.slane %v612, %v3283
    %v3286 = vunpack.c.l.s4 1414812756
    %v3287 = vunpack.c.0.s8 %v3286
    %v3288 = vlaneseq
    %v3289 = vshrl.u32 %v3288, 7
    %v3290 = vsub.s32 %v3287, %v3289
    %v3291 = vrot.slane %v612, %v3290
    %v3293 = vunpack.c.l.s4 1987475062
    %v3294 = vunpack.c.0.s8 %v3293
    %v3295 = vlaneseq
    %v3296 = vshrl.u32 %v3295, 7
    %v3297 = vsub.s32 %v3294, %v3296
    %v3298 = vrot.slane %v612, %v3297
    %v3300 = vunpack.c.l.s4 269488144
    %v3301 = vunpack.c.0.s8 %v3300
    %v3302 = vlaneseq
    %v3303 = vshrl.u32 %v3302, 7
    %v3304 = vsub.s32 %v3301, %v3303
    %v3305 = vrot.slane %v613, %v3304
    %v3307 = vunpack.c.l.s4 842150450
    %v3308 = vunpack.c.0.s8 %v3307
    %v3309 = vlaneseq
    %v3310 = vshrl.u32 %v3309, 7
    %v3311 = vsub.s32 %v3308, %v3310
    %v3312 = vrot.slane %v613, %v3311
    %v3314 = vunpack.c.l.s4 1414812756
    %v3315 = vunpack.c.0.s8 %v3314
    %v3316 = vlaneseq
    %v3317 = vshrl.u32 %v3316, 7
    %v3318 = vsub.s32 %v3315, %v3317
    %v3319 = vrot.slane %v613, %v3318
    %v3321 = vunpack.c.l.s4 1987475062
    %v3322 = vunpack.c.0.s8 %v3321
    %v3323 = vlaneseq
    %v3324 = vshrl.u32 %v3323, 7
    %v3325 = vsub.s32 %v3322, %v3324
    %v3326 = vrot.slane %v613, %v3325
    %v3328 = vunpack.c.l.s4 269488144
    %v3329 = vunpack.c.0.s8 %v3328
    %v3330 = vlaneseq
    %v3331 = vshrl.u32 %v3330, 7
    %v3332 = vsub.s32 %v3329, %v3331
    %v3333 = vrot.slane %v614, %v3332
    %v3335 = vunpack.c.l.s4 842150450
    %v3336 = vunpack.c.0.s8 %v3335
    %v3337 = vlaneseq
    %v3338 = vshrl.u32 %v3337, 7
    %v3339 = vsub.s32 %v3336, %v3338
    %v3340 = vrot.slane %v614, %v3339
    %v3342 = vunpack.c.l.s4 1414812756
    %v3343 = vunpack.c.0.s8 %v3342
    %v3344 = vlaneseq
    %v3345 = vshrl.u32 %v3344, 7
    %v3346 = vsub.s32 %v3343, %v3345
    %v3347 = vrot.slane %v614, %v3346
    %v3349 = vunpack.c.l.s4 1987475062
    %v3350 = vunpack.c.0.s8 %v3349
    %v3351 = vlaneseq
    %v3352 = vshrl.u32 %v3351, 7
    %v3353 = vsub.s32 %v3350, %v3352
    %v3354 = vrot.slane %v614, %v3353
    %v3356 = vunpack.c.l.s4 269488144
    %v3357 = vunpack.c.0.s8 %v3356
    %v3358 = vlaneseq
    %v3359 = vshrl.u32 %v3358, 7
    %v3360 = vsub.s32 %v3357, %v3359
    %v3361 = vrot.slane %v615, %v3360
    %v3363 = vunpack.c.l.s4 842150450
    %v3364 = vunpack.c.0.s8 %v3363
    %v3365 = vlaneseq
    %v3366 = vshrl.u32 %v3365, 7
    %v3367 = vsub.s32 %v3364, %v3366
    %v3368 = vrot.slane %v615, %v3367
    %v3370 = vunpack.c.l.s4 1414812756
    %v3371 = vunpack.c.0.s8 %v3370
    %v3372 = vlaneseq
    %v3373 = vshrl.u32 %v3372, 7
    %v3374 = vsub.s32 %v3371, %v3373
    %v3375 = vrot.slane %v615, %v3374
    %v3377 = vunpack.c.l.s4 1987475062
    %v3378 = vunpack.c.0.s8 %v3377
    %v3379 = vlaneseq
    %v3380 = vshrl.u32 %v3379, 7
    %v3381 = vsub.s32 %v3378, %v3380
    %v3382 = vrot.slane %v615, %v3381
    %v3384 = vunpack.c.l.s4 269488144
    %v3385 = vunpack.c.0.s8 %v3384
    %v3386 = vlaneseq
    %v3387 = vshrl.u32 %v3386, 7
    %v3388 = vsub.s32 %v3385, %v3387
    %v3389 = vrot.slane %v616, %v3388
    %v3391 = vunpack.c.l.s4 842150450
    %v3392 = vunpack.c.0.s8 %v3391
    %v3393 = vlaneseq
    %v3394 = vshrl.u32 %v3393, 7
    %v3395 = vsub.s32 %v3392, %v3394
    %v3396 = vrot.slane %v616, %v3395
    %v3398 = vunpack.c.l.s4 1414812756
    %v3399 = vunpack.c.0.s8 %v3398
    %v3400 = vlaneseq
    %v3401 = vshrl.u32 %v3400, 7
    %v3402 = vsub.s32 %v3399, %v3401
    %v3403 = vrot.slane %v616, %v3402
    %v3405 = vunpack.c.l.s4 1987475062
    %v3406 = vunpack.c.0.s8 %v3405
    %v3407 = vlaneseq
    %v3408 = vshrl.u32 %v3407, 7
    %v3409 = vsub.s32 %v3406, %v3408
    %v3410 = vrot.slane %v616, %v3409
    %v3412 = vunpack.c.l.s4 269488144
    %v3413 = vunpack.c.0.s8 %v3412
    %v3414 = vlaneseq
    %v3415 = vshrl.u32 %v3414, 7
    %v3416 = vsub.s32 %v3413, %v3415
    %v3417 = vrot.slane %v617, %v3416
    %v3419 = vunpack.c.l.s4 842150450
    %v3420 = vunpack.c.0.s8 %v3419
    %v3421 = vlaneseq
    %v3422 = vshrl.u32 %v3421, 7
    %v3423 = vsub.s32 %v3420, %v3422
    %v3424 = vrot.slane %v617, %v3423
    %v3426 = vunpack.c.l.s4 1414812756
    %v3427 = vunpack.c.0.s8 %v3426
    %v3428 = vlaneseq
    %v3429 = vshrl.u32 %v3428, 7
    %v3430 = vsub.s32 %v3427, %v3429
    %v3431 = vrot.slane %v617, %v3430
    %v3433 = vunpack.c.l.s4 1987475062
    %v3434 = vunpack.c.0.s8 %v3433
    %v3435 = vlaneseq
    %v3436 = vshrl.u32 %v3435, 7
    %v3437 = vsub.s32 %v3434, %v3436
    %v3438 = vrot.slane %v617, %v3437
    %v3440 = vunpack.c.l.s4 269488144
    %v3441 = vunpack.c.0.s8 %v3440
    %v3442 = vlaneseq
    %v3443 = vshrl.u32 %v3442, 7
    %v3444 = vsub.s32 %v3441, %v3443
    %v3445 = vrot.slane %v618, %v3444
    %v3447 = vunpack.c.l.s4 842150450
    %v3448 = vunpack.c.0.s8 %v3447
    %v3449 = vlaneseq
    %v3450 = vshrl.u32 %v3449, 7
    %v3451 = vsub.s32 %v3448, %v3450
    %v3452 = vrot.slane %v618, %v3451
    %v3454 = vunpack.c.l.s4 1414812756
    %v3455 = vunpack.c.0.s8 %v3454
    %v3456 = vlaneseq
    %v3457 = vshrl.u32 %v3456, 7
    %v3458 = vsub.s32 %v3455, %v3457
    %v3459 = vrot.slane %v618, %v3458
    %v3461 = vunpack.c.l.s4 1987475062
    %v3462 = vunpack.c.0.s8 %v3461
    %v3463 = vlaneseq
    %v3464 = vshrl.u32 %v3463, 7
    %v3465 = vsub.s32 %v3462, %v3464
    %v3466 = vrot.slane %v618, %v3465
    %v3468 = vunpack.c.l.s4 269488144
    %v3469 = vunpack.c.0.s8 %v3468
    %v3470 = vlaneseq
    %v3471 = vshrl.u32 %v3470, 7
    %v3472 = vsub.s32 %v3469, %v3471
    %v3473 = vrot.slane %v619, %v3472
    %v3475 = vunpack.c.l.s4 842150450
    %v3476 = vunpack.c.0.s8 %v3475
    %v3477 = vlaneseq
    %v3478 = vshrl.u32 %v3477, 7
    %v3479 = vsub.s32 %v3476, %v3478
    %v3480 = vrot.slane %v619, %v3479
    %v3482 = vunpack.c.l.s4 1414812756
    %v3483 = vunpack.c.0.s8 %v3482
    %v3484 = vlaneseq
    %v3485 = vshrl.u32 %v3484, 7
    %v3486 = vsub.s32 %v3483, %v3485
    %v3487 = vrot.slane %v619, %v3486
    %v3489 = vunpack.c.l.s4 1987475062
    %v3490 = vunpack.c.0.s8 %v3489
    %v3491 = vlaneseq
    %v3492 = vshrl.u32 %v3491, 7
    %v3493 = vsub.s32 %v3490, %v3492
    %v3494 = vrot.slane %v619, %v3493
    %v3496 = vunpack.c.l.s4 269488144
    %v3497 = vunpack.c.0.s8 %v3496
    %v3498 = vlaneseq
    %v3499 = vshrl.u32 %v3498, 7
    %v3500 = vsub.s32 %v3497, %v3499
    %v3501 = vrot.slane %v620, %v3500
    %v3503 = vunpack.c.l.s4 842150450
    %v3504 = vunpack.c.0.s8 %v3503
    %v3505 = vlaneseq
    %v3506 = vshrl.u32 %v3505, 7
    %v3507 = vsub.s32 %v3504, %v3506
    %v3508 = vrot.slane %v620, %v3507
    %v3510 = vunpack.c.l.s4 1414812756
    %v3511 = vunpack.c.0.s8 %v3510
    %v3512 = vlaneseq
    %v3513 = vshrl.u32 %v3512, 7
    %v3514 = vsub.s32 %v3511, %v3513
    %v3515 = vrot.slane %v620, %v3514
    %v3517 = vunpack.c.l.s4 1987475062
    %v3518 = vunpack.c.0.s8 %v3517
    %v3519 = vlaneseq
    %v3520 = vshrl.u32 %v3519, 7
    %v3521 = vsub.s32 %v3518, %v3520
    %v3522 = vrot.slane %v620, %v3521
    %v3524 = vunpack.c.l.s4 269488144
    %v3525 = vunpack.c.0.s8 %v3524
    %v3526 = vlaneseq
    %v3527 = vshrl.u32 %v3526, 7
    %v3528 = vsub.s32 %v3525, %v3527
    %v3529 = vrot.slane %v621, %v3528
    %v3531 = vunpack.c.l.s4 842150450
    %v3532 = vunpack.c.0.s8 %v3531
    %v3533 = vlaneseq
    %v3534 = vshrl.u32 %v3533, 7
    %v3535 = vsub.s32 %v3532, %v3534
    %v3536 = vrot.slane %v621, %v3535
    %v3538 = vunpack.c.l.s4 1414812756
    %v3539 = vunpack.c.0.s8 %v3538
    %v3540 = vlaneseq
    %v3541 = vshrl.u32 %v3540, 7
    %v3542 = vsub.s32 %v3539, %v3541
    %v3543 = vrot.slane %v621, %v3542
    %v3545 = vunpack.c.l.s4 1987475062
    %v3546 = vunpack.c.0.s8 %v3545
    %v3547 = vlaneseq
    %v3548 = vshrl.u32 %v3547, 7
    %v3549 = vsub.s32 %v3546, %v3548
    %v3550 = vrot.slane %v621, %v3549
    %v3552 = vunpack.c.l.s4 269488144
    %v3553 = vunpack.c.0.s8 %v3552
    %v3554 = vlaneseq
    %v3555 = vshrl.u32 %v3554, 7
    %v3556 = vsub.s32 %v3553, %v3555
    %v3557 = vrot.slane %v622, %v3556
    %v3559 = vunpack.c.l.s4 842150450
    %v3560 = vunpack.c.0.s8 %v3559
    %v3561 = vlaneseq
    %v3562 = vshrl.u32 %v3561, 7
    %v3563 = vsub.s32 %v3560, %v3562
    %v3564 = vrot.slane %v622, %v3563
    %v3566 = vunpack.c.l.s4 1414812756
    %v3567 = vunpack.c.0.s8 %v3566
    %v3568 = vlaneseq
    %v3569 = vshrl.u32 %v3568, 7
    %v3570 = vsub.s32 %v3567, %v3569
    %v3571 = vrot.slane %v622, %v3570
    %v3573 = vunpack.c.l.s4 1987475062
    %v3574 = vunpack.c.0.s8 %v3573
    %v3575 = vlaneseq
    %v3576 = vshrl.u32 %v3575, 7
    %v3577 = vsub.s32 %v3574, %v3576
    %v3578 = vrot.slane %v622, %v3577
    %v3580 = vunpack.c.l.s4 269488144
    %v3581 = vunpack.c.0.s8 %v3580
    %v3582 = vlaneseq
    %v3583 = vshrl.u32 %v3582, 7
    %v3584 = vsub.s32 %v3581, %v3583
    %v3585 = vrot.slane %v623, %v3584
    %v3587 = vunpack.c.l.s4 842150450
    %v3588 = vunpack.c.0.s8 %v3587
    %v3589 = vlaneseq
    %v3590 = vshrl.u32 %v3589, 7
    %v3591 = vsub.s32 %v3588, %v3590
    %v3592 = vrot.slane %v623, %v3591
    %v3594 = vunpack.c.l.s4 1414812756
    %v3595 = vunpack.c.0.s8 %v3594
    %v3596 = vlaneseq
    %v3597 = vshrl.u32 %v3596, 7
    %v3598 = vsub.s32 %v3595, %v3597
    %v3599 = vrot.slane %v623, %v3598
    %v3601 = vunpack.c.l.s4 1987475062
    %v3602 = vunpack.c.0.s8 %v3601
    %v3603 = vlaneseq
    %v3604 = vshrl.u32 %v3603, 7
    %v3605 = vsub.s32 %v3602, %v3604
    %v3606 = vrot.slane %v623, %v3605
    %v3608 = vunpack.c.l.s4 269488144
    %v3609 = vunpack.c.0.s8 %v3608
    %v3610 = vlaneseq
    %v3611 = vshrl.u32 %v3610, 7
    %v3612 = vsub.s32 %v3609, %v3611
    %v3613 = vrot.slane %v624, %v3612
    %v3615 = vunpack.c.l.s4 842150450
    %v3616 = vunpack.c.0.s8 %v3615
    %v3617 = vlaneseq
    %v3618 = vshrl.u32 %v3617, 7
    %v3619 = vsub.s32 %v3616, %v3618
    %v3620 = vrot.slane %v624, %v3619
    %v3622 = vunpack.c.l.s4 1414812756
    %v3623 = vunpack.c.0.s8 %v3622
    %v3624 = vlaneseq
    %v3625 = vshrl.u32 %v3624, 7
    %v3626 = vsub.s32 %v3623, %v3625
    %v3627 = vrot.slane %v624, %v3626
    %v3629 = vunpack.c.l.s4 1987475062
    %v3630 = vunpack.c.0.s8 %v3629
    %v3631 = vlaneseq
    %v3632 = vshrl.u32 %v3631, 7
    %v3633 = vsub.s32 %v3630, %v3632
    %v3634 = vrot.slane %v624, %v3633
    %v3636 = vunpack.c.l.s4 269488144
    %v3637 = vunpack.c.0.s8 %v3636
    %v3638 = vlaneseq
    %v3639 = vshrl.u32 %v3638, 7
    %v3640 = vsub.s32 %v3637, %v3639
    %v3641 = vrot.slane %v625, %v3640
    %v3643 = vunpack.c.l.s4 842150450
    %v3644 = vunpack.c.0.s8 %v3643
    %v3645 = vlaneseq
    %v3646 = vshrl.u32 %v3645, 7
    %v3647 = vsub.s32 %v3644, %v3646
    %v3648 = vrot.slane %v625, %v3647
    %v3650 = vunpack.c.l.s4 1414812756
    %v3651 = vunpack.c.0.s8 %v3650
    %v3652 = vlaneseq
    %v3653 = vshrl.u32 %v3652, 7
    %v3654 = vsub.s32 %v3651, %v3653
    %v3655 = vrot.slane %v625, %v3654
    %v3657 = vunpack.c.l.s4 1987475062
    %v3658 = vunpack.c.0.s8 %v3657
    %v3659 = vlaneseq
    %v3660 = vshrl.u32 %v3659, 7
    %v3661 = vsub.s32 %v3658, %v3660
    %v3662 = vrot.slane %v625, %v3661
    %v3664 = vunpack.c.l.s4 269488144
    %v3665 = vunpack.c.0.s8 %v3664
    %v3666 = vlaneseq
    %v3667 = vshrl.u32 %v3666, 7
    %v3668 = vsub.s32 %v3665, %v3667
    %v3669 = vrot.slane %v626, %v3668
    %v3671 = vunpack.c.l.s4 842150450
    %v3672 = vunpack.c.0.s8 %v3671
    %v3673 = vlaneseq
    %v3674 = vshrl.u32 %v3673, 7
    %v3675 = vsub.s32 %v3672, %v3674
    %v3676 = vrot.slane %v626, %v3675
    %v3678 = vunpack.c.l.s4 1414812756
    %v3679 = vunpack.c.0.s8 %v3678
    %v3680 = vlaneseq
    %v3681 = vshrl.u32 %v3680, 7
    %v3682 = vsub.s32 %v3679, %v3681
    %v3683 = vrot.slane %v626, %v3682
    %v3685 = vunpack.c.l.s4 1987475062
    %v3686 = vunpack.c.0.s8 %v3685
    %v3687 = vlaneseq
    %v3688 = vshrl.u32 %v3687, 7
    %v3689 = vsub.s32 %v3686, %v3688
    %v3690 = vrot.slane %v626, %v3689
    %v3692 = vunpack.c.l.s4 269488144
    %v3693 = vunpack.c.0.s8 %v3692
    %v3694 = vlaneseq
    %v3695 = vshrl.u32 %v3694, 7
    %v3696 = vsub.s32 %v3693, %v3695
    %v3697 = vrot.slane %v627, %v3696
    %v3699 = vunpack.c.l.s4 842150450
    %v3700 = vunpack.c.0.s8 %v3699
    %v3701 = vlaneseq
    %v3702 = vshrl.u32 %v3701, 7
    %v3703 = vsub.s32 %v3700, %v3702
    %v3704 = vrot.slane %v627, %v3703
    %v3706 = vunpack.c.l.s4 1414812756
    %v3707 = vunpack.c.0.s8 %v3706
    %v3708 = vlaneseq
    %v3709 = vshrl.u32 %v3708, 7
    %v3710 = vsub.s32 %v3707, %v3709
    %v3711 = vrot.slane %v627, %v3710
    %v3713 = vunpack.c.l.s4 1987475062
    %v3714 = vunpack.c.0.s8 %v3713
    %v3715 = vlaneseq
    %v3716 = vshrl.u32 %v3715, 7
    %v3717 = vsub.s32 %v3714, %v3716
    %v3718 = vrot.slane %v627, %v3717
    %v3720 = vunpack.c.l.s4 269488144
    %v3721 = vunpack.c.0.s8 %v3720
    %v3722 = vlaneseq
    %v3723 = vshrl.u32 %v3722, 7
    %v3724 = vsub.s32 %v3721, %v3723
    %v3725 = vrot.slane %v628, %v3724
    %v3727 = vunpack.c.l.s4 842150450
    %v3728 = vunpack.c.0.s8 %v3727
    %v3729 = vlaneseq
    %v3730 = vshrl.u32 %v3729, 7
    %v3731 = vsub.s32 %v3728, %v3730
    %v3732 = vrot.slane %v628, %v3731
    %v3734 = vunpack.c.l.s4 1414812756
    %v3735 = vunpack.c.0.s8 %v3734
    %v3736 = vlaneseq
    %v3737 = vshrl.u32 %v3736, 7
    %v3738 = vsub.s32 %v3735, %v3737
    %v3739 = vrot.slane %v628, %v3738
    %v3741 = vunpack.c.l.s4 1987475062
    %v3742 = vunpack.c.0.s8 %v3741
    %v3743 = vlaneseq
    %v3744 = vshrl.u32 %v3743, 7
    %v3745 = vsub.s32 %v3742, %v3744
    %v3746 = vrot.slane %v628, %v3745
    %v3748 = vunpack.c.l.s4 269488144
    %v3749 = vunpack.c.0.s8 %v3748
    %v3750 = vlaneseq
    %v3751 = vshrl.u32 %v3750, 7
    %v3752 = vsub.s32 %v3749, %v3751
    %v3753 = vrot.slane %v629, %v3752
    %v3755 = vunpack.c.l.s4 842150450
    %v3756 = vunpack.c.0.s8 %v3755
    %v3757 = vlaneseq
    %v3758 = vshrl.u32 %v3757, 7
    %v3759 = vsub.s32 %v3756, %v3758
    %v3760 = vrot.slane %v629, %v3759
    %v3762 = vunpack.c.l.s4 1414812756
    %v3763 = vunpack.c.0.s8 %v3762
    %v3764 = vlaneseq
    %v3765 = vshrl.u32 %v3764, 7
    %v3766 = vsub.s32 %v3763, %v3765
    %v3767 = vrot.slane %v629, %v3766
    %v3769 = vunpack.c.l.s4 1987475062
    %v3770 = vunpack.c.0.s8 %v3769
    %v3771 = vlaneseq
    %v3772 = vshrl.u32 %v3771, 7
    %v3773 = vsub.s32 %v3770, %v3772
    %v3774 = vrot.slane %v629, %v3773
    %v3776 = vunpack.c.l.s4 269488144
    %v3777 = vunpack.c.0.s8 %v3776
    %v3778 = vlaneseq
    %v3779 = vshrl.u32 %v3778, 7
    %v3780 = vsub.s32 %v3777, %v3779
    %v3781 = vrot.slane %v630, %v3780
    %v3783 = vunpack.c.l.s4 842150450
    %v3784 = vunpack.c.0.s8 %v3783
    %v3785 = vlaneseq
    %v3786 = vshrl.u32 %v3785, 7
    %v3787 = vsub.s32 %v3784, %v3786
    %v3788 = vrot.slane %v630, %v3787
    %v3790 = vunpack.c.l.s4 1414812756
    %v3791 = vunpack.c.0.s8 %v3790
    %v3792 = vlaneseq
    %v3793 = vshrl.u32 %v3792, 7
    %v3794 = vsub.s32 %v3791, %v3793
    %v3795 = vrot.slane %v630, %v3794
    %v3797 = vunpack.c.l.s4 1987475062
    %v3798 = vunpack.c.0.s8 %v3797
    %v3799 = vlaneseq
    %v3800 = vshrl.u32 %v3799, 7
    %v3801 = vsub.s32 %v3798, %v3800
    %v3802 = vrot.slane %v630, %v3801
    %v3804 = vunpack.c.l.s4 269488144
    %v3805 = vunpack.c.0.s8 %v3804
    %v3806 = vlaneseq
    %v3807 = vshrl.u32 %v3806, 7
    %v3808 = vsub.s32 %v3805, %v3807
    %v3809 = vrot.slane %v631, %v3808
    %v3811 = vunpack.c.l.s4 842150450
    %v3812 = vunpack.c.0.s8 %v3811
    %v3813 = vlaneseq
    %v3814 = vshrl.u32 %v3813, 7
    %v3815 = vsub.s32 %v3812, %v3814
    %v3816 = vrot.slane %v631, %v3815
    %v3818 = vunpack.c.l.s4 1414812756
    %v3819 = vunpack.c.0.s8 %v3818
    %v3820 = vlaneseq
    %v3821 = vshrl.u32 %v3820, 7
    %v3822 = vsub.s32 %v3819, %v3821
    %v3823 = vrot.slane %v631, %v3822
    %v3825 = vunpack.c.l.s4 1987475062
    %v3826 = vunpack.c.0.s8 %v3825
    %v3827 = vlaneseq
    %v3828 = vshrl.u32 %v3827, 7
    %v3829 = vsub.s32 %v3826, %v3828
    %v3830 = vrot.slane %v631, %v3829
    %v3832 = vunpack.c.l.s4 269488144
    %v3833 = vunpack.c.0.s8 %v3832
    %v3834 = vlaneseq
    %v3835 = vshrl.u32 %v3834, 7
    %v3836 = vsub.s32 %v3833, %v3835
    %v3837 = vrot.slane %v632, %v3836
    %v3839 = vunpack.c.l.s4 842150450
    %v3840 = vunpack.c.0.s8 %v3839
    %v3841 = vlaneseq
    %v3842 = vshrl.u32 %v3841, 7
    %v3843 = vsub.s32 %v3840, %v3842
    %v3844 = vrot.slane %v632, %v3843
    %v3846 = vunpack.c.l.s4 1414812756
    %v3847 = vunpack.c.0.s8 %v3846
    %v3848 = vlaneseq
    %v3849 = vshrl.u32 %v3848, 7
    %v3850 = vsub.s32 %v3847, %v3849
    %v3851 = vrot.slane %v632, %v3850
    %v3853 = vunpack.c.l.s4 1987475062
    %v3854 = vunpack.c.0.s8 %v3853
    %v3855 = vlaneseq
    %v3856 = vshrl.u32 %v3855, 7
    %v3857 = vsub.s32 %v3854, %v3856
    %v3858 = vrot.slane %v632, %v3857
    %v3860 = vunpack.c.l.s4 269488144
    %v3861 = vunpack.c.0.s8 %v3860
    %v3862 = vlaneseq
    %v3863 = vshrl.u32 %v3862, 7
    %v3864 = vsub.s32 %v3861, %v3863
    %v3865 = vrot.slane %v633, %v3864
    %v3867 = vunpack.c.l.s4 842150450
    %v3868 = vunpack.c.0.s8 %v3867
    %v3869 = vlaneseq
    %v3870 = vshrl.u32 %v3869, 7
    %v3871 = vsub.s32 %v3868, %v3870
    %v3872 = vrot.slane %v633, %v3871
    %v3874 = vunpack.c.l.s4 1414812756
    %v3875 = vunpack.c.0.s8 %v3874
    %v3876 = vlaneseq
    %v3877 = vshrl.u32 %v3876, 7
    %v3878 = vsub.s32 %v3875, %v3877
    %v3879 = vrot.slane %v633, %v3878
    %v3881 = vunpack.c.l.s4 1987475062
    %v3882 = vunpack.c.0.s8 %v3881
    %v3883 = vlaneseq
    %v3884 = vshrl.u32 %v3883, 7
    %v3885 = vsub.s32 %v3882, %v3884
    %v3886 = vrot.slane %v633, %v3885
    %v3888 = vunpack.c.l.s4 269488144
    %v3889 = vunpack.c.0.s8 %v3888
    %v3890 = vlaneseq
    %v3891 = vshrl.u32 %v3890, 7
    %v3892 = vsub.s32 %v3889, %v3891
    %v3893 = vrot.slane %v634, %v3892
    %v3895 = vunpack.c.l.s4 842150450
    %v3896 = vunpack.c.0.s8 %v3895
    %v3897 = vlaneseq
    %v3898 = vshrl.u32 %v3897, 7
    %v3899 = vsub.s32 %v3896, %v3898
    %v3900 = vrot.slane %v634, %v3899
    %v3902 = vunpack.c.l.s4 1414812756
    %v3903 = vunpack.c.0.s8 %v3902
    %v3904 = vlaneseq
    %v3905 = vshrl.u32 %v3904, 7
    %v3906 = vsub.s32 %v3903, %v3905
    %v3907 = vrot.slane %v634, %v3906
    %v3909 = vunpack.c.l.s4 1987475062
    %v3910 = vunpack.c.0.s8 %v3909
    %v3911 = vlaneseq
    %v3912 = vshrl.u32 %v3911, 7
    %v3913 = vsub.s32 %v3910, %v3912
    %v3914 = vrot.slane %v634, %v3913
    %v3916 = vunpack.c.l.s4 269488144
    %v3917 = vunpack.c.0.s8 %v3916
    %v3918 = vlaneseq
    %v3919 = vshrl.u32 %v3918, 7
    %v3920 = vsub.s32 %v3917, %v3919
    %v3921 = vrot.slane %v635, %v3920
    %v3923 = vunpack.c.l.s4 842150450
    %v3924 = vunpack.c.0.s8 %v3923
    %v3925 = vlaneseq
    %v3926 = vshrl.u32 %v3925, 7
    %v3927 = vsub.s32 %v3924, %v3926
    %v3928 = vrot.slane %v635, %v3927
    %v3930 = vunpack.c.l.s4 1414812756
    %v3931 = vunpack.c.0.s8 %v3930
    %v3932 = vlaneseq
    %v3933 = vshrl.u32 %v3932, 7
    %v3934 = vsub.s32 %v3931, %v3933
    %v3935 = vrot.slane %v635, %v3934
    %v3937 = vunpack.c.l.s4 1987475062
    %v3938 = vunpack.c.0.s8 %v3937
    %v3939 = vlaneseq
    %v3940 = vshrl.u32 %v3939, 7
    %v3941 = vsub.s32 %v3938, %v3940
    %v3942 = vrot.slane %v635, %v3941
    %v3944 = vunpack.c.l.s4 269488144
    %v3945 = vunpack.c.0.s8 %v3944
    %v3946 = vlaneseq
    %v3947 = vshrl.u32 %v3946, 7
    %v3948 = vsub.s32 %v3945, %v3947
    %v3949 = vrot.slane %v636, %v3948
    %v3951 = vunpack.c.l.s4 842150450
    %v3952 = vunpack.c.0.s8 %v3951
    %v3953 = vlaneseq
    %v3954 = vshrl.u32 %v3953, 7
    %v3955 = vsub.s32 %v3952, %v3954
    %v3956 = vrot.slane %v636, %v3955
    %v3958 = vunpack.c.l.s4 1414812756
    %v3959 = vunpack.c.0.s8 %v3958
    %v3960 = vlaneseq
    %v3961 = vshrl.u32 %v3960, 7
    %v3962 = vsub.s32 %v3959, %v3961
    %v3963 = vrot.slane %v636, %v3962
    %v3965 = vunpack.c.l.s4 1987475062
    %v3966 = vunpack.c.0.s8 %v3965
    %v3967 = vlaneseq
    %v3968 = vshrl.u32 %v3967, 7
    %v3969 = vsub.s32 %v3966, %v3968
    %v3970 = vrot.slane %v636, %v3969
    %v3972 = vunpack.c.l.s4 269488144
    %v3973 = vunpack.c.0.s8 %v3972
    %v3974 = vlaneseq
    %v3975 = vshrl.u32 %v3974, 7
    %v3976 = vsub.s32 %v3973, %v3975
    %v3977 = vrot.slane %v637, %v3976
    %v3979 = vunpack.c.l.s4 842150450
    %v3980 = vunpack.c.0.s8 %v3979
    %v3981 = vlaneseq
    %v3982 = vshrl.u32 %v3981, 7
    %v3983 = vsub.s32 %v3980, %v3982
    %v3984 = vrot.slane %v637, %v3983
    %v3986 = vunpack.c.l.s4 1414812756
    %v3987 = vunpack.c.0.s8 %v3986
    %v3988 = vlaneseq
    %v3989 = vshrl.u32 %v3988, 7
    %v3990 = vsub.s32 %v3987, %v3989
    %v3991 = vrot.slane %v637, %v3990
    %v3993 = vunpack.c.l.s4 1987475062
    %v3994 = vunpack.c.0.s8 %v3993
    %v3995 = vlaneseq
    %v3996 = vshrl.u32 %v3995, 7
    %v3997 = vsub.s32 %v3994, %v3996
    %v3998 = vrot.slane %v637, %v3997
    %v4000 = vunpack.c.l.s4 269488144
    %v4001 = vunpack.c.0.s8 %v4000
    %v4002 = vlaneseq
    %v4003 = vshrl.u32 %v4002, 7
    %v4004 = vsub.s32 %v4001, %v4003
    %v4005 = vrot.slane %v638, %v4004
    %v4007 = vunpack.c.l.s4 842150450
    %v4008 = vunpack.c.0.s8 %v4007
    %v4009 = vlaneseq
    %v4010 = vshrl.u32 %v4009, 7
    %v4011 = vsub.s32 %v4008, %v4010
    %v4012 = vrot.slane %v638, %v4011
    %v4014 = vunpack.c.l.s4 1414812756
    %v4015 = vunpack.c.0.s8 %v4014
    %v4016 = vlaneseq
    %v4017 = vshrl.u32 %v4016, 7
    %v4018 = vsub.s32 %v4015, %v4017
    %v4019 = vrot.slane %v638, %v4018
    %v4021 = vunpack.c.l.s4 1987475062
    %v4022 = vunpack.c.0.s8 %v4021
    %v4023 = vlaneseq
    %v4024 = vshrl.u32 %v4023, 7
    %v4025 = vsub.s32 %v4022, %v4024
    %v4026 = vrot.slane %v638, %v4025
    %v4028 = vunpack.c.l.s4 269488144
    %v4029 = vunpack.c.0.s8 %v4028
    %v4030 = vlaneseq
    %v4031 = vshrl.u32 %v4030, 7
    %v4032 = vsub.s32 %v4029, %v4031
    %v4033 = vrot.slane %v639, %v4032
    %v4035 = vunpack.c.l.s4 842150450
    %v4036 = vunpack.c.0.s8 %v4035
    %v4037 = vlaneseq
    %v4038 = vshrl.u32 %v4037, 7
    %v4039 = vsub.s32 %v4036, %v4038
    %v4040 = vrot.slane %v639, %v4039
    %v4042 = vunpack.c.l.s4 1414812756
    %v4043 = vunpack.c.0.s8 %v4042
    %v4044 = vlaneseq
    %v4045 = vshrl.u32 %v4044, 7
    %v4046 = vsub.s32 %v4043, %v4045
    %v4047 = vrot.slane %v639, %v4046
    %v4049 = vunpack.c.l.s4 1987475062
    %v4050 = vunpack.c.0.s8 %v4049
    %v4051 = vlaneseq
    %v4052 = vshrl.u32 %v4051, 7
    %v4053 = vsub.s32 %v4050, %v4052
    %v4054 = vrot.slane %v639, %v4053
    %v4056 = vunpack.c.l.s4 269488144
    %v4057 = vunpack.c.0.s8 %v4056
    %v4058 = vlaneseq
    %v4059 = vshrl.u32 %v4058, 7
    %v4060 = vsub.s32 %v4057, %v4059
    %v4061 = vrot.slane %v640, %v4060
    %v4063 = vunpack.c.l.s4 842150450
    %v4064 = vunpack.c.0.s8 %v4063
    %v4065 = vlaneseq
    %v4066 = vshrl.u32 %v4065, 7
    %v4067 = vsub.s32 %v4064, %v4066
    %v4068 = vrot.slane %v640, %v4067
    %v4070 = vunpack.c.l.s4 1414812756
    %v4071 = vunpack.c.0.s8 %v4070
    %v4072 = vlaneseq
    %v4073 = vshrl.u32 %v4072, 7
    %v4074 = vsub.s32 %v4071, %v4073
    %v4075 = vrot.slane %v640, %v4074
    %v4077 = vunpack.c.l.s4 1987475062
    %v4078 = vunpack.c.0.s8 %v4077
    %v4079 = vlaneseq
    %v4080 = vshrl.u32 %v4079, 7
    %v4081 = vsub.s32 %v4078, %v4080
    %v4082 = vrot.slane %v640, %v4081
    %v4084 = vunpack.c.l.s4 269488144
    %v4085 = vunpack.c.0.s8 %v4084
    %v4086 = vlaneseq
    %v4087 = vshrl.u32 %v4086, 7
    %v4088 = vsub.s32 %v4085, %v4087
    %v4089 = vrot.slane %v641, %v4088
    %v4091 = vunpack.c.l.s4 842150450
    %v4092 = vunpack.c.0.s8 %v4091
    %v4093 = vlaneseq
    %v4094 = vshrl.u32 %v4093, 7
    %v4095 = vsub.s32 %v4092, %v4094
    %v4096 = vrot.slane %v641, %v4095
    %v4098 = vunpack.c.l.s4 1414812756
    %v4099 = vunpack.c.0.s8 %v4098
    %v4100 = vlaneseq
    %v4101 = vshrl.u32 %v4100, 7
    %v4102 = vsub.s32 %v4099, %v4101
    %v4103 = vrot.slane %v641, %v4102
    %v4105 = vunpack.c.l.s4 1987475062
    %v4106 = vunpack.c.0.s8 %v4105
    %v4107 = vlaneseq
    %v4108 = vshrl.u32 %v4107, 7
    %v4109 = vsub.s32 %v4106, %v4108
    %v4110 = vrot.slane %v641, %v4109
    %v4112 = vunpack.c.l.s4 269488144
    %v4113 = vunpack.c.0.s8 %v4112
    %v4114 = vlaneseq
    %v4115 = vshrl.u32 %v4114, 7
    %v4116 = vsub.s32 %v4113, %v4115
    %v4117 = vrot.slane %v642, %v4116
    %v4119 = vunpack.c.l.s4 842150450
    %v4120 = vunpack.c.0.s8 %v4119
    %v4121 = vlaneseq
    %v4122 = vshrl.u32 %v4121, 7
    %v4123 = vsub.s32 %v4120, %v4122
    %v4124 = vrot.slane %v642, %v4123
    %v4126 = vunpack.c.l.s4 1414812756
    %v4127 = vunpack.c.0.s8 %v4126
    %v4128 = vlaneseq
    %v4129 = vshrl.u32 %v4128, 7
    %v4130 = vsub.s32 %v4127, %v4129
    %v4131 = vrot.slane %v642, %v4130
    %v4133 = vunpack.c.l.s4 1987475062
    %v4134 = vunpack.c.0.s8 %v4133
    %v4135 = vlaneseq
    %v4136 = vshrl.u32 %v4135, 7
    %v4137 = vsub.s32 %v4134, %v4136
    %v4138 = vrot.slane %v642, %v4137
    %v4140 = vunpack.c.l.s4 269488144
    %v4141 = vunpack.c.0.s8 %v4140
    %v4142 = vlaneseq
    %v4143 = vshrl.u32 %v4142, 7
    %v4144 = vsub.s32 %v4141, %v4143
    %v4145 = vrot.slane %v643, %v4144
    %v4147 = vunpack.c.l.s4 842150450
    %v4148 = vunpack.c.0.s8 %v4147
    %v4149 = vlaneseq
    %v4150 = vshrl.u32 %v4149, 7
    %v4151 = vsub.s32 %v4148, %v4150
    %v4152 = vrot.slane %v643, %v4151
    %v4154 = vunpack.c.l.s4 1414812756
    %v4155 = vunpack.c.0.s8 %v4154
    %v4156 = vlaneseq
    %v4157 = vshrl.u32 %v4156, 7
    %v4158 = vsub.s32 %v4155, %v4157
    %v4159 = vrot.slane %v643, %v4158
    %v4161 = vunpack.c.l.s4 1987475062
    %v4162 = vunpack.c.0.s8 %v4161
    %v4163 = vlaneseq
    %v4164 = vshrl.u32 %v4163, 7
    %v4165 = vsub.s32 %v4162, %v4164
    %v4166 = vrot.slane %v643, %v4165
    %v4168 = vunpack.c.l.s4 269488144
    %v4169 = vunpack.c.0.s8 %v4168
    %v4170 = vlaneseq
    %v4171 = vshrl.u32 %v4170, 7
    %v4172 = vsub.s32 %v4169, %v4171
    %v4173 = vrot.slane %v644, %v4172
    %v4175 = vunpack.c.l.s4 842150450
    %v4176 = vunpack.c.0.s8 %v4175
    %v4177 = vlaneseq
    %v4178 = vshrl.u32 %v4177, 7
    %v4179 = vsub.s32 %v4176, %v4178
    %v4180 = vrot.slane %v644, %v4179
    %v4182 = vunpack.c.l.s4 1414812756
    %v4183 = vunpack.c.0.s8 %v4182
    %v4184 = vlaneseq
    %v4185 = vshrl.u32 %v4184, 7
    %v4186 = vsub.s32 %v4183, %v4185
    %v4187 = vrot.slane %v644, %v4186
    %v4189 = vunpack.c.l.s4 1987475062
    %v4190 = vunpack.c.0.s8 %v4189
    %v4191 = vlaneseq
    %v4192 = vshrl.u32 %v4191, 7
    %v4193 = vsub.s32 %v4190, %v4192
    %v4194 = vrot.slane %v644, %v4193
    %v4196 = vunpack.c.l.s4 269488144
    %v4197 = vunpack.c.0.s8 %v4196
    %v4198 = vlaneseq
    %v4199 = vshrl.u32 %v4198, 7
    %v4200 = vsub.s32 %v4197, %v4199
    %v4201 = vrot.slane %v645, %v4200
    %v4203 = vunpack.c.l.s4 842150450
    %v4204 = vunpack.c.0.s8 %v4203
    %v4205 = vlaneseq
    %v4206 = vshrl.u32 %v4205, 7
    %v4207 = vsub.s32 %v4204, %v4206
    %v4208 = vrot.slane %v645, %v4207
    %v4210 = vunpack.c.l.s4 1414812756
    %v4211 = vunpack.c.0.s8 %v4210
    %v4212 = vlaneseq
    %v4213 = vshrl.u32 %v4212, 7
    %v4214 = vsub.s32 %v4211, %v4213
    %v4215 = vrot.slane %v645, %v4214
    %v4217 = vunpack.c.l.s4 1987475062
    %v4218 = vunpack.c.0.s8 %v4217
    %v4219 = vlaneseq
    %v4220 = vshrl.u32 %v4219, 7
    %v4221 = vsub.s32 %v4218, %v4220
    %v4222 = vrot.slane %v645, %v4221
    %v4224 = vunpack.c.l.s4 269488144
    %v4225 = vunpack.c.0.s8 %v4224
    %v4226 = vlaneseq
    %v4227 = vshrl.u32 %v4226, 7
    %v4228 = vsub.s32 %v4225, %v4227
    %v4229 = vrot.slane %v646, %v4228
    %v4231 = vunpack.c.l.s4 842150450
    %v4232 = vunpack.c.0.s8 %v4231
    %v4233 = vlaneseq
    %v4234 = vshrl.u32 %v4233, 7
    %v4235 = vsub.s32 %v4232, %v4234
    %v4236 = vrot.slane %v646, %v4235
    %v4238 = vunpack.c.l.s4 1414812756
    %v4239 = vunpack.c.0.s8 %v4238
    %v4240 = vlaneseq
    %v4241 = vshrl.u32 %v4240, 7
    %v4242 = vsub.s32 %v4239, %v4241
    %v4243 = vrot.slane %v646, %v4242
    %v4245 = vunpack.c.l.s4 1987475062
    %v4246 = vunpack.c.0.s8 %v4245
    %v4247 = vlaneseq
    %v4248 = vshrl.u32 %v4247, 7
    %v4249 = vsub.s32 %v4246, %v4248
    %v4250 = vrot.slane %v646, %v4249
    %v4252 = vunpack.c.l.s4 269488144
    %v4253 = vunpack.c.0.s8 %v4252
    %v4254 = vlaneseq
    %v4255 = vshrl.u32 %v4254, 7
    %v4256 = vsub.s32 %v4253, %v4255
    %v4257 = vrot.slane %v647, %v4256
    %v4259 = vunpack.c.l.s4 842150450
    %v4260 = vunpack.c.0.s8 %v4259
    %v4261 = vlaneseq
    %v4262 = vshrl.u32 %v4261, 7
    %v4263 = vsub.s32 %v4260, %v4262
    %v4264 = vrot.slane %v647, %v4263
    %v4266 = vunpack.c.l.s4 1414812756
    %v4267 = vunpack.c.0.s8 %v4266
    %v4268 = vlaneseq
    %v4269 = vshrl.u32 %v4268, 7
    %v4270 = vsub.s32 %v4267, %v4269
    %v4271 = vrot.slane %v647, %v4270
    %v4273 = vunpack.c.l.s4 1987475062
    %v4274 = vunpack.c.0.s8 %v4273
    %v4275 = vlaneseq
    %v4276 = vshrl.u32 %v4275, 7
    %v4277 = vsub.s32 %v4274, %v4276
    %v4278 = vrot.slane %v647, %v4277
    %v4280 = vunpack.c.l.s4 269488144
    %v4281 = vunpack.c.0.s8 %v4280
    %v4282 = vlaneseq
    %v4283 = vshrl.u32 %v4282, 7
    %v4284 = vsub.s32 %v4281, %v4283
    %v4285 = vrot.slane %v648, %v4284
    %v4287 = vunpack.c.l.s4 842150450
    %v4288 = vunpack.c.0.s8 %v4287
    %v4289 = vlaneseq
    %v4290 = vshrl.u32 %v4289, 7
    %v4291 = vsub.s32 %v4288, %v4290
    %v4292 = vrot.slane %v648, %v4291
    %v4294 = vunpack.c.l.s4 1414812756
    %v4295 = vunpack.c.0.s8 %v4294
    %v4296 = vlaneseq
    %v4297 = vshrl.u32 %v4296, 7
    %v4298 = vsub.s32 %v4295, %v4297
    %v4299 = vrot.slane %v648, %v4298
    %v4301 = vunpack.c.l.s4 1987475062
    %v4302 = vunpack.c.0.s8 %v4301
    %v4303 = vlaneseq
    %v4304 = vshrl.u32 %v4303, 7
    %v4305 = vsub.s32 %v4302, %v4304
    %v4306 = vrot.slane %v648, %v4305
    %v4308 = vunpack.c.l.s4 269488144
    %v4309 = vunpack.c.0.s8 %v4308
    %v4310 = vlaneseq
    %v4311 = vshrl.u32 %v4310, 7
    %v4312 = vsub.s32 %v4309, %v4311
    %v4313 = vrot.slane %v649, %v4312
    %v4315 = vunpack.c.l.s4 842150450
    %v4316 = vunpack.c.0.s8 %v4315
    %v4317 = vlaneseq
    %v4318 = vshrl.u32 %v4317, 7
    %v4319 = vsub.s32 %v4316, %v4318
    %v4320 = vrot.slane %v649, %v4319
    %v4322 = vunpack.c.l.s4 1414812756
    %v4323 = vunpack.c.0.s8 %v4322
    %v4324 = vlaneseq
    %v4325 = vshrl.u32 %v4324, 7
    %v4326 = vsub.s32 %v4323, %v4325
    %v4327 = vrot.slane %v649, %v4326
    %v4329 = vunpack.c.l.s4 1987475062
    %v4330 = vunpack.c.0.s8 %v4329
    %v4331 = vlaneseq
    %v4332 = vshrl.u32 %v4331, 7
    %v4333 = vsub.s32 %v4330, %v4332
    %v4334 = vrot.slane %v649, %v4333
    %v4336 = vunpack.c.l.s4 269488144
    %v4337 = vunpack.c.0.s8 %v4336
    %v4338 = vlaneseq
    %v4339 = vshrl.u32 %v4338, 7
    %v4340 = vsub.s32 %v4337, %v4339
    %v4341 = vrot.slane %v650, %v4340
    %v4343 = vunpack.c.l.s4 842150450
    %v4344 = vunpack.c.0.s8 %v4343
    %v4345 = vlaneseq
    %v4346 = vshrl.u32 %v4345, 7
    %v4347 = vsub.s32 %v4344, %v4346
    %v4348 = vrot.slane %v650, %v4347
    %v4350 = vunpack.c.l.s4 1414812756
    %v4351 = vunpack.c.0.s8 %v4350
    %v4352 = vlaneseq
    %v4353 = vshrl.u32 %v4352, 7
    %v4354 = vsub.s32 %v4351, %v4353
    %v4355 = vrot.slane %v650, %v4354
    %v4357 = vunpack.c.l.s4 1987475062
    %v4358 = vunpack.c.0.s8 %v4357
    %v4359 = vlaneseq
    %v4360 = vshrl.u32 %v4359, 7
    %v4361 = vsub.s32 %v4358, %v4360
    %v4362 = vrot.slane %v650, %v4361
    %v4363 = vcombine.low %v785, %v792
    %v4364 = vcombine.low %v799, %v806
    %v4366 = vunpack.c.l.s4 1983009808
    %v4367 = vunpack.c.0.s8 %v4366
    %v4368 = vlaneseq
    %v4369 = vshrl.u32 %v4368, 7
    %v4370 = vsub.s32 %v4367, %v4369
    %v4371 = vrot.slane %v4363, %v4370
    %v4373 = vunpack.c.l.s4 1983009808
    %v4374 = vunpack.c.0.s8 %v4373
    %v4375 = vlaneseq
    %v4376 = vshrl.u32 %v4375, 7
    %v4377 = vsub.s32 %v4374, %v4376
    %v4378 = vrot.slane %v4364, %v4377
    %v4379 = vcombine.low %v4371, %v4378
    %v4380 = vcombine.low %v813, %v820
    %v4381 = vcombine.low %v827, %v834
    %v4383 = vunpack.c.l.s4 1983009808
    %v4384 = vunpack.c.0.s8 %v4383
    %v4385 = vlaneseq
    %v4386 = vshrl.u32 %v4385, 7
    %v4387 = vsub.s32 %v4384, %v4386
    %v4388 = vrot.slane %v4380, %v4387
    %v4390 = vunpack.c.l.s4 1983009808
    %v4391 = vunpack.c.0.s8 %v4390
    %v4392 = vlaneseq
    %v4393 = vshrl.u32 %v4392, 7
    %v4394 = vsub.s32 %v4391, %v4393
    %v4395 = vrot.slane %v4381, %v4394
    %v4396 = vcombine.low %v4388, %v4395
    %v4397 = vcombine.low %v841, %v848
    %v4398 = vcombine.low %v855, %v862
    %v4400 = vunpack.c.l.s4 1983009808
    %v4401 = vunpack.c.0.s8 %v4400
    %v4402 = vlaneseq
    %v4403 = vshrl.u32 %v4402, 7
    %v4404 = vsub.s32 %v4401, %v4403
    %v4405 = vrot.slane %v4397, %v4404
    %v4407 = vunpack.c.l.s4 1983009808
    %v4408 = vunpack.c.0.s8 %v4407
    %v4409 = vlaneseq
    %v4410 = vshrl.u32 %v4409, 7
    %v4411 = vsub.s32 %v4408, %v4410
    %v4412 = vrot.slane %v4398, %v4411
    %v4413 = vcombine.low %v4405, %v4412
    %v4414 = vcombine.low %v869, %v876
    %v4415 = vcombine.low %v883, %v890
    %v4417 = vunpack.c.l.s4 1983009808
    %v4418 = vunpack.c.0.s8 %v4417
    %v4419 = vlaneseq
    %v4420 = vshrl.u32 %v4419, 7
    %v4421 = vsub.s32 %v4418, %v4420
    %v4422 = vrot.slane %v4414, %v4421
    %v4424 = vunpack.c.l.s4 1983009808
    %v4425 = vunpack.c.0.s8 %v4424
    %v4426 = vlaneseq
    %v4427 = vshrl.u32 %v4426, 7
    %v4428 = vsub.s32 %v4425, %v4427
    %v4429 = vrot.slane %v4415, %v4428
    %v4430 = vcombine.low %v4422, %v4429
    %v4431 = vcombine.low %v897, %v904
    %v4432 = vcombine.low %v911, %v918
    %v4434 = vunpack.c.l.s4 1983009808
    %v4435 = vunpack.c.0.s8 %v4434
    %v4436 = vlaneseq
    %v4437 = vshrl.u32 %v4436, 7
    %v4438 = vsub.s32 %v4435, %v4437
    %v4439 = vrot.slane %v4431, %v4438
    %v4441 = vunpack.c.l.s4 1983009808
    %v4442 = vunpack.c.0.s8 %v4441
    %v4443 = vlaneseq
    %v4444 = vshrl.u32 %v4443, 7
    %v4445 = vsub.s32 %v4442, %v4444
    %v4446 = vrot.slane %v4432, %v4445
    %v4447 = vcombine.low %v4439, %v4446
    %v4448 = vcombine.low %v925, %v932
    %v4449 = vcombine.low %v939, %v946
    %v4451 = vunpack.c.l.s4 1983009808
    %v4452 = vunpack.c.0.s8 %v4451
    %v4453 = vlaneseq
    %v4454 = vshrl.u32 %v4453, 7
    %v4455 = vsub.s32 %v4452, %v4454
    %v4456 = vrot.slane %v4448, %v4455
    %v4458 = vunpack.c.l.s4 1983009808
    %v4459 = vunpack.c.0.s8 %v4458
    %v4460 = vlaneseq
    %v4461 = vshrl.u32 %v4460, 7
    %v4462 = vsub.s32 %v4459, %v4461
    %v4463 = vrot.slane %v4449, %v4462
    %v4464 = vcombine.low %v4456, %v4463
    %v4465 = vcombine.low %v953, %v960
    %v4466 = vcombine.low %v967, %v974
    %v4468 = vunpack.c.l.s4 1983009808
    %v4469 = vunpack.c.0.s8 %v4468
    %v4470 = vlaneseq
    %v4471 = vshrl.u32 %v4470, 7
    %v4472 = vsub.s32 %v4469, %v4471
    %v4473 = vrot.slane %v4465, %v4472
    %v4475 = vunpack.c.l.s4 1983009808
    %v4476 = vunpack.c.0.s8 %v4475
    %v4477 = vlaneseq
    %v4478 = vshrl.u32 %v4477, 7
    %v4479 = vsub.s32 %v4476, %v4478
    %v4480 = vrot.slane %v4466, %v4479
    %v4481 = vcombine.low %v4473, %v4480
    %v4482 = vcombine.low %v981, %v988
    %v4483 = vcombine.low %v995, %v1002
    %v4485 = vunpack.c.l.s4 1983009808
    %v4486 = vunpack.c.0.s8 %v4485
    %v4487 = vlaneseq
    %v4488 = vshrl.u32 %v4487, 7
    %v4489 = vsub.s32 %v4486, %v4488
    %v4490 = vrot.slane %v4482, %v4489
    %v4492 = vunpack.c.l.s4 1983009808
    %v4493 = vunpack.c.0.s8 %v4492
    %v4494 = vlaneseq
    %v4495 = vshrl.u32 %v4494, 7
    %v4496 = vsub.s32 %v4493, %v4495
    %v4497 = vrot.slane %v4483, %v4496
    %v4498 = vcombine.low %v4490, %v4497
    %v4499 = vcombine.low %v1009, %v1016
    %v4500 = vcombine.low %v1023, %v1030
    %v4502 = vunpack.c.l.s4 1983009808
    %v4503 = vunpack.c.0.s8 %v4502
    %v4504 = vlaneseq
    %v4505 = vshrl.u32 %v4504, 7
    %v4506 = vsub.s32 %v4503, %v4505
    %v4507 = vrot.slane %v4499, %v4506
    %v4509 = vunpack.c.l.s4 1983009808
    %v4510 = vunpack.c.0.s8 %v4509
    %v4511 = vlaneseq
    %v4512 = vshrl.u32 %v4511, 7
    %v4513 = vsub.s32 %v4510, %v4512
    %v4514 = vrot.slane %v4500, %v4513
    %v4515 = vcombine.low %v4507, %v4514
    %v4516 = vcombine.low %v1037, %v1044
    %v4517 = vcombine.low %v1051, %v1058
    %v4519 = vunpack.c.l.s4 1983009808
    %v4520 = vunpack.c.0.s8 %v4519
    %v4521 = vlaneseq
    %v4522 = vshrl.u32 %v4521, 7
    %v4523 = vsub.s32 %v4520, %v4522
    %v4524 = vrot.slane %v4516, %v4523
    %v4526 = vunpack.c.l.s4 1983009808
    %v4527 = vunpack.c.0.s8 %v4526
    %v4528 = vlaneseq
    %v4529 = vshrl.u32 %v4528, 7
    %v4530 = vsub.s32 %v4527, %v4529
    %v4531 = vrot.slane %v4517, %v4530
    %v4532 = vcombine.low %v4524, %v4531
    %v4533 = vcombine.low %v1065, %v1072
    %v4534 = vcombine.low %v1079, %v1086
    %v4536 = vunpack.c.l.s4 1983009808
    %v4537 = vunpack.c.0.s8 %v4536
    %v4538 = vlaneseq
    %v4539 = vshrl.u32 %v4538, 7
    %v4540 = vsub.s32 %v4537, %v4539
    %v4541 = vrot.slane %v4533, %v4540
    %v4543 = vunpack.c.l.s4 1983009808
    %v4544 = vunpack.c.0.s8 %v4543
    %v4545 = vlaneseq
    %v4546 = vshrl.u32 %v4545, 7
    %v4547 = vsub.s32 %v4544, %v4546
    %v4548 = vrot.slane %v4534, %v4547
    %v4549 = vcombine.low %v4541, %v4548
    %v4550 = vcombine.low %v1093, %v1100
    %v4551 = vcombine.low %v1107, %v1114
    %v4553 = vunpack.c.l.s4 1983009808
    %v4554 = vunpack.c.0.s8 %v4553
    %v4555 = vlaneseq
    %v4556 = vshrl.u32 %v4555, 7
    %v4557 = vsub.s32 %v4554, %v4556
    %v4558 = vrot.slane %v4550, %v4557
    %v4560 = vunpack.c.l.s4 1983009808
    %v4561 = vunpack.c.0.s8 %v4560
    %v4562 = vlaneseq
    %v4563 = vshrl.u32 %v4562, 7
    %v4564 = vsub.s32 %v4561, %v4563
    %v4565 = vrot.slane %v4551, %v4564
    %v4566 = vcombine.low %v4558, %v4565
    %v4567 = vcombine.low %v1121, %v1128
    %v4568 = vcombine.low %v1135, %v1142
    %v4570 = vunpack.c.l.s4 1983009808
    %v4571 = vunpack.c.0.s8 %v4570
    %v4572 = vlaneseq
    %v4573 = vshrl.u32 %v4572, 7
    %v4574 = vsub.s32 %v4571, %v4573
    %v4575 = vrot.slane %v4567, %v4574
    %v4577 = vunpack.c.l.s4 1983009808
    %v4578 = vunpack.c.0.s8 %v4577
    %v4579 = vlaneseq
    %v4580 = vshrl.u32 %v4579, 7
    %v4581 = vsub.s32 %v4578, %v4580
    %v4582 = vrot.slane %v4568, %v4581
    %v4583 = vcombine.low %v4575, %v4582
    %v4584 = vcombine.low %v1149, %v1156
    %v4585 = vcombine.low %v1163, %v1170
    %v4587 = vunpack.c.l.s4 1983009808
    %v4588 = vunpack.c.0.s8 %v4587
    %v4589 = vlaneseq
    %v4590 = vshrl.u32 %v4589, 7
    %v4591 = vsub.s32 %v4588, %v4590
    %v4592 = vrot.slane %v4584, %v4591
    %v4594 = vunpack.c.l.s4 1983009808
    %v4595 = vunpack.c.0.s8 %v4594
    %v4596 = vlaneseq
    %v4597 = vshrl.u32 %v4596, 7
    %v4598 = vsub.s32 %v4595, %v4597
    %v4599 = vrot.slane %v4585, %v4598
    %v4600 = vcombine.low %v4592, %v4599
    %v4601 = vcombine.low %v1177, %v1184
    %v4602 = vcombine.low %v1191, %v1198
    %v4604 = vunpack.c.l.s4 1983009808
    %v4605 = vunpack.c.0.s8 %v4604
    %v4606 = vlaneseq
    %v4607 = vshrl.u32 %v4606, 7
    %v4608 = vsub.s32 %v4605, %v4607
    %v4609 = vrot.slane %v4601, %v4608
    %v4611 = vunpack.c.l.s4 1983009808
    %v4612 = vunpack.c.0.s8 %v4611
    %v4613 = vlaneseq
    %v4614 = vshrl.u32 %v4613, 7
    %v4615 = vsub.s32 %v4612, %v4614
    %v4616 = vrot.slane %v4602, %v4615
    %v4617 = vcombine.low %v4609, %v4616
    %v4618 = vcombine.low %v1205, %v1212
    %v4619 = vcombine.low %v1219, %v1226
    %v4621 = vunpack.c.l.s4 1983009808
    %v4622 = vunpack.c.0.s8 %v4621
    %v4623 = vlaneseq
    %v4624 = vshrl.u32 %v4623, 7
    %v4625 = vsub.s32 %v4622, %v4624
    %v4626 = vrot.slane %v4618, %v4625
    %v4628 = vunpack.c.l.s4 1983009808
    %v4629 = vunpack.c.0.s8 %v4628
    %v4630 = vlaneseq
    %v4631 = vshrl.u32 %v4630, 7
    %v4632 = vsub.s32 %v4629, %v4631
    %v4633 = vrot.slane %v4619, %v4632
    %v4634 = vcombine.low %v4626, %v4633
    %v4635 = vcombine.low %v1233, %v1240
    %v4636 = vcombine.low %v1247, %v1254
    %v4638 = vunpack.c.l.s4 1983009808
    %v4639 = vunpack.c.0.s8 %v4638
    %v4640 = vlaneseq
    %v4641 = vshrl.u32 %v4640, 7
    %v4642 = vsub.s32 %v4639, %v4641
    %v4643 = vrot.slane %v4635, %v4642
    %v4645 = vunpack.c.l.s4 1983009808
    %v4646 = vunpack.c.0.s8 %v4645
    %v4647 = vlaneseq
    %v4648 = vshrl.u32 %v4647, 7
    %v4649 = vsub.s32 %v4646, %v4648
    %v4650 = vrot.slane %v4636, %v4649
    %v4651 = vcombine.low %v4643, %v4650
    %v4652 = vcombine.low %v1261, %v1268
    %v4653 = vcombine.low %v1275, %v1282
    %v4655 = vunpack.c.l.s4 1983009808
    %v4656 = vunpack.c.0.s8 %v4655
    %v4657 = vlaneseq
    %v4658 = vshrl.u32 %v4657, 7
    %v4659 = vsub.s32 %v4656, %v4658
    %v4660 = vrot.slane %v4652, %v4659
    %v4662 = vunpack.c.l.s4 1983009808
    %v4663 = vunpack.c.0.s8 %v4662
    %v4664 = vlaneseq
    %v4665 = vshrl.u32 %v4664, 7
    %v4666 = vsub.s32 %v4663, %v4665
    %v4667 = vrot.slane %v4653, %v4666
    %v4668 = vcombine.low %v4660, %v4667
    %v4669 = vcombine.low %v1289, %v1296
    %v4670 = vcombine.low %v1303, %v1310
    %v4672 = vunpack.c.l.s4 1983009808
    %v4673 = vunpack.c.0.s8 %v4672
    %v4674 = vlaneseq
    %v4675 = vshrl.u32 %v4674, 7
    %v4676 = vsub.s32 %v4673, %v4675
    %v4677 = vrot.slane %v4669, %v4676
    %v4679 = vunpack.c.l.s4 1983009808
    %v4680 = vunpack.c.0.s8 %v4679
    %v4681 = vlaneseq
    %v4682 = vshrl.u32 %v4681, 7
    %v4683 = vsub.s32 %v4680, %v4682
    %v4684 = vrot.slane %v4670, %v4683
    %v4685 = vcombine.low %v4677, %v4684
    %v4686 = vcombine.low %v1317, %v1324
    %v4687 = vcombine.low %v1331, %v1338
    %v4689 = vunpack.c.l.s4 1983009808
    %v4690 = vunpack.c.0.s8 %v4689
    %v4691 = vlaneseq
    %v4692 = vshrl.u32 %v4691, 7
    %v4693 = vsub.s32 %v4690, %v4692
    %v4694 = vrot.slane %v4686, %v4693
    %v4696 = vunpack.c.l.s4 1983009808
    %v4697 = vunpack.c.0.s8 %v4696
    %v4698 = vlaneseq
    %v4699 = vshrl.u32 %v4698, 7
    %v4700 = vsub.s32 %v4697, %v4699
    %v4701 = vrot.slane %v4687, %v4700
    %v4702 = vcombine.low %v4694, %v4701
    %v4703 = vcombine.low %v1345, %v1352
    %v4704 = vcombine.low %v1359, %v1366
    %v4706 = vunpack.c.l.s4 1983009808
    %v4707 = vunpack.c.0.s8 %v4706
    %v4708 = vlaneseq
    %v4709 = vshrl.u32 %v4708, 7
    %v4710 = vsub.s32 %v4707, %v4709
    %v4711 = vrot.slane %v4703, %v4710
    %v4713 = vunpack.c.l.s4 1983009808
    %v4714 = vunpack.c.0.s8 %v4713
    %v4715 = vlaneseq
    %v4716 = vshrl.u32 %v4715, 7
    %v4717 = vsub.s32 %v4714, %v4716
    %v4718 = vrot.slane %v4704, %v4717
    %v4719 = vcombine.low %v4711, %v4718
    %v4720 = vcombine.low %v1373, %v1380
    %v4721 = vcombine.low %v1387, %v1394
    %v4723 = vunpack.c.l.s4 1983009808
    %v4724 = vunpack.c.0.s8 %v4723
    %v4725 = vlaneseq
    %v4726 = vshrl.u32 %v4725, 7
    %v4727 = vsub.s32 %v4724, %v4726
    %v4728 = vrot.slane %v4720, %v4727
    %v4730 = vunpack.c.l.s4 1983009808
    %v4731 = vunpack.c.0.s8 %v4730
    %v4732 = vlaneseq
    %v4733 = vshrl.u32 %v4732, 7
    %v4734 = vsub.s32 %v4731, %v4733
    %v4735 = vrot.slane %v4721, %v4734
    %v4736 = vcombine.low %v4728, %v4735
    %v4737 = vcombine.low %v1401, %v1408
    %v4738 = vcombine.low %v1415, %v1422
    %v4740 = vunpack.c.l.s4 1983009808
    %v4741 = vunpack.c.0.s8 %v4740
    %v4742 = vlaneseq
    %v4743 = vshrl.u32 %v4742, 7
    %v4744 = vsub.s32 %v4741, %v4743
    %v4745 = vrot.slane %v4737, %v4744
    %v4747 = vunpack.c.l.s4 1983009808
    %v4748 = vunpack.c.0.s8 %v4747
    %v4749 = vlaneseq
    %v4750 = vshrl.u32 %v4749, 7
    %v4751 = vsub.s32 %v4748, %v4750
    %v4752 = vrot.slane %v4738, %v4751
    %v4753 = vcombine.low %v4745, %v4752
    %v4754 = vcombine.low %v1429, %v1436
    %v4755 = vcombine.low %v1443, %v1450
    %v4757 = vunpack.c.l.s4 1983009808
    %v4758 = vunpack.c.0.s8 %v4757
    %v4759 = vlaneseq
    %v4760 = vshrl.u32 %v4759, 7
    %v4761 = vsub.s32 %v4758, %v4760
    %v4762 = vrot.slane %v4754, %v4761
    %v4764 = vunpack.c.l.s4 1983009808
    %v4765 = vunpack.c.0.s8 %v4764
    %v4766 = vlaneseq
    %v4767 = vshrl.u32 %v4766, 7
    %v4768 = vsub.s32 %v4765, %v4767
    %v4769 = vrot.slane %v4755, %v4768
    %v4770 = vcombine.low %v4762, %v4769
    %v4771 = vcombine.low %v1457, %v1464
    %v4772 = vcombine.low %v1471, %v1478
    %v4774 = vunpack.c.l.s4 1983009808
    %v4775 = vunpack.c.0.s8 %v4774
    %v4776 = vlaneseq
    %v4777 = vshrl.u32 %v4776, 7
    %v4778 = vsub.s32 %v4775, %v4777
    %v4779 = vrot.slane %v4771, %v4778
    %v4781 = vunpack.c.l.s4 1983009808
    %v4782 = vunpack.c.0.s8 %v4781
    %v4783 = vlaneseq
    %v4784 = vshrl.u32 %v4783, 7
    %v4785 = vsub.s32 %v4782, %v4784
    %v4786 = vrot.slane %v4772, %v4785
    %v4787 = vcombine.low %v4779, %v4786
    %v4788 = vcombine.low %v1485, %v1492
    %v4789 = vcombine.low %v1499, %v1506
    %v4791 = vunpack.c.l.s4 1983009808
    %v4792 = vunpack.c.0.s8 %v4791
    %v4793 = vlaneseq
    %v4794 = vshrl.u32 %v4793, 7
    %v4795 = vsub.s32 %v4792, %v4794
    %v4796 = vrot.slane %v4788, %v4795
    %v4798 = vunpack.c.l.s4 1983009808
    %v4799 = vunpack.c.0.s8 %v4798
    %v4800 = vlaneseq
    %v4801 = vshrl.u32 %v4800, 7
    %v4802 = vsub.s32 %v4799, %v4801
    %v4803 = vrot.slane %v4789, %v4802
    %v4804 = vcombine.low %v4796, %v4803
    %v4805 = vcombine.low %v1513, %v1520
    %v4806 = vcombine.low %v1527, %v1534
    %v4808 = vunpack.c.l.s4 1983009808
    %v4809 = vunpack.c.0.s8 %v4808
    %v4810 = vlaneseq
    %v4811 = vshrl.u32 %v4810, 7
    %v4812 = vsub.s32 %v4809, %v4811
    %v4813 = vrot.slane %v4805, %v4812
    %v4815 = vunpack.c.l.s4 1983009808
    %v4816 = vunpack.c.0.s8 %v4815
    %v4817 = vlaneseq
    %v4818 = vshrl.u32 %v4817, 7
    %v4819 = vsub.s32 %v4816, %v4818
    %v4820 = vrot.slane %v4806, %v4819
    %v4821 = vcombine.low %v4813, %v4820
    %v4822 = vcombine.low %v1541, %v1548
    %v4823 = vcombine.low %v1555, %v1562
    %v4825 = vunpack.c.l.s4 1983009808
    %v4826 = vunpack.c.0.s8 %v4825
    %v4827 = vlaneseq
    %v4828 = vshrl.u32 %v4827, 7
    %v4829 = vsub.s32 %v4826, %v4828
    %v4830 = vrot.slane %v4822, %v4829
    %v4832 = vunpack.c.l.s4 1983009808
    %v4833 = vunpack.c.0.s8 %v4832
    %v4834 = vlaneseq
    %v4835 = vshrl.u32 %v4834, 7
    %v4836 = vsub.s32 %v4833, %v4835
    %v4837 = vrot.slane %v4823, %v4836
    %v4838 = vcombine.low %v4830, %v4837
    %v4839 = vcombine.low %v1569, %v1576
    %v4840 = vcombine.low %v1583, %v1590
    %v4842 = vunpack.c.l.s4 1983009808
    %v4843 = vunpack.c.0.s8 %v4842
    %v4844 = vlaneseq
    %v4845 = vshrl.u32 %v4844, 7
    %v4846 = vsub.s32 %v4843, %v4845
    %v4847 = vrot.slane %v4839, %v4846
    %v4849 = vunpack.c.l.s4 1983009808
    %v4850 = vunpack.c.0.s8 %v4849
    %v4851 = vlaneseq
    %v4852 = vshrl.u32 %v4851, 7
    %v4853 = vsub.s32 %v4850, %v4852
    %v4854 = vrot.slane %v4840, %v4853
    %v4855 = vcombine.low %v4847, %v4854
    %v4856 = vcombine.low %v1597, %v1604
    %v4857 = vcombine.low %v1611, %v1618
    %v4859 = vunpack.c.l.s4 1983009808
    %v4860 = vunpack.c.0.s8 %v4859
    %v4861 = vlaneseq
    %v4862 = vshrl.u32 %v4861, 7
    %v4863 = vsub.s32 %v4860, %v4862
    %v4864 = vrot.slane %v4856, %v4863
    %v4866 = vunpack.c.l.s4 1983009808
    %v4867 = vunpack.c.0.s8 %v4866
    %v4868 = vlaneseq
    %v4869 = vshrl.u32 %v4868, 7
    %v4870 = vsub.s32 %v4867, %v4869
    %v4871 = vrot.slane %v4857, %v4870
    %v4872 = vcombine.low %v4864, %v4871
    %v4873 = vcombine.low %v1625, %v1632
    %v4874 = vcombine.low %v1639, %v1646
    %v4876 = vunpack.c.l.s4 1983009808
    %v4877 = vunpack.c.0.s8 %v4876
    %v4878 = vlaneseq
    %v4879 = vshrl.u32 %v4878, 7
    %v4880 = vsub.s32 %v4877, %v4879
    %v4881 = vrot.slane %v4873, %v4880
    %v4883 = vunpack.c.l.s4 1983009808
    %v4884 = vunpack.c.0.s8 %v4883
    %v4885 = vlaneseq
    %v4886 = vshrl.u32 %v4885, 7
    %v4887 = vsub.s32 %v4884, %v4886
    %v4888 = vrot.slane %v4874, %v4887
    %v4889 = vcombine.low %v4881, %v4888
    %v4890 = vcombine.low %v1653, %v1660
    %v4891 = vcombine.low %v1667, %v1674
    %v4893 = vunpack.c.l.s4 1983009808
    %v4894 = vunpack.c.0.s8 %v4893
    %v4895 = vlaneseq
    %v4896 = vshrl.u32 %v4895, 7
    %v4897 = vsub.s32 %v4894, %v4896
    %v4898 = vrot.slane %v4890, %v4897
    %v4900 = vunpack.c.l.s4 1983009808
    %v4901 = vunpack.c.0.s8 %v4900
    %v4902 = vlaneseq
    %v4903 = vshrl.u32 %v4902, 7
    %v4904 = vsub.s32 %v4901, %v4903
    %v4905 = vrot.slane %v4891, %v4904
    %v4906 = vcombine.low %v4898, %v4905
    %v4907 = vcombine.low %v1681, %v1688
    %v4908 = vcombine.low %v1695, %v1702
    %v4910 = vunpack.c.l.s4 1983009808
    %v4911 = vunpack.c.0.s8 %v4910
    %v4912 = vlaneseq
    %v4913 = vshrl.u32 %v4912, 7
    %v4914 = vsub.s32 %v4911, %v4913
    %v4915 = vrot.slane %v4907, %v4914
    %v4917 = vunpack.c.l.s4 1983009808
    %v4918 = vunpack.c.0.s8 %v4917
    %v4919 = vlaneseq
    %v4920 = vshrl.u32 %v4919, 7
    %v4921 = vsub.s32 %v4918, %v4920
    %v4922 = vrot.slane %v4908, %v4921
    %v4923 = vcombine.low %v4915, %v4922
    %v4924 = vcombine.low %v1709, %v1716
    %v4925 = vcombine.low %v1723, %v1730
    %v4927 = vunpack.c.l.s4 1983009808
    %v4928 = vunpack.c.0.s8 %v4927
    %v4929 = vlaneseq
    %v4930 = vshrl.u32 %v4929, 7
    %v4931 = vsub.s32 %v4928, %v4930
    %v4932 = vrot.slane %v4924, %v4931
    %v4934 = vunpack.c.l.s4 1983009808
    %v4935 = vunpack.c.0.s8 %v4934
    %v4936 = vlaneseq
    %v4937 = vshrl.u32 %v4936, 7
    %v4938 = vsub.s32 %v4935, %v4937
    %v4939 = vrot.slane %v4925, %v4938
    %v4940 = vcombine.low %v4932, %v4939
    %v4941 = vcombine.low %v1737, %v1744
    %v4942 = vcombine.low %v1751, %v1758
    %v4944 = vunpack.c.l.s4 1983009808
    %v4945 = vunpack.c.0.s8 %v4944
    %v4946 = vlaneseq
    %v4947 = vshrl.u32 %v4946, 7
    %v4948 = vsub.s32 %v4945, %v4947
    %v4949 = vrot.slane %v4941, %v4948
    %v4951 = vunpack.c.l.s4 1983009808
    %v4952 = vunpack.c.0.s8 %v4951
    %v4953 = vlaneseq
    %v4954 = vshrl.u32 %v4953, 7
    %v4955 = vsub.s32 %v4952, %v4954
    %v4956 = vrot.slane %v4942, %v4955
    %v4957 = vcombine.low %v4949, %v4956
    %v4958 = vcombine.low %v1765, %v1772
    %v4959 = vcombine.low %v1779, %v1786
    %v4961 = vunpack.c.l.s4 1983009808
    %v4962 = vunpack.c.0.s8 %v4961
    %v4963 = vlaneseq
    %v4964 = vshrl.u32 %v4963, 7
    %v4965 = vsub.s32 %v4962, %v4964
    %v4966 = vrot.slane %v4958, %v4965
    %v4968 = vunpack.c.l.s4 1983009808
    %v4969 = vunpack.c.0.s8 %v4968
    %v4970 = vlaneseq
    %v4971 = vshrl.u32 %v4970, 7
    %v4972 = vsub.s32 %v4969, %v4971
    %v4973 = vrot.slane %v4959, %v4972
    %v4974 = vcombine.low %v4966, %v4973
    %v4975 = vcombine.low %v1793, %v1800
    %v4976 = vcombine.low %v1807, %v1814
    %v4978 = vunpack.c.l.s4 1983009808
    %v4979 = vunpack.c.0.s8 %v4978
    %v4980 = vlaneseq
    %v4981 = vshrl.u32 %v4980, 7
    %v4982 = vsub.s32 %v4979, %v4981
    %v4983 = vrot.slane %v4975, %v4982
    %v4985 = vunpack.c.l.s4 1983009808
    %v4986 = vunpack.c.0.s8 %v4985
    %v4987 = vlaneseq
    %v4988 = vshrl.u32 %v4987, 7
    %v4989 = vsub.s32 %v4986, %v4988
    %v4990 = vrot.slane %v4976, %v4989
    %v4991 = vcombine.low %v4983, %v4990
    %v4992 = vcombine.low %v1821, %v1828
    %v4993 = vcombine.low %v1835, %v1842
    %v4995 = vunpack.c.l.s4 1983009808
    %v4996 = vunpack.c.0.s8 %v4995
    %v4997 = vlaneseq
    %v4998 = vshrl.u32 %v4997, 7
    %v4999 = vsub.s32 %v4996, %v4998
    %v5000 = vrot.slane %v4992, %v4999
    %v5002 = vunpack.c.l.s4 1983009808
    %v5003 = vunpack.c.0.s8 %v5002
    %v5004 = vlaneseq
    %v5005 = vshrl.u32 %v5004, 7
    %v5006 = vsub.s32 %v5003, %v5005
    %v5007 = vrot.slane %v4993, %v5006
    %v5008 = vcombine.low %v5000, %v5007
    %v5009 = vcombine.low %v1849, %v1856
    %v5010 = vcombine.low %v1863, %v1870
    %v5012 = vunpack.c.l.s4 1983009808
    %v5013 = vunpack.c.0.s8 %v5012
    %v5014 = vlaneseq
    %v5015 = vshrl.u32 %v5014, 7
    %v5016 = vsub.s32 %v5013, %v5015
    %v5017 = vrot.slane %v5009, %v5016
    %v5019 = vunpack.c.l.s4 1983009808
    %v5020 = vunpack.c.0.s8 %v5019
    %v5021 = vlaneseq
    %v5022 = vshrl.u32 %v5021, 7
    %v5023 = vsub.s32 %v5020, %v5022
    %v5024 = vrot.slane %v5010, %v5023
    %v5025 = vcombine.low %v5017, %v5024
    %v5026 = vcombine.low %v1877, %v1884
    %v5027 = vcombine.low %v1891, %v1898
    %v5029 = vunpack.c.l.s4 1983009808
    %v5030 = vunpack.c.0.s8 %v5029
    %v5031 = vlaneseq
    %v5032 = vshrl.u32 %v5031, 7
    %v5033 = vsub.s32 %v5030, %v5032
    %v5034 = vrot.slane %v5026, %v5033
    %v5036 = vunpack.c.l.s4 1983009808
    %v5037 = vunpack.c.0.s8 %v5036
    %v5038 = vlaneseq
    %v5039 = vshrl.u32 %v5038, 7
    %v5040 = vsub.s32 %v5037, %v5039
    %v5041 = vrot.slane %v5027, %v5040
    %v5042 = vcombine.low %v5034, %v5041
    %v5043 = vcombine.low %v1905, %v1912
    %v5044 = vcombine.low %v1919, %v1926
    %v5046 = vunpack.c.l.s4 1983009808
    %v5047 = vunpack.c.0.s8 %v5046
    %v5048 = vlaneseq
    %v5049 = vshrl.u32 %v5048, 7
    %v5050 = vsub.s32 %v5047, %v5049
    %v5051 = vrot.slane %v5043, %v5050
    %v5053 = vunpack.c.l.s4 1983009808
    %v5054 = vunpack.c.0.s8 %v5053
    %v5055 = vlaneseq
    %v5056 = vshrl.u32 %v5055, 7
    %v5057 = vsub.s32 %v5054, %v5056
    %v5058 = vrot.slane %v5044, %v5057
    %v5059 = vcombine.low %v5051, %v5058
    %v5060 = vcombine.low %v1933, %v1940
    %v5061 = vcombine.low %v1947, %v1954
    %v5063 = vunpack.c.l.s4 1983009808
    %v5064 = vunpack.c.0.s8 %v5063
    %v5065 = vlaneseq
    %v5066 = vshrl.u32 %v5065, 7
    %v5067 = vsub.s32 %v5064, %v5066
    %v5068 = vrot.slane %v5060, %v5067
    %v5070 = vunpack.c.l.s4 1983009808
    %v5071 = vunpack.c.0.s8 %v5070
    %v5072 = vlaneseq
    %v5073 = vshrl.u32 %v5072, 7
    %v5074 = vsub.s32 %v5071, %v5073
    %v5075 = vrot.slane %v5061, %v5074
    %v5076 = vcombine.low %v5068, %v5075
    %v5077 = vcombine.low %v1961, %v1968
    %v5078 = vcombine.low %v1975, %v1982
    %v5080 = vunpack.c.l.s4 1983009808
    %v5081 = vunpack.c.0.s8 %v5080
    %v5082 = vlaneseq
    %v5083 = vshrl.u32 %v5082, 7
    %v5084 = vsub.s32 %v5081, %v5083
    %v5085 = vrot.slane %v5077, %v5084
    %v5087 = vunpack.c.l.s4 1983009808
    %v5088 = vunpack.c.0.s8 %v5087
    %v5089 = vlaneseq
    %v5090 = vshrl.u32 %v5089, 7
    %v5091 = vsub.s32 %v5088, %v5090
    %v5092 = vrot.slane %v5078, %v5091
    %v5093 = vcombine.low %v5085, %v5092
    %v5094 = vcombine.low %v1989, %v1996
    %v5095 = vcombine.low %v2003, %v2010
    %v5097 = vunpack.c.l.s4 1983009808
    %v5098 = vunpack.c.0.s8 %v5097
    %v5099 = vlaneseq
    %v5100 = vshrl.u32 %v5099, 7
    %v5101 = vsub.s32 %v5098, %v5100
    %v5102 = vrot.slane %v5094, %v5101
    %v5104 = vunpack.c.l.s4 1983009808
    %v5105 = vunpack.c.0.s8 %v5104
    %v5106 = vlaneseq
    %v5107 = vshrl.u32 %v5106, 7
    %v5108 = vsub.s32 %v5105, %v5107
    %v5109 = vrot.slane %v5095, %v5108
    %v5110 = vcombine.low %v5102, %v5109
    %v5111 = vcombine.low %v2017, %v2024
    %v5112 = vcombine.low %v2031, %v2038
    %v5114 = vunpack.c.l.s4 1983009808
    %v5115 = vunpack.c.0.s8 %v5114
    %v5116 = vlaneseq
    %v5117 = vshrl.u32 %v5116, 7
    %v5118 = vsub.s32 %v5115, %v5117
    %v5119 = vrot.slane %v5111, %v5118
    %v5121 = vunpack.c.l.s4 1983009808
    %v5122 = vunpack.c.0.s8 %v5121
    %v5123 = vlaneseq
    %v5124 = vshrl.u32 %v5123, 7
    %v5125 = vsub.s32 %v5122, %v5124
    %v5126 = vrot.slane %v5112, %v5125
    %v5127 = vcombine.low %v5119, %v5126
    %v5128 = vcombine.low %v2045, %v2052
    %v5129 = vcombine.low %v2059, %v2066
    %v5131 = vunpack.c.l.s4 1983009808
    %v5132 = vunpack.c.0.s8 %v5131
    %v5133 = vlaneseq
    %v5134 = vshrl.u32 %v5133, 7
    %v5135 = vsub.s32 %v5132, %v5134
    %v5136 = vrot.slane %v5128, %v5135
    %v5138 = vunpack.c.l.s4 1983009808
    %v5139 = vunpack.c.0.s8 %v5138
    %v5140 = vlaneseq
    %v5141 = vshrl.u32 %v5140, 7
    %v5142 = vsub.s32 %v5139, %v5141
    %v5143 = vrot.slane %v5129, %v5142
    %v5144 = vcombine.low %v5136, %v5143
    %v5145 = vcombine.low %v2073, %v2080
    %v5146 = vcombine.low %v2087, %v2094
    %v5148 = vunpack.c.l.s4 1983009808
    %v5149 = vunpack.c.0.s8 %v5148
    %v5150 = vlaneseq
    %v5151 = vshrl.u32 %v5150, 7
    %v5152 = vsub.s32 %v5149, %v5151
    %v5153 = vrot.slane %v5145, %v5152
    %v5155 = vunpack.c.l.s4 1983009808
    %v5156 = vunpack.c.0.s8 %v5155
    %v5157 = vlaneseq
    %v5158 = vshrl.u32 %v5157, 7
    %v5159 = vsub.s32 %v5156, %v5158
    %v5160 = vrot.slane %v5146, %v5159
    %v5161 = vcombine.low %v5153, %v5160
    %v5162 = vcombine.low %v2101, %v2108
    %v5163 = vcombine.low %v2115, %v2122
    %v5165 = vunpack.c.l.s4 1983009808
    %v5166 = vunpack.c.0.s8 %v5165
    %v5167 = vlaneseq
    %v5168 = vshrl.u32 %v5167, 7
    %v5169 = vsub.s32 %v5166, %v5168
    %v5170 = vrot.slane %v5162, %v5169
    %v5172 = vunpack.c.l.s4 1983009808
    %v5173 = vunpack.c.0.s8 %v5172
    %v5174 = vlaneseq
    %v5175 = vshrl.u32 %v5174, 7
    %v5176 = vsub.s32 %v5173, %v5175
    %v5177 = vrot.slane %v5163, %v5176
    %v5178 = vcombine.low %v5170, %v5177
    %v5179 = vcombine.low %v2129, %v2136
    %v5180 = vcombine.low %v2143, %v2150
    %v5182 = vunpack.c.l.s4 1983009808
    %v5183 = vunpack.c.0.s8 %v5182
    %v5184 = vlaneseq
    %v5185 = vshrl.u32 %v5184, 7
    %v5186 = vsub.s32 %v5183, %v5185
    %v5187 = vrot.slane %v5179, %v5186
    %v5189 = vunpack.c.l.s4 1983009808
    %v5190 = vunpack.c.0.s8 %v5189
    %v5191 = vlaneseq
    %v5192 = vshrl.u32 %v5191, 7
    %v5193 = vsub.s32 %v5190, %v5192
    %v5194 = vrot.slane %v5180, %v5193
    %v5195 = vcombine.low %v5187, %v5194
    %v5196 = vcombine.low %v2157, %v2164
    %v5197 = vcombine.low %v2171, %v2178
    %v5199 = vunpack.c.l.s4 1983009808
    %v5200 = vunpack.c.0.s8 %v5199
    %v5201 = vlaneseq
    %v5202 = vshrl.u32 %v5201, 7
    %v5203 = vsub.s32 %v5200, %v5202
    %v5204 = vrot.slane %v5196, %v5203
    %v5206 = vunpack.c.l.s4 1983009808
    %v5207 = vunpack.c.0.s8 %v5206
    %v5208 = vlaneseq
    %v5209 = vshrl.u32 %v5208, 7
    %v5210 = vsub.s32 %v5207, %v5209
    %v5211 = vrot.slane %v5197, %v5210
    %v5212 = vcombine.low %v5204, %v5211
    %v5213 = vcombine.low %v2185, %v2192
    %v5214 = vcombine.low %v2199, %v2206
    %v5216 = vunpack.c.l.s4 1983009808
    %v5217 = vunpack.c.0.s8 %v5216
    %v5218 = vlaneseq
    %v5219 = vshrl.u32 %v5218, 7
    %v5220 = vsub.s32 %v5217, %v5219
    %v5221 = vrot.slane %v5213, %v5220
    %v5223 = vunpack.c.l.s4 1983009808
    %v5224 = vunpack.c.0.s8 %v5223
    %v5225 = vlaneseq
    %v5226 = vshrl.u32 %v5225, 7
    %v5227 = vsub.s32 %v5224, %v5226
    %v5228 = vrot.slane %v5214, %v5227
    %v5229 = vcombine.low %v5221, %v5228
    %v5230 = vcombine.low %v2213, %v2220
    %v5231 = vcombine.low %v2227, %v2234
    %v5233 = vunpack.c.l.s4 1983009808
    %v5234 = vunpack.c.0.s8 %v5233
    %v5235 = vlaneseq
    %v5236 = vshrl.u32 %v5235, 7
    %v5237 = vsub.s32 %v5234, %v5236
    %v5238 = vrot.slane %v5230, %v5237
    %v5240 = vunpack.c.l.s4 1983009808
    %v5241 = vunpack.c.0.s8 %v5240
    %v5242 = vlaneseq
    %v5243 = vshrl.u32 %v5242, 7
    %v5244 = vsub.s32 %v5241, %v5243
    %v5245 = vrot.slane %v5231, %v5244
    %v5246 = vcombine.low %v5238, %v5245
    %v5247 = vcombine.low %v2241, %v2248
    %v5248 = vcombine.low %v2255, %v2262
    %v5250 = vunpack.c.l.s4 1983009808
    %v5251 = vunpack.c.0.s8 %v5250
    %v5252 = vlaneseq
    %v5253 = vshrl.u32 %v5252, 7
    %v5254 = vsub.s32 %v5251, %v5253
    %v5255 = vrot.slane %v5247, %v5254
    %v5257 = vunpack.c.l.s4 1983009808
    %v5258 = vunpack.c.0.s8 %v5257
    %v5259 = vlaneseq
    %v5260 = vshrl.u32 %v5259, 7
    %v5261 = vsub.s32 %v5258, %v5260
    %v5262 = vrot.slane %v5248, %v5261
    %v5263 = vcombine.low %v5255, %v5262
    %v5264 = vcombine.low %v2269, %v2276
    %v5265 = vcombine.low %v2283, %v2290
    %v5267 = vunpack.c.l.s4 1983009808
    %v5268 = vunpack.c.0.s8 %v5267
    %v5269 = vlaneseq
    %v5270 = vshrl.u32 %v5269, 7
    %v5271 = vsub.s32 %v5268, %v5270
    %v5272 = vrot.slane %v5264, %v5271
    %v5274 = vunpack.c.l.s4 1983009808
    %v5275 = vunpack.c.0.s8 %v5274
    %v5276 = vlaneseq
    %v5277 = vshrl.u32 %v5276, 7
    %v5278 = vsub.s32 %v5275, %v5277
    %v5279 = vrot.slane %v5265, %v5278
    %v5280 = vcombine.low %v5272, %v5279
    %v5281 = vcombine.low %v2297, %v2304
    %v5282 = vcombine.low %v2311, %v2318
    %v5284 = vunpack.c.l.s4 1983009808
    %v5285 = vunpack.c.0.s8 %v5284
    %v5286 = vlaneseq
    %v5287 = vshrl.u32 %v5286, 7
    %v5288 = vsub.s32 %v5285, %v5287
    %v5289 = vrot.slane %v5281, %v5288
    %v5291 = vunpack.c.l.s4 1983009808
    %v5292 = vunpack.c.0.s8 %v5291
    %v5293 = vlaneseq
    %v5294 = vshrl.u32 %v5293, 7
    %v5295 = vsub.s32 %v5292, %v5294
    %v5296 = vrot.slane %v5282, %v5295
    %v5297 = vcombine.low %v5289, %v5296
    %v5298 = vcombine.low %v2325, %v2332
    %v5299 = vcombine.low %v2339, %v2346
    %v5301 = vunpack.c.l.s4 1983009808
    %v5302 = vunpack.c.0.s8 %v5301
    %v5303 = vlaneseq
    %v5304 = vshrl.u32 %v5303, 7
    %v5305 = vsub.s32 %v5302, %v5304
    %v5306 = vrot.slane %v5298, %v5305
    %v5308 = vunpack.c.l.s4 1983009808
    %v5309 = vunpack.c.0.s8 %v5308
    %v5310 = vlaneseq
    %v5311 = vshrl.u32 %v5310, 7
    %v5312 = vsub.s32 %v5309, %v5311
    %v5313 = vrot.slane %v5299, %v5312
    %v5314 = vcombine.low %v5306, %v5313
    %v5315 = vcombine.low %v2353, %v2360
    %v5316 = vcombine.low %v2367, %v2374
    %v5318 = vunpack.c.l.s4 1983009808
    %v5319 = vunpack.c.0.s8 %v5318
    %v5320 = vlaneseq
    %v5321 = vshrl.u32 %v5320, 7
    %v5322 = vsub.s32 %v5319, %v5321
    %v5323 = vrot.slane %v5315, %v5322
    %v5325 = vunpack.c.l.s4 1983009808
    %v5326 = vunpack.c.0.s8 %v5325
    %v5327 = vlaneseq
    %v5328 = vshrl.u32 %v5327, 7
    %v5329 = vsub.s32 %v5326, %v5328
    %v5330 = vrot.slane %v5316, %v5329
    %v5331 = vcombine.low %v5323, %v5330
    %v5332 = vcombine.low %v2381, %v2388
    %v5333 = vcombine.low %v2395, %v2402
    %v5335 = vunpack.c.l.s4 1983009808
    %v5336 = vunpack.c.0.s8 %v5335
    %v5337 = vlaneseq
    %v5338 = vshrl.u32 %v5337, 7
    %v5339 = vsub.s32 %v5336, %v5338
    %v5340 = vrot.slane %v5332, %v5339
    %v5342 = vunpack.c.l.s4 1983009808
    %v5343 = vunpack.c.0.s8 %v5342
    %v5344 = vlaneseq
    %v5345 = vshrl.u32 %v5344, 7
    %v5346 = vsub.s32 %v5343, %v5345
    %v5347 = vrot.slane %v5333, %v5346
    %v5348 = vcombine.low %v5340, %v5347
    %v5349 = vcombine.low %v2409, %v2416
    %v5350 = vcombine.low %v2423, %v2430
    %v5352 = vunpack.c.l.s4 1983009808
    %v5353 = vunpack.c.0.s8 %v5352
    %v5354 = vlaneseq
    %v5355 = vshrl.u32 %v5354, 7
    %v5356 = vsub.s32 %v5353, %v5355
    %v5357 = vrot.slane %v5349, %v5356
    %v5359 = vunpack.c.l.s4 1983009808
    %v5360 = vunpack.c.0.s8 %v5359
    %v5361 = vlaneseq
    %v5362 = vshrl.u32 %v5361, 7
    %v5363 = vsub.s32 %v5360, %v5362
    %v5364 = vrot.slane %v5350, %v5363
    %v5365 = vcombine.low %v5357, %v5364
    %v5366 = vcombine.low %v2437, %v2444
    %v5367 = vcombine.low %v2451, %v2458
    %v5369 = vunpack.c.l.s4 1983009808
    %v5370 = vunpack.c.0.s8 %v5369
    %v5371 = vlaneseq
    %v5372 = vshrl.u32 %v5371, 7
    %v5373 = vsub.s32 %v5370, %v5372
    %v5374 = vrot.slane %v5366, %v5373
    %v5376 = vunpack.c.l.s4 1983009808
    %v5377 = vunpack.c.0.s8 %v5376
    %v5378 = vlaneseq
    %v5379 = vshrl.u32 %v5378, 7
    %v5380 = vsub.s32 %v5377, %v5379
    %v5381 = vrot.slane %v5367, %v5380
    %v5382 = vcombine.low %v5374, %v5381
    %v5383 = vcombine.low %v2465, %v2472
    %v5384 = vcombine.low %v2479, %v2486
    %v5386 = vunpack.c.l.s4 1983009808
    %v5387 = vunpack.c.0.s8 %v5386
    %v5388 = vlaneseq
    %v5389 = vshrl.u32 %v5388, 7
    %v5390 = vsub.s32 %v5387, %v5389
    %v5391 = vrot.slane %v5383, %v5390
    %v5393 = vunpack.c.l.s4 1983009808
    %v5394 = vunpack.c.0.s8 %v5393
    %v5395 = vlaneseq
    %v5396 = vshrl.u32 %v5395, 7
    %v5397 = vsub.s32 %v5394, %v5396
    %v5398 = vrot.slane %v5384, %v5397
    %v5399 = vcombine.low %v5391, %v5398
    %v5400 = vcombine.low %v2493, %v2500
    %v5401 = vcombine.low %v2507, %v2514
    %v5403 = vunpack.c.l.s4 1983009808
    %v5404 = vunpack.c.0.s8 %v5403
    %v5405 = vlaneseq
    %v5406 = vshrl.u32 %v5405, 7
    %v5407 = vsub.s32 %v5404, %v5406
    %v5408 = vrot.slane %v5400, %v5407
    %v5410 = vunpack.c.l.s4 1983009808
    %v5411 = vunpack.c.0.s8 %v5410
    %v5412 = vlaneseq
    %v5413 = vshrl.u32 %v5412, 7
    %v5414 = vsub.s32 %v5411, %v5413
    %v5415 = vrot.slane %v5401, %v5414
    %v5416 = vcombine.low %v5408, %v5415
    %v5417 = vcombine.low %v2521, %v2528
    %v5418 = vcombine.low %v2535, %v2542
    %v5420 = vunpack.c.l.s4 1983009808
    %v5421 = vunpack.c.0.s8 %v5420
    %v5422 = vlaneseq
    %v5423 = vshrl.u32 %v5422, 7
    %v5424 = vsub.s32 %v5421, %v5423
    %v5425 = vrot.slane %v5417, %v5424
    %v5427 = vunpack.c.l.s4 1983009808
    %v5428 = vunpack.c.0.s8 %v5427
    %v5429 = vlaneseq
    %v5430 = vshrl.u32 %v5429, 7
    %v5431 = vsub.s32 %v5428, %v5430
    %v5432 = vrot.slane %v5418, %v5431
    %v5433 = vcombine.low %v5425, %v5432
    %v5434 = vcombine.low %v2549, %v2556
    %v5435 = vcombine.low %v2563, %v2570
    %v5437 = vunpack.c.l.s4 1983009808
    %v5438 = vunpack.c.0.s8 %v5437
    %v5439 = vlaneseq
    %v5440 = vshrl.u32 %v5439, 7
    %v5441 = vsub.s32 %v5438, %v5440
    %v5442 = vrot.slane %v5434, %v5441
    %v5444 = vunpack.c.l.s4 1983009808
    %v5445 = vunpack.c.0.s8 %v5444
    %v5446 = vlaneseq
    %v5447 = vshrl.u32 %v5446, 7
    %v5448 = vsub.s32 %v5445, %v5447
    %v5449 = vrot.slane %v5435, %v5448
    %v5450 = vcombine.low %v5442, %v5449
    %v5451 = vcombine.low %v2577, %v2584
    %v5452 = vcombine.low %v2591, %v2598
    %v5454 = vunpack.c.l.s4 1983009808
    %v5455 = vunpack.c.0.s8 %v5454
    %v5456 = vlaneseq
    %v5457 = vshrl.u32 %v5456, 7
    %v5458 = vsub.s32 %v5455, %v5457
    %v5459 = vrot.slane %v5451, %v5458
    %v5461 = vunpack.c.l.s4 1983009808
    %v5462 = vunpack.c.0.s8 %v5461
    %v5463 = vlaneseq
    %v5464 = vshrl.u32 %v5463, 7
    %v5465 = vsub.s32 %v5462, %v5464
    %v5466 = vrot.slane %v5452, %v5465
    %v5467 = vcombine.low %v5459, %v5466
    %v5468 = vcombine.low %v2605, %v2612
    %v5469 = vcombine.low %v2619, %v2626
    %v5471 = vunpack.c.l.s4 1983009808
    %v5472 = vunpack.c.0.s8 %v5471
    %v5473 = vlaneseq
    %v5474 = vshrl.u32 %v5473, 7
    %v5475 = vsub.s32 %v5472, %v5474
    %v5476 = vrot.slane %v5468, %v5475
    %v5478 = vunpack.c.l.s4 1983009808
    %v5479 = vunpack.c.0.s8 %v5478
    %v5480 = vlaneseq
    %v5481 = vshrl.u32 %v5480, 7
    %v5482 = vsub.s32 %v5479, %v5481
    %v5483 = vrot.slane %v5469, %v5482
    %v5484 = vcombine.low %v5476, %v5483
    %v5485 = vcombine.low %v2633, %v2640
    %v5486 = vcombine.low %v2647, %v2654
    %v5488 = vunpack.c.l.s4 1983009808
    %v5489 = vunpack.c.0.s8 %v5488
    %v5490 = vlaneseq
    %v5491 = vshrl.u32 %v5490, 7
    %v5492 = vsub.s32 %v5489, %v5491
    %v5493 = vrot.slane %v5485, %v5492
    %v5495 = vunpack.c.l.s4 1983009808
    %v5496 = vunpack.c.0.s8 %v5495
    %v5497 = vlaneseq
    %v5498 = vshrl.u32 %v5497, 7
    %v5499 = vsub.s32 %v5496, %v5498
    %v5500 = vrot.slane %v5486, %v5499
    %v5501 = vcombine.low %v5493, %v5500
    %v5502 = vcombine.low %v2661, %v2668
    %v5503 = vcombine.low %v2675, %v2682
    %v5505 = vunpack.c.l.s4 1983009808
    %v5506 = vunpack.c.0.s8 %v5505
    %v5507 = vlaneseq
    %v5508 = vshrl.u32 %v5507, 7
    %v5509 = vsub.s32 %v5506, %v5508
    %v5510 = vrot.slane %v5502, %v5509
    %v5512 = vunpack.c.l.s4 1983009808
    %v5513 = vunpack.c.0.s8 %v5512
    %v5514 = vlaneseq
    %v5515 = vshrl.u32 %v5514, 7
    %v5516 = vsub.s32 %v5513, %v5515
    %v5517 = vrot.slane %v5503, %v5516
    %v5518 = vcombine.low %v5510, %v5517
    %v5519 = vcombine.low %v2689, %v2696
    %v5520 = vcombine.low %v2703, %v2710
    %v5522 = vunpack.c.l.s4 1983009808
    %v5523 = vunpack.c.0.s8 %v5522
    %v5524 = vlaneseq
    %v5525 = vshrl.u32 %v5524, 7
    %v5526 = vsub.s32 %v5523, %v5525
    %v5527 = vrot.slane %v5519, %v5526
    %v5529 = vunpack.c.l.s4 1983009808
    %v5530 = vunpack.c.0.s8 %v5529
    %v5531 = vlaneseq
    %v5532 = vshrl.u32 %v5531, 7
    %v5533 = vsub.s32 %v5530, %v5532
    %v5534 = vrot.slane %v5520, %v5533
    %v5535 = vcombine.low %v5527, %v5534
    %v5536 = vcombine.low %v2717, %v2724
    %v5537 = vcombine.low %v2731, %v2738
    %v5539 = vunpack.c.l.s4 1983009808
    %v5540 = vunpack.c.0.s8 %v5539
    %v5541 = vlaneseq
    %v5542 = vshrl.u32 %v5541, 7
    %v5543 = vsub.s32 %v5540, %v5542
    %v5544 = vrot.slane %v5536, %v5543
    %v5546 = vunpack.c.l.s4 1983009808
    %v5547 = vunpack.c.0.s8 %v5546
    %v5548 = vlaneseq
    %v5549 = vshrl.u32 %v5548, 7
    %v5550 = vsub.s32 %v5547, %v5549
    %v5551 = vrot.slane %v5537, %v5550
    %v5552 = vcombine.low %v5544, %v5551
    %v5553 = vcombine.low %v2745, %v2752
    %v5554 = vcombine.low %v2759, %v2766
    %v5556 = vunpack.c.l.s4 1983009808
    %v5557 = vunpack.c.0.s8 %v5556
    %v5558 = vlaneseq
    %v5559 = vshrl.u32 %v5558, 7
    %v5560 = vsub.s32 %v5557, %v5559
    %v5561 = vrot.slane %v5553, %v5560
    %v5563 = vunpack.c.l.s4 1983009808
    %v5564 = vunpack.c.0.s8 %v5563
    %v5565 = vlaneseq
    %v5566 = vshrl.u32 %v5565, 7
    %v5567 = vsub.s32 %v5564, %v5566
    %v5568 = vrot.slane %v5554, %v5567
    %v5569 = vcombine.low %v5561, %v5568
    %v5570 = vcombine.low %v2773, %v2780
    %v5571 = vcombine.low %v2787, %v2794
    %v5573 = vunpack.c.l.s4 1983009808
    %v5574 = vunpack.c.0.s8 %v5573
    %v5575 = vlaneseq
    %v5576 = vshrl.u32 %v5575, 7
    %v5577 = vsub.s32 %v5574, %v5576
    %v5578 = vrot.slane %v5570, %v5577
    %v5580 = vunpack.c.l.s4 1983009808
    %v5581 = vunpack.c.0.s8 %v5580
    %v5582 = vlaneseq
    %v5583 = vshrl.u32 %v5582, 7
    %v5584 = vsub.s32 %v5581, %v5583
    %v5585 = vrot.slane %v5571, %v5584
    %v5586 = vcombine.low %v5578, %v5585
    %v5587 = vcombine.low %v2801, %v2808
    %v5588 = vcombine.low %v2815, %v2822
    %v5590 = vunpack.c.l.s4 1983009808
    %v5591 = vunpack.c.0.s8 %v5590
    %v5592 = vlaneseq
    %v5593 = vshrl.u32 %v5592, 7
    %v5594 = vsub.s32 %v5591, %v5593
    %v5595 = vrot.slane %v5587, %v5594
    %v5597 = vunpack.c.l.s4 1983009808
    %v5598 = vunpack.c.0.s8 %v5597
    %v5599 = vlaneseq
    %v5600 = vshrl.u32 %v5599, 7
    %v5601 = vsub.s32 %v5598, %v5600
    %v5602 = vrot.slane %v5588, %v5601
    %v5603 = vcombine.low %v5595, %v5602
    %v5604 = vcombine.low %v2829, %v2836
    %v5605 = vcombine.low %v2843, %v2850
    %v5607 = vunpack.c.l.s4 1983009808
    %v5608 = vunpack.c.0.s8 %v5607
    %v5609 = vlaneseq
    %v5610 = vshrl.u32 %v5609, 7
    %v5611 = vsub.s32 %v5608, %v5610
    %v5612 = vrot.slane %v5604, %v5611
    %v5614 = vunpack.c.l.s4 1983009808
    %v5615 = vunpack.c.0.s8 %v5614
    %v5616 = vlaneseq
    %v5617 = vshrl.u32 %v5616, 7
    %v5618 = vsub.s32 %v5615, %v5617
    %v5619 = vrot.slane %v5605, %v5618
    %v5620 = vcombine.low %v5612, %v5619
    %v5621 = vcombine.low %v2857, %v2864
    %v5622 = vcombine.low %v2871, %v2878
    %v5624 = vunpack.c.l.s4 1983009808
    %v5625 = vunpack.c.0.s8 %v5624
    %v5626 = vlaneseq
    %v5627 = vshrl.u32 %v5626, 7
    %v5628 = vsub.s32 %v5625, %v5627
    %v5629 = vrot.slane %v5621, %v5628
    %v5631 = vunpack.c.l.s4 1983009808
    %v5632 = vunpack.c.0.s8 %v5631
    %v5633 = vlaneseq
    %v5634 = vshrl.u32 %v5633, 7
    %v5635 = vsub.s32 %v5632, %v5634
    %v5636 = vrot.slane %v5622, %v5635
    %v5637 = vcombine.low %v5629, %v5636
    %v5638 = vcombine.low %v2885, %v2892
    %v5639 = vcombine.low %v2899, %v2906
    %v5641 = vunpack.c.l.s4 1983009808
    %v5642 = vunpack.c.0.s8 %v5641
    %v5643 = vlaneseq
    %v5644 = vshrl.u32 %v5643, 7
    %v5645 = vsub.s32 %v5642, %v5644
    %v5646 = vrot.slane %v5638, %v5645
    %v5648 = vunpack.c.l.s4 1983009808
    %v5649 = vunpack.c.0.s8 %v5648
    %v5650 = vlaneseq
    %v5651 = vshrl.u32 %v5650, 7
    %v5652 = vsub.s32 %v5649, %v5651
    %v5653 = vrot.slane %v5639, %v5652
    %v5654 = vcombine.low %v5646, %v5653
    %v5655 = vcombine.low %v2913, %v2920
    %v5656 = vcombine.low %v2927, %v2934
    %v5658 = vunpack.c.l.s4 1983009808
    %v5659 = vunpack.c.0.s8 %v5658
    %v5660 = vlaneseq
    %v5661 = vshrl.u32 %v5660, 7
    %v5662 = vsub.s32 %v5659, %v5661
    %v5663 = vrot.slane %v5655, %v5662
    %v5665 = vunpack.c.l.s4 1983009808
    %v5666 = vunpack.c.0.s8 %v5665
    %v5667 = vlaneseq
    %v5668 = vshrl.u32 %v5667, 7
    %v5669 = vsub.s32 %v5666, %v5668
    %v5670 = vrot.slane %v5656, %v5669
    %v5671 = vcombine.low %v5663, %v5670
    %v5672 = vcombine.low %v2941, %v2948
    %v5673 = vcombine.low %v2955, %v2962
    %v5675 = vunpack.c.l.s4 1983009808
    %v5676 = vunpack.c.0.s8 %v5675
    %v5677 = vlaneseq
    %v5678 = vshrl.u32 %v5677, 7
    %v5679 = vsub.s32 %v5676, %v5678
    %v5680 = vrot.slane %v5672, %v5679
    %v5682 = vunpack.c.l.s4 1983009808
    %v5683 = vunpack.c.0.s8 %v5682
    %v5684 = vlaneseq
    %v5685 = vshrl.u32 %v5684, 7
    %v5686 = vsub.s32 %v5683, %v5685
    %v5687 = vrot.slane %v5673, %v5686
    %v5688 = vcombine.low %v5680, %v5687
    %v5689 = vcombine.low %v2969, %v2976
    %v5690 = vcombine.low %v2983, %v2990
    %v5692 = vunpack.c.l.s4 1983009808
    %v5693 = vunpack.c.0.s8 %v5692
    %v5694 = vlaneseq
    %v5695 = vshrl.u32 %v5694, 7
    %v5696 = vsub.s32 %v5693, %v5695
    %v5697 = vrot.slane %v5689, %v5696
    %v5699 = vunpack.c.l.s4 1983009808
    %v5700 = vunpack.c.0.s8 %v5699
    %v5701 = vlaneseq
    %v5702 = vshrl.u32 %v5701, 7
    %v5703 = vsub.s32 %v5700, %v5702
    %v5704 = vrot.slane %v5690, %v5703
    %v5705 = vcombine.low %v5697, %v5704
    %v5706 = vcombine.low %v2997, %v3004
    %v5707 = vcombine.low %v3011, %v3018
    %v5709 = vunpack.c.l.s4 1983009808
    %v5710 = vunpack.c.0.s8 %v5709
    %v5711 = vlaneseq
    %v5712 = vshrl.u32 %v5711, 7
    %v5713 = vsub.s32 %v5710, %v5712
    %v5714 = vrot.slane %v5706, %v5713
    %v5716 = vunpack.c.l.s4 1983009808
    %v5717 = vunpack.c.0.s8 %v5716
    %v5718 = vlaneseq
    %v5719 = vshrl.u32 %v5718, 7
    %v5720 = vsub.s32 %v5717, %v5719
    %v5721 = vrot.slane %v5707, %v5720
    %v5722 = vcombine.low %v5714, %v5721
    %v5723 = vcombine.low %v3025, %v3032
    %v5724 = vcombine.low %v3039, %v3046
    %v5726 = vunpack.c.l.s4 1983009808
    %v5727 = vunpack.c.0.s8 %v5726
    %v5728 = vlaneseq
    %v5729 = vshrl.u32 %v5728, 7
    %v5730 = vsub.s32 %v5727, %v5729
    %v5731 = vrot.slane %v5723, %v5730
    %v5733 = vunpack.c.l.s4 1983009808
    %v5734 = vunpack.c.0.s8 %v5733
    %v5735 = vlaneseq
    %v5736 = vshrl.u32 %v5735, 7
    %v5737 = vsub.s32 %v5734, %v5736
    %v5738 = vrot.slane %v5724, %v5737
    %v5739 = vcombine.low %v5731, %v5738
    %v5740 = vcombine.low %v3053, %v3060
    %v5741 = vcombine.low %v3067, %v3074
    %v5743 = vunpack.c.l.s4 1983009808
    %v5744 = vunpack.c.0.s8 %v5743
    %v5745 = vlaneseq
    %v5746 = vshrl.u32 %v5745, 7
    %v5747 = vsub.s32 %v5744, %v5746
    %v5748 = vrot.slane %v5740, %v5747
    %v5750 = vunpack.c.l.s4 1983009808
    %v5751 = vunpack.c.0.s8 %v5750
    %v5752 = vlaneseq
    %v5753 = vshrl.u32 %v5752, 7
    %v5754 = vsub.s32 %v5751, %v5753
    %v5755 = vrot.slane %v5741, %v5754
    %v5756 = vcombine.low %v5748, %v5755
    %v5757 = vcombine.low %v3081, %v3088
    %v5758 = vcombine.low %v3095, %v3102
    %v5760 = vunpack.c.l.s4 1983009808
    %v5761 = vunpack.c.0.s8 %v5760
    %v5762 = vlaneseq
    %v5763 = vshrl.u32 %v5762, 7
    %v5764 = vsub.s32 %v5761, %v5763
    %v5765 = vrot.slane %v5757, %v5764
    %v5767 = vunpack.c.l.s4 1983009808
    %v5768 = vunpack.c.0.s8 %v5767
    %v5769 = vlaneseq
    %v5770 = vshrl.u32 %v5769, 7
    %v5771 = vsub.s32 %v5768, %v5770
    %v5772 = vrot.slane %v5758, %v5771
    %v5773 = vcombine.low %v5765, %v5772
    %v5774 = vcombine.low %v3109, %v3116
    %v5775 = vcombine.low %v3123, %v3130
    %v5777 = vunpack.c.l.s4 1983009808
    %v5778 = vunpack.c.0.s8 %v5777
    %v5779 = vlaneseq
    %v5780 = vshrl.u32 %v5779, 7
    %v5781 = vsub.s32 %v5778, %v5780
    %v5782 = vrot.slane %v5774, %v5781
    %v5784 = vunpack.c.l.s4 1983009808
    %v5785 = vunpack.c.0.s8 %v5784
    %v5786 = vlaneseq
    %v5787 = vshrl.u32 %v5786, 7
    %v5788 = vsub.s32 %v5785, %v5787
    %v5789 = vrot.slane %v5775, %v5788
    %v5790 = vcombine.low %v5782, %v5789
    %v5791 = vcombine.low %v3137, %v3144
    %v5792 = vcombine.low %v3151, %v3158
    %v5794 = vunpack.c.l.s4 1983009808
    %v5795 = vunpack.c.0.s8 %v5794
    %v5796 = vlaneseq
    %v5797 = vshrl.u32 %v5796, 7
    %v5798 = vsub.s32 %v5795, %v5797
    %v5799 = vrot.slane %v5791, %v5798
    %v5801 = vunpack.c.l.s4 1983009808
    %v5802 = vunpack.c.0.s8 %v5801
    %v5803 = vlaneseq
    %v5804 = vshrl.u32 %v5803, 7
    %v5805 = vsub.s32 %v5802, %v5804
    %v5806 = vrot.slane %v5792, %v5805
    %v5807 = vcombine.low %v5799, %v5806
    %v5808 = vcombine.low %v3165, %v3172
    %v5809 = vcombine.low %v3179, %v3186
    %v5811 = vunpack.c.l.s4 1983009808
    %v5812 = vunpack.c.0.s8 %v5811
    %v5813 = vlaneseq
    %v5814 = vshrl.u32 %v5813, 7
    %v5815 = vsub.s32 %v5812, %v5814
    %v5816 = vrot.slane %v5808, %v5815
    %v5818 = vunpack.c.l.s4 1983009808
    %v5819 = vunpack.c.0.s8 %v5818
    %v5820 = vlaneseq
    %v5821 = vshrl.u32 %v5820, 7
    %v5822 = vsub.s32 %v5819, %v5821
    %v5823 = vrot.slane %v5809, %v5822
    %v5824 = vcombine.low %v5816, %v5823
    %v5825 = vcombine.low %v3193, %v3200
    %v5826 = vcombine.low %v3207, %v3214
    %v5828 = vunpack.c.l.s4 1983009808
    %v5829 = vunpack.c.0.s8 %v5828
    %v5830 = vlaneseq
    %v5831 = vshrl.u32 %v5830, 7
    %v5832 = vsub.s32 %v5829, %v5831
    %v5833 = vrot.slane %v5825, %v5832
    %v5835 = vunpack.c.l.s4 1983009808
    %v5836 = vunpack.c.0.s8 %v5835
    %v5837 = vlaneseq
    %v5838 = vshrl.u32 %v5837, 7
    %v5839 = vsub.s32 %v5836, %v5838
    %v5840 = vrot.slane %v5826, %v5839
    %v5841 = vcombine.low %v5833, %v5840
    %v5842 = vcombine.low %v3221, %v3228
    %v5843 = vcombine.low %v3235, %v3242
    %v5845 = vunpack.c.l.s4 1983009808
    %v5846 = vunpack.c.0.s8 %v5845
    %v5847 = vlaneseq
    %v5848 = vshrl.u32 %v5847, 7
    %v5849 = vsub.s32 %v5846, %v5848
    %v5850 = vrot.slane %v5842, %v5849
    %v5852 = vunpack.c.l.s4 1983009808
    %v5853 = vunpack.c.0.s8 %v5852
    %v5854 = vlaneseq
    %v5855 = vshrl.u32 %v5854, 7
    %v5856 = vsub.s32 %v5853, %v5855
    %v5857 = vrot.slane %v5843, %v5856
    %v5858 = vcombine.low %v5850, %v5857
    %v5859 = vcombine.low %v3249, %v3256
    %v5860 = vcombine.low %v3263, %v3270
    %v5862 = vunpack.c.l.s4 1983009808
    %v5863 = vunpack.c.0.s8 %v5862
    %v5864 = vlaneseq
    %v5865 = vshrl.u32 %v5864, 7
    %v5866 = vsub.s32 %v5863, %v5865
    %v5867 = vrot.slane %v5859, %v5866
    %v5869 = vunpack.c.l.s4 1983009808
    %v5870 = vunpack.c.0.s8 %v5869
    %v5871 = vlaneseq
    %v5872 = vshrl.u32 %v5871, 7
    %v5873 = vsub.s32 %v5870, %v5872
    %v5874 = vrot.slane %v5860, %v5873
    %v5875 = vcombine.low %v5867, %v5874
    %v5876 = vcombine.low %v3277, %v3284
    %v5877 = vcombine.low %v3291, %v3298
    %v5879 = vunpack.c.l.s4 1983009808
    %v5880 = vunpack.c.0.s8 %v5879
    %v5881 = vlaneseq
    %v5882 = vshrl.u32 %v5881, 7
    %v5883 = vsub.s32 %v5880, %v5882
    %v5884 = vrot.slane %v5876, %v5883
    %v5886 = vunpack.c.l.s4 1983009808
    %v5887 = vunpack.c.0.s8 %v5886
    %v5888 = vlaneseq
    %v5889 = vshrl.u32 %v5888, 7
    %v5890 = vsub.s32 %v5887, %v5889
    %v5891 = vrot.slane %v5877, %v5890
    %v5892 = vcombine.low %v5884, %v5891
    %v5893 = vcombine.low %v3305, %v3312
    %v5894 = vcombine.low %v3319, %v3326
    %v5896 = vunpack.c.l.s4 1983009808
    %v5897 = vunpack.c.0.s8 %v5896
    %v5898 = vlaneseq
    %v5899 = vshrl.u32 %v5898, 7
    %v5900 = vsub.s32 %v5897, %v5899
    %v5901 = vrot.slane %v5893, %v5900
    %v5903 = vunpack.c.l.s4 1983009808
    %v5904 = vunpack.c.0.s8 %v5903
    %v5905 = vlaneseq
    %v5906 = vshrl.u32 %v5905, 7
    %v5907 = vsub.s32 %v5904, %v5906
    %v5908 = vrot.slane %v5894, %v5907
    %v5909 = vcombine.low %v5901, %v5908
    %v5910 = vcombine.low %v3333, %v3340
    %v5911 = vcombine.low %v3347, %v3354
    %v5913 = vunpack.c.l.s4 1983009808
    %v5914 = vunpack.c.0.s8 %v5913
    %v5915 = vlaneseq
    %v5916 = vshrl.u32 %v5915, 7
    %v5917 = vsub.s32 %v5914, %v5916
    %v5918 = vrot.slane %v5910, %v5917
    %v5920 = vunpack.c.l.s4 1983009808
    %v5921 = vunpack.c.0.s8 %v5920
    %v5922 = vlaneseq
    %v5923 = vshrl.u32 %v5922, 7
    %v5924 = vsub.s32 %v5921, %v5923
    %v5925 = vrot.slane %v5911, %v5924
    %v5926 = vcombine.low %v5918, %v5925
    %v5927 = vcombine.low %v3361, %v3368
    %v5928 = vcombine.low %v3375, %v3382
    %v5930 = vunpack.c.l.s4 1983009808
    %v5931 = vunpack.c.0.s8 %v5930
    %v5932 = vlaneseq
    %v5933 = vshrl.u32 %v5932, 7
    %v5934 = vsub.s32 %v5931, %v5933
    %v5935 = vrot.slane %v5927, %v5934
    %v5937 = vunpack.c.l.s4 1983009808
    %v5938 = vunpack.c.0.s8 %v5937
    %v5939 = vlaneseq
    %v5940 = vshrl.u32 %v5939, 7
    %v5941 = vsub.s32 %v5938, %v5940
    %v5942 = vrot.slane %v5928, %v5941
    %v5943 = vcombine.low %v5935, %v5942
    %v5944 = vcombine.low %v3389, %v3396
    %v5945 = vcombine.low %v3403, %v3410
    %v5947 = vunpack.c.l.s4 1983009808
    %v5948 = vunpack.c.0.s8 %v5947
    %v5949 = vlaneseq
    %v5950 = vshrl.u32 %v5949, 7
    %v5951 = vsub.s32 %v5948, %v5950
    %v5952 = vrot.slane %v5944, %v5951
    %v5954 = vunpack.c.l.s4 1983009808
    %v5955 = vunpack.c.0.s8 %v5954
    %v5956 = vlaneseq
    %v5957 = vshrl.u32 %v5956, 7
    %v5958 = vsub.s32 %v5955, %v5957
    %v5959 = vrot.slane %v5945, %v5958
    %v5960 = vcombine.low %v5952, %v5959
    %v5961 = vcombine.low %v3417, %v3424
    %v5962 = vcombine.low %v3431, %v3438
    %v5964 = vunpack.c.l.s4 1983009808
    %v5965 = vunpack.c.0.s8 %v5964
    %v5966 = vlaneseq
    %v5967 = vshrl.u32 %v5966, 7
    %v5968 = vsub.s32 %v5965, %v5967
    %v5969 = vrot.slane %v5961, %v5968
    %v5971 = vunpack.c.l.s4 1983009808
    %v5972 = vunpack.c.0.s8 %v5971
    %v5973 = vlaneseq
    %v5974 = vshrl.u32 %v5973, 7
    %v5975 = vsub.s32 %v5972, %v5974
    %v5976 = vrot.slane %v5962, %v5975
    %v5977 = vcombine.low %v5969, %v5976
    %v5978 = vcombine.low %v3445, %v3452
    %v5979 = vcombine.low %v3459, %v3466
    %v5981 = vunpack.c.l.s4 1983009808
    %v5982 = vunpack.c.0.s8 %v5981
    %v5983 = vlaneseq
    %v5984 = vshrl.u32 %v5983, 7
    %v5985 = vsub.s32 %v5982, %v5984
    %v5986 = vrot.slane %v5978, %v5985
    %v5988 = vunpack.c.l.s4 1983009808
    %v5989 = vunpack.c.0.s8 %v5988
    %v5990 = vlaneseq
    %v5991 = vshrl.u32 %v5990, 7
    %v5992 = vsub.s32 %v5989, %v5991
    %v5993 = vrot.slane %v5979, %v5992
    %v5994 = vcombine.low %v5986, %v5993
    %v5995 = vcombine.low %v3473, %v3480
    %v5996 = vcombine.low %v3487, %v3494
    %v5998 = vunpack.c.l.s4 1983009808
    %v5999 = vunpack.c.0.s8 %v5998
    %v6000 = vlaneseq
    %v6001 = vshrl.u32 %v6000, 7
    %v6002 = vsub.s32 %v5999, %v6001
    %v6003 = vrot.slane %v5995, %v6002
    %v6005 = vunpack.c.l.s4 1983009808
    %v6006 = vunpack.c.0.s8 %v6005
    %v6007 = vlaneseq
    %v6008 = vshrl.u32 %v6007, 7
    %v6009 = vsub.s32 %v6006, %v6008
    %v6010 = vrot.slane %v5996, %v6009
    %v6011 = vcombine.low %v6003, %v6010
    %v6012 = vcombine.low %v3501, %v3508
    %v6013 = vcombine.low %v3515, %v3522
    %v6015 = vunpack.c.l.s4 1983009808
    %v6016 = vunpack.c.0.s8 %v6015
    %v6017 = vlaneseq
    %v6018 = vshrl.u32 %v6017, 7
    %v6019 = vsub.s32 %v6016, %v6018
    %v6020 = vrot.slane %v6012, %v6019
    %v6022 = vunpack.c.l.s4 1983009808
    %v6023 = vunpack.c.0.s8 %v6022
    %v6024 = vlaneseq
    %v6025 = vshrl.u32 %v6024, 7
    %v6026 = vsub.s32 %v6023, %v6025
    %v6027 = vrot.slane %v6013, %v6026
    %v6028 = vcombine.low %v6020, %v6027
    %v6029 = vcombine.low %v3529, %v3536
    %v6030 = vcombine.low %v3543, %v3550
    %v6032 = vunpack.c.l.s4 1983009808
    %v6033 = vunpack.c.0.s8 %v6032
    %v6034 = vlaneseq
    %v6035 = vshrl.u32 %v6034, 7
    %v6036 = vsub.s32 %v6033, %v6035
    %v6037 = vrot.slane %v6029, %v6036
    %v6039 = vunpack.c.l.s4 1983009808
    %v6040 = vunpack.c.0.s8 %v6039
    %v6041 = vlaneseq
    %v6042 = vshrl.u32 %v6041, 7
    %v6043 = vsub.s32 %v6040, %v6042
    %v6044 = vrot.slane %v6030, %v6043
    %v6045 = vcombine.low %v6037, %v6044
    %v6046 = vcombine.low %v3557, %v3564
    %v6047 = vcombine.low %v3571, %v3578
    %v6049 = vunpack.c.l.s4 1983009808
    %v6050 = vunpack.c.0.s8 %v6049
    %v6051 = vlaneseq
    %v6052 = vshrl.u32 %v6051, 7
    %v6053 = vsub.s32 %v6050, %v6052
    %v6054 = vrot.slane %v6046, %v6053
    %v6056 = vunpack.c.l.s4 1983009808
    %v6057 = vunpack.c.0.s8 %v6056
    %v6058 = vlaneseq
    %v6059 = vshrl.u32 %v6058, 7
    %v6060 = vsub.s32 %v6057, %v6059
    %v6061 = vrot.slane %v6047, %v6060
    %v6062 = vcombine.low %v6054, %v6061
    %v6063 = vcombine.low %v3585, %v3592
    %v6064 = vcombine.low %v3599, %v3606
    %v6066 = vunpack.c.l.s4 1983009808
    %v6067 = vunpack.c.0.s8 %v6066
    %v6068 = vlaneseq
    %v6069 = vshrl.u32 %v6068, 7
    %v6070 = vsub.s32 %v6067, %v6069
    %v6071 = vrot.slane %v6063, %v6070
    %v6073 = vunpack.c.l.s4 1983009808
    %v6074 = vunpack.c.0.s8 %v6073
    %v6075 = vlaneseq
    %v6076 = vshrl.u32 %v6075, 7
    %v6077 = vsub.s32 %v6074, %v6076
    %v6078 = vrot.slane %v6064, %v6077
    %v6079 = vcombine.low %v6071, %v6078
    %v6080 = vcombine.low %v3613, %v3620
    %v6081 = vcombine.low %v3627, %v3634
    %v6083 = vunpack.c.l.s4 1983009808
    %v6084 = vunpack.c.0.s8 %v6083
    %v6085 = vlaneseq
    %v6086 = vshrl.u32 %v6085, 7
    %v6087 = vsub.s32 %v6084, %v6086
    %v6088 = vrot.slane %v6080, %v6087
    %v6090 = vunpack.c.l.s4 1983009808
    %v6091 = vunpack.c.0.s8 %v6090
    %v6092 = vlaneseq
    %v6093 = vshrl.u32 %v6092, 7
    %v6094 = vsub.s32 %v6091, %v6093
    %v6095 = vrot.slane %v6081, %v6094
    %v6096 = vcombine.low %v6088, %v6095
    %v6097 = vcombine.low %v3641, %v3648
    %v6098 = vcombine.low %v3655, %v3662
    %v6100 = vunpack.c.l.s4 1983009808
    %v6101 = vunpack.c.0.s8 %v6100
    %v6102 = vlaneseq
    %v6103 = vshrl.u32 %v6102, 7
    %v6104 = vsub.s32 %v6101, %v6103
    %v6105 = vrot.slane %v6097, %v6104
    %v6107 = vunpack.c.l.s4 1983009808
    %v6108 = vunpack.c.0.s8 %v6107
    %v6109 = vlaneseq
    %v6110 = vshrl.u32 %v6109, 7
    %v6111 = vsub.s32 %v6108, %v6110
    %v6112 = vrot.slane %v6098, %v6111
    %v6113 = vcombine.low %v6105, %v6112
    %v6114 = vcombine.low %v3669, %v3676
    %v6115 = vcombine.low %v3683, %v3690
    %v6117 = vunpack.c.l.s4 1983009808
    %v6118 = vunpack.c.0.s8 %v6117
    %v6119 = vlaneseq
    %v6120 = vshrl.u32 %v6119, 7
    %v6121 = vsub.s32 %v6118, %v6120
    %v6122 = vrot.slane %v6114, %v6121
    %v6124 = vunpack.c.l.s4 1983009808
    %v6125 = vunpack.c.0.s8 %v6124
    %v6126 = vlaneseq
    %v6127 = vshrl.u32 %v6126, 7
    %v6128 = vsub.s32 %v6125, %v6127
    %v6129 = vrot.slane %v6115, %v6128
    %v6130 = vcombine.low %v6122, %v6129
    %v6131 = vcombine.low %v3697, %v3704
    %v6132 = vcombine.low %v3711, %v3718
    %v6134 = vunpack.c.l.s4 1983009808
    %v6135 = vunpack.c.0.s8 %v6134
    %v6136 = vlaneseq
    %v6137 = vshrl.u32 %v6136, 7
    %v6138 = vsub.s32 %v6135, %v6137
    %v6139 = vrot.slane %v6131, %v6138
    %v6141 = vunpack.c.l.s4 1983009808
    %v6142 = vunpack.c.0.s8 %v6141
    %v6143 = vlaneseq
    %v6144 = vshrl.u32 %v6143, 7
    %v6145 = vsub.s32 %v6142, %v6144
    %v6146 = vrot.slane %v6132, %v6145
    %v6147 = vcombine.low %v6139, %v6146
    %v6148 = vcombine.low %v3725, %v3732
    %v6149 = vcombine.low %v3739, %v3746
    %v6151 = vunpack.c.l.s4 1983009808
    %v6152 = vunpack.c.0.s8 %v6151
    %v6153 = vlaneseq
    %v6154 = vshrl.u32 %v6153, 7
    %v6155 = vsub.s32 %v6152, %v6154
    %v6156 = vrot.slane %v6148, %v6155
    %v6158 = vunpack.c.l.s4 1983009808
    %v6159 = vunpack.c.0.s8 %v6158
    %v6160 = vlaneseq
    %v6161 = vshrl.u32 %v6160, 7
    %v6162 = vsub.s32 %v6159, %v6161
    %v6163 = vrot.slane %v6149, %v6162
    %v6164 = vcombine.low %v6156, %v6163
    %v6165 = vcombine.low %v3753, %v3760
    %v6166 = vcombine.low %v3767, %v3774
    %v6168 = vunpack.c.l.s4 1983009808
    %v6169 = vunpack.c.0.s8 %v6168
    %v6170 = vlaneseq
    %v6171 = vshrl.u32 %v6170, 7
    %v6172 = vsub.s32 %v6169, %v6171
    %v6173 = vrot.slane %v6165, %v6172
    %v6175 = vunpack.c.l.s4 1983009808
    %v6176 = vunpack.c.0.s8 %v6175
    %v6177 = vlaneseq
    %v6178 = vshrl.u32 %v6177, 7
    %v6179 = vsub.s32 %v6176, %v6178
    %v6180 = vrot.slane %v6166, %v6179
    %v6181 = vcombine.low %v6173, %v6180
    %v6182 = vcombine.low %v3781, %v3788
    %v6183 = vcombine.low %v3795, %v3802
    %v6185 = vunpack.c.l.s4 1983009808
    %v6186 = vunpack.c.0.s8 %v6185
    %v6187 = vlaneseq
    %v6188 = vshrl.u32 %v6187, 7
    %v6189 = vsub.s32 %v6186, %v6188
    %v6190 = vrot.slane %v6182, %v6189
    %v6192 = vunpack.c.l.s4 1983009808
    %v6193 = vunpack.c.0.s8 %v6192
    %v6194 = vlaneseq
    %v6195 = vshrl.u32 %v6194, 7
    %v6196 = vsub.s32 %v6193, %v6195
    %v6197 = vrot.slane %v6183, %v6196
    %v6198 = vcombine.low %v6190, %v6197
    %v6199 = vcombine.low %v3809, %v3816
    %v6200 = vcombine.low %v3823, %v3830
    %v6202 = vunpack.c.l.s4 1983009808
    %v6203 = vunpack.c.0.s8 %v6202
    %v6204 = vlaneseq
    %v6205 = vshrl.u32 %v6204, 7
    %v6206 = vsub.s32 %v6203, %v6205
    %v6207 = vrot.slane %v6199, %v6206
    %v6209 = vunpack.c.l.s4 1983009808
    %v6210 = vunpack.c.0.s8 %v6209
    %v6211 = vlaneseq
    %v6212 = vshrl.u32 %v6211, 7
    %v6213 = vsub.s32 %v6210, %v6212
    %v6214 = vrot.slane %v6200, %v6213
    %v6215 = vcombine.low %v6207, %v6214
    %v6216 = vcombine.low %v3837, %v3844
    %v6217 = vcombine.low %v3851, %v3858
    %v6219 = vunpack.c.l.s4 1983009808
    %v6220 = vunpack.c.0.s8 %v6219
    %v6221 = vlaneseq
    %v6222 = vshrl.u32 %v6221, 7
    %v6223 = vsub.s32 %v6220, %v6222
    %v6224 = vrot.slane %v6216, %v6223
    %v6226 = vunpack.c.l.s4 1983009808
    %v6227 = vunpack.c.0.s8 %v6226
    %v6228 = vlaneseq
    %v6229 = vshrl.u32 %v6228, 7
    %v6230 = vsub.s32 %v6227, %v6229
    %v6231 = vrot.slane %v6217, %v6230
    %v6232 = vcombine.low %v6224, %v6231
    %v6233 = vcombine.low %v3865, %v3872
    %v6234 = vcombine.low %v3879, %v3886
    %v6236 = vunpack.c.l.s4 1983009808
    %v6237 = vunpack.c.0.s8 %v6236
    %v6238 = vlaneseq
    %v6239 = vshrl.u32 %v6238, 7
    %v6240 = vsub.s32 %v6237, %v6239
    %v6241 = vrot.slane %v6233, %v6240
    %v6243 = vunpack.c.l.s4 1983009808
    %v6244 = vunpack.c.0.s8 %v6243
    %v6245 = vlaneseq
    %v6246 = vshrl.u32 %v6245, 7
    %v6247 = vsub.s32 %v6244, %v6246
    %v6248 = vrot.slane %v6234, %v6247
    %v6249 = vcombine.low %v6241, %v6248
    %v6250 = vcombine.low %v3893, %v3900
    %v6251 = vcombine.low %v3907, %v3914
    %v6253 = vunpack.c.l.s4 1983009808
    %v6254 = vunpack.c.0.s8 %v6253
    %v6255 = vlaneseq
    %v6256 = vshrl.u32 %v6255, 7
    %v6257 = vsub.s32 %v6254, %v6256
    %v6258 = vrot.slane %v6250, %v6257
    %v6260 = vunpack.c.l.s4 1983009808
    %v6261 = vunpack.c.0.s8 %v6260
    %v6262 = vlaneseq
    %v6263 = vshrl.u32 %v6262, 7
    %v6264 = vsub.s32 %v6261, %v6263
    %v6265 = vrot.slane %v6251, %v6264
    %v6266 = vcombine.low %v6258, %v6265
    %v6267 = vcombine.low %v3921, %v3928
    %v6268 = vcombine.low %v3935, %v3942
    %v6270 = vunpack.c.l.s4 1983009808
    %v6271 = vunpack.c.0.s8 %v6270
    %v6272 = vlaneseq
    %v6273 = vshrl.u32 %v6272, 7
    %v6274 = vsub.s32 %v6271, %v6273
    %v6275 = vrot.slane %v6267, %v6274
    %v6277 = vunpack.c.l.s4 1983009808
    %v6278 = vunpack.c.0.s8 %v6277
    %v6279 = vlaneseq
    %v6280 = vshrl.u32 %v6279, 7
    %v6281 = vsub.s32 %v6278, %v6280
    %v6282 = vrot.slane %v6268, %v6281
    %v6283 = vcombine.low %v6275, %v6282
    %v6284 = vcombine.low %v3949, %v3956
    %v6285 = vcombine.low %v3963, %v3970
    %v6287 = vunpack.c.l.s4 1983009808
    %v6288 = vunpack.c.0.s8 %v6287
    %v6289 = vlaneseq
    %v6290 = vshrl.u32 %v6289, 7
    %v6291 = vsub.s32 %v6288, %v6290
    %v6292 = vrot.slane %v6284, %v6291
    %v6294 = vunpack.c.l.s4 1983009808
    %v6295 = vunpack.c.0.s8 %v6294
    %v6296 = vlaneseq
    %v6297 = vshrl.u32 %v6296, 7
    %v6298 = vsub.s32 %v6295, %v6297
    %v6299 = vrot.slane %v6285, %v6298
    %v6300 = vcombine.low %v6292, %v6299
    %v6301 = vcombine.low %v3977, %v3984
    %v6302 = vcombine.low %v3991, %v3998
    %v6304 = vunpack.c.l.s4 1983009808
    %v6305 = vunpack.c.0.s8 %v6304
    %v6306 = vlaneseq
    %v6307 = vshrl.u32 %v6306, 7
    %v6308 = vsub.s32 %v6305, %v6307
    %v6309 = vrot.slane %v6301, %v6308
    %v6311 = vunpack.c.l.s4 1983009808
    %v6312 = vunpack.c.0.s8 %v6311
    %v6313 = vlaneseq
    %v6314 = vshrl.u32 %v6313, 7
    %v6315 = vsub.s32 %v6312, %v6314
    %v6316 = vrot.slane %v6302, %v6315
    %v6317 = vcombine.low %v6309, %v6316
    %v6318 = vcombine.low %v4005, %v4012
    %v6319 = vcombine.low %v4019, %v4026
    %v6321 = vunpack.c.l.s4 1983009808
    %v6322 = vunpack.c.0.s8 %v6321
    %v6323 = vlaneseq
    %v6324 = vshrl.u32 %v6323, 7
    %v6325 = vsub.s32 %v6322, %v6324
    %v6326 = vrot.slane %v6318, %v6325
    %v6328 = vunpack.c.l.s4 1983009808
    %v6329 = vunpack.c.0.s8 %v6328
    %v6330 = vlaneseq
    %v6331 = vshrl.u32 %v6330, 7
    %v6332 = vsub.s32 %v6329, %v6331
    %v6333 = vrot.slane %v6319, %v6332
    %v6334 = vcombine.low %v6326, %v6333
    %v6335 = vcombine.low %v4033, %v4040
    %v6336 = vcombine.low %v4047, %v4054
    %v6338 = vunpack.c.l.s4 1983009808
    %v6339 = vunpack.c.0.s8 %v6338
    %v6340 = vlaneseq
    %v6341 = vshrl.u32 %v6340, 7
    %v6342 = vsub.s32 %v6339, %v6341
    %v6343 = vrot.slane %v6335, %v6342
    %v6345 = vunpack.c.l.s4 1983009808
    %v6346 = vunpack.c.0.s8 %v6345
    %v6347 = vlaneseq
    %v6348 = vshrl.u32 %v6347, 7
    %v6349 = vsub.s32 %v6346, %v6348
    %v6350 = vrot.slane %v6336, %v6349
    %v6351 = vcombine.low %v6343, %v6350
    %v6352 = vcombine.low %v4061, %v4068
    %v6353 = vcombine.low %v4075, %v4082
    %v6355 = vunpack.c.l.s4 1983009808
    %v6356 = vunpack.c.0.s8 %v6355
    %v6357 = vlaneseq
    %v6358 = vshrl.u32 %v6357, 7
    %v6359 = vsub.s32 %v6356, %v6358
    %v6360 = vrot.slane %v6352, %v6359
    %v6362 = vunpack.c.l.s4 1983009808
    %v6363 = vunpack.c.0.s8 %v6362
    %v6364 = vlaneseq
    %v6365 = vshrl.u32 %v6364, 7
    %v6366 = vsub.s32 %v6363, %v6365
    %v6367 = vrot.slane %v6353, %v6366
    %v6368 = vcombine.low %v6360, %v6367
    %v6369 = vcombine.low %v4089, %v4096
    %v6370 = vcombine.low %v4103, %v4110
    %v6372 = vunpack.c.l.s4 1983009808
    %v6373 = vunpack.c.0.s8 %v6372
    %v6374 = vlaneseq
    %v6375 = vshrl.u32 %v6374, 7
    %v6376 = vsub.s32 %v6373, %v6375
    %v6377 = vrot.slane %v6369, %v6376
    %v6379 = vunpack.c.l.s4 1983009808
    %v6380 = vunpack.c.0.s8 %v6379
    %v6381 = vlaneseq
    %v6382 = vshrl.u32 %v6381, 7
    %v6383 = vsub.s32 %v6380, %v6382
    %v6384 = vrot.slane %v6370, %v6383
    %v6385 = vcombine.low %v6377, %v6384
    %v6386 = vcombine.low %v4117, %v4124
    %v6387 = vcombine.low %v4131, %v4138
    %v6389 = vunpack.c.l.s4 1983009808
    %v6390 = vunpack.c.0.s8 %v6389
    %v6391 = vlaneseq
    %v6392 = vshrl.u32 %v6391, 7
    %v6393 = vsub.s32 %v6390, %v6392
    %v6394 = vrot.slane %v6386, %v6393
    %v6396 = vunpack.c.l.s4 1983009808
    %v6397 = vunpack.c.0.s8 %v6396
    %v6398 = vlaneseq
    %v6399 = vshrl.u32 %v6398, 7
    %v6400 = vsub.s32 %v6397, %v6399
    %v6401 = vrot.slane %v6387, %v6400
    %v6402 = vcombine.low %v6394, %v6401
    %v6403 = vcombine.low %v4145, %v4152
    %v6404 = vcombine.low %v4159, %v4166
    %v6406 = vunpack.c.l.s4 1983009808
    %v6407 = vunpack.c.0.s8 %v6406
    %v6408 = vlaneseq
    %v6409 = vshrl.u32 %v6408, 7
    %v6410 = vsub.s32 %v6407, %v6409
    %v6411 = vrot.slane %v6403, %v6410
    %v6413 = vunpack.c.l.s4 1983009808
    %v6414 = vunpack.c.0.s8 %v6413
    %v6415 = vlaneseq
    %v6416 = vshrl.u32 %v6415, 7
    %v6417 = vsub.s32 %v6414, %v6416
    %v6418 = vrot.slane %v6404, %v6417
    %v6419 = vcombine.low %v6411, %v6418
    %v6420 = vcombine.low %v4173, %v4180
    %v6421 = vcombine.low %v4187, %v4194
    %v6423 = vunpack.c.l.s4 1983009808
    %v6424 = vunpack.c.0.s8 %v6423
    %v6425 = vlaneseq
    %v6426 = vshrl.u32 %v6425, 7
    %v6427 = vsub.s32 %v6424, %v6426
    %v6428 = vrot.slane %v6420, %v6427
    %v6430 = vunpack.c.l.s4 1983009808
    %v6431 = vunpack.c.0.s8 %v6430
    %v6432 = vlaneseq
    %v6433 = vshrl.u32 %v6432, 7
    %v6434 = vsub.s32 %v6431, %v6433
    %v6435 = vrot.slane %v6421, %v6434
    %v6436 = vcombine.low %v6428, %v6435
    %v6437 = vcombine.low %v4201, %v4208
    %v6438 = vcombine.low %v4215, %v4222
    %v6440 = vunpack.c.l.s4 1983009808
    %v6441 = vunpack.c.0.s8 %v6440
    %v6442 = vlaneseq
    %v6443 = vshrl.u32 %v6442, 7
    %v6444 = vsub.s32 %v6441, %v6443
    %v6445 = vrot.slane %v6437, %v6444
    %v6447 = vunpack.c.l.s4 1983009808
    %v6448 = vunpack.c.0.s8 %v6447
    %v6449 = vlaneseq
    %v6450 = vshrl.u32 %v6449, 7
    %v6451 = vsub.s32 %v6448, %v6450
    %v6452 = vrot.slane %v6438, %v6451
    %v6453 = vcombine.low %v6445, %v6452
    %v6454 = vcombine.low %v4229, %v4236
    %v6455 = vcombine.low %v4243, %v4250
    %v6457 = vunpack.c.l.s4 1983009808
    %v6458 = vunpack.c.0.s8 %v6457
    %v6459 = vlaneseq
    %v6460 = vshrl.u32 %v6459, 7
    %v6461 = vsub.s32 %v6458, %v6460
    %v6462 = vrot.slane %v6454, %v6461
    %v6464 = vunpack.c.l.s4 1983009808
    %v6465 = vunpack.c.0.s8 %v6464
    %v6466 = vlaneseq
    %v6467 = vshrl.u32 %v6466, 7
    %v6468 = vsub.s32 %v6465, %v6467
    %v6469 = vrot.slane %v6455, %v6468
    %v6470 = vcombine.low %v6462, %v6469
    %v6471 = vcombine.low %v4257, %v4264
    %v6472 = vcombine.low %v4271, %v4278
    %v6474 = vunpack.c.l.s4 1983009808
    %v6475 = vunpack.c.0.s8 %v6474
    %v6476 = vlaneseq
    %v6477 = vshrl.u32 %v6476, 7
    %v6478 = vsub.s32 %v6475, %v6477
    %v6479 = vrot.slane %v6471, %v6478
    %v6481 = vunpack.c.l.s4 1983009808
    %v6482 = vunpack.c.0.s8 %v6481
    %v6483 = vlaneseq
    %v6484 = vshrl.u32 %v6483, 7
    %v6485 = vsub.s32 %v6482, %v6484
    %v6486 = vrot.slane %v6472, %v6485
    %v6487 = vcombine.low %v6479, %v6486
    %v6488 = vcombine.low %v4285, %v4292
    %v6489 = vcombine.low %v4299, %v4306
    %v6491 = vunpack.c.l.s4 1983009808
    %v6492 = vunpack.c.0.s8 %v6491
    %v6493 = vlaneseq
    %v6494 = vshrl.u32 %v6493, 7
    %v6495 = vsub.s32 %v6492, %v6494
    %v6496 = vrot.slane %v6488, %v6495
    %v6498 = vunpack.c.l.s4 1983009808
    %v6499 = vunpack.c.0.s8 %v6498
    %v6500 = vlaneseq
    %v6501 = vshrl.u32 %v6500, 7
    %v6502 = vsub.s32 %v6499, %v6501
    %v6503 = vrot.slane %v6489, %v6502
    %v6504 = vcombine.low %v6496, %v6503
    %v6505 = vcombine.low %v4313, %v4320
    %v6506 = vcombine.low %v4327, %v4334
    %v6508 = vunpack.c.l.s4 1983009808
    %v6509 = vunpack.c.0.s8 %v6508
    %v6510 = vlaneseq
    %v6511 = vshrl.u32 %v6510, 7
    %v6512 = vsub.s32 %v6509, %v6511
    %v6513 = vrot.slane %v6505, %v6512
    %v6515 = vunpack.c.l.s4 1983009808
    %v6516 = vunpack.c.0.s8 %v6515
    %v6517 = vlaneseq
    %v6518 = vshrl.u32 %v6517, 7
    %v6519 = vsub.s32 %v6516, %v6518
    %v6520 = vrot.slane %v6506, %v6519
    %v6521 = vcombine.low %v6513, %v6520
    %v6522 = vcombine.low %v4341, %v4348
    %v6523 = vcombine.low %v4355, %v4362
    %v6525 = vunpack.c.l.s4 1983009808
    %v6526 = vunpack.c.0.s8 %v6525
    %v6527 = vlaneseq
    %v6528 = vshrl.u32 %v6527, 7
    %v6529 = vsub.s32 %v6526, %v6528
    %v6530 = vrot.slane %v6522, %v6529
    %v6532 = vunpack.c.l.s4 1983009808
    %v6533 = vunpack.c.0.s8 %v6532
    %v6534 = vlaneseq
    %v6535 = vshrl.u32 %v6534, 7
    %v6536 = vsub.s32 %v6533, %v6535
    %v6537 = vrot.slane %v6523, %v6536
    %v6538 = vcombine.low %v6530, %v6537
    %6539 = vset.pattern.permute.xlu0 0
    %6540 = vperm.xlu0 %6539, %v4379
    %v6541 = vpop.permute.xlu0 %6540
    %6542 = vset.pattern.permute.xlu0 0
    %6543 = vperm.xlu0 %6542, %v4396
    %v6544 = vpop.permute.xlu0 %6543
    %6545 = vset.pattern.permute.xlu0 0
    %6546 = vperm.xlu0 %6545, %v4413
    %v6547 = vpop.permute.xlu0 %6546
    %6548 = vset.pattern.permute.xlu0 0
    %6549 = vperm.xlu0 %6548, %v4430
    %v6550 = vpop.permute.xlu0 %6549
    %6551 = vset.pattern.permute.xlu0 0
    %6552 = vperm.xlu0 %6551, %v4447
    %v6553 = vpop.permute.xlu0 %6552
    %6554 = vset.pattern.permute.xlu0 0
    %6555 = vperm.xlu0 %6554, %v4464
    %v6556 = vpop.permute.xlu0 %6555
    %6557 = vset.pattern.permute.xlu0 0
    %6558 = vperm.xlu0 %6557, %v4481
    %v6559 = vpop.permute.xlu0 %6558
    %6560 = vset.pattern.permute.xlu0 0
    %6561 = vperm.xlu0 %6560, %v4498
    %v6562 = vpop.permute.xlu0 %6561
    %6563 = vset.pattern.permute.xlu0 0
    %6564 = vperm.xlu0 %6563, %v4515
    %v6565 = vpop.permute.xlu0 %6564
    %6566 = vset.pattern.permute.xlu0 0
    %6567 = vperm.xlu0 %6566, %v4532
    %v6568 = vpop.permute.xlu0 %6567
    %6569 = vset.pattern.permute.xlu0 0
    %6570 = vperm.xlu0 %6569, %v4549
    %v6571 = vpop.permute.xlu0 %6570
    %6572 = vset.pattern.permute.xlu0 0
    %6573 = vperm.xlu0 %6572, %v4566
    %v6574 = vpop.permute.xlu0 %6573
    %6575 = vset.pattern.permute.xlu0 0
    %6576 = vperm.xlu0 %6575, %v4583
    %v6577 = vpop.permute.xlu0 %6576
    %6578 = vset.pattern.permute.xlu0 0
    %6579 = vperm.xlu0 %6578, %v4600
    %v6580 = vpop.permute.xlu0 %6579
    %6581 = vset.pattern.permute.xlu0 0
    %6582 = vperm.xlu0 %6581, %v4617
    %v6583 = vpop.permute.xlu0 %6582
    %6584 = vset.pattern.permute.xlu0 0
    %6585 = vperm.xlu0 %6584, %v4634
    %v6586 = vpop.permute.xlu0 %6585
    %6587 = vset.pattern.permute.xlu0 0
    %6588 = vperm.xlu0 %6587, %v4651
    %v6589 = vpop.permute.xlu0 %6588
    %6590 = vset.pattern.permute.xlu0 0
    %6591 = vperm.xlu0 %6590, %v4668
    %v6592 = vpop.permute.xlu0 %6591
    %6593 = vset.pattern.permute.xlu0 0
    %6594 = vperm.xlu0 %6593, %v4685
    %v6595 = vpop.permute.xlu0 %6594
    %6596 = vset.pattern.permute.xlu0 0
    %6597 = vperm.xlu0 %6596, %v4702
    %v6598 = vpop.permute.xlu0 %6597
    %6599 = vset.pattern.permute.xlu0 0
    %6600 = vperm.xlu0 %6599, %v4719
    %v6601 = vpop.permute.xlu0 %6600
    %6602 = vset.pattern.permute.xlu0 0
    %6603 = vperm.xlu0 %6602, %v4736
    %v6604 = vpop.permute.xlu0 %6603
    %6605 = vset.pattern.permute.xlu0 0
    %6606 = vperm.xlu0 %6605, %v4753
    %v6607 = vpop.permute.xlu0 %6606
    %6608 = vset.pattern.permute.xlu0 0
    %6609 = vperm.xlu0 %6608, %v4770
    %v6610 = vpop.permute.xlu0 %6609
    %6611 = vset.pattern.permute.xlu0 0
    %6612 = vperm.xlu0 %6611, %v4787
    %v6613 = vpop.permute.xlu0 %6612
    %6614 = vset.pattern.permute.xlu0 0
    %6615 = vperm.xlu0 %6614, %v4804
    %v6616 = vpop.permute.xlu0 %6615
    %6617 = vset.pattern.permute.xlu0 0
    %6618 = vperm.xlu0 %6617, %v4821
    %v6619 = vpop.permute.xlu0 %6618
    %6620 = vset.pattern.permute.xlu0 0
    %6621 = vperm.xlu0 %6620, %v4838
    %v6622 = vpop.permute.xlu0 %6621
    %6623 = vset.pattern.permute.xlu0 0
    %6624 = vperm.xlu0 %6623, %v4855
    %v6625 = vpop.permute.xlu0 %6624
    %6626 = vset.pattern.permute.xlu0 0
    %6627 = vperm.xlu0 %6626, %v4872
    %v6628 = vpop.permute.xlu0 %6627
    %6629 = vset.pattern.permute.xlu0 0
    %6630 = vperm.xlu0 %6629, %v4889
    %v6631 = vpop.permute.xlu0 %6630
    %6632 = vset.pattern.permute.xlu0 0
    %6633 = vperm.xlu0 %6632, %v4906
    %v6634 = vpop.permute.xlu0 %6633
    %6635 = vset.pattern.permute.xlu0 0
    %6636 = vperm.xlu0 %6635, %v4923
    %v6637 = vpop.permute.xlu0 %6636
    %6638 = vset.pattern.permute.xlu0 0
    %6639 = vperm.xlu0 %6638, %v4940
    %v6640 = vpop.permute.xlu0 %6639
    %6641 = vset.pattern.permute.xlu0 0
    %6642 = vperm.xlu0 %6641, %v4957
    %v6643 = vpop.permute.xlu0 %6642
    %6644 = vset.pattern.permute.xlu0 0
    %6645 = vperm.xlu0 %6644, %v4974
    %v6646 = vpop.permute.xlu0 %6645
    %6647 = vset.pattern.permute.xlu0 0
    %6648 = vperm.xlu0 %6647, %v4991
    %v6649 = vpop.permute.xlu0 %6648
    %6650 = vset.pattern.permute.xlu0 0
    %6651 = vperm.xlu0 %6650, %v5008
    %v6652 = vpop.permute.xlu0 %6651
    %6653 = vset.pattern.permute.xlu0 0
    %6654 = vperm.xlu0 %6653, %v5025
    %v6655 = vpop.permute.xlu0 %6654
    %6656 = vset.pattern.permute.xlu0 0
    %6657 = vperm.xlu0 %6656, %v5042
    %v6658 = vpop.permute.xlu0 %6657
    %6659 = vset.pattern.permute.xlu0 0
    %6660 = vperm.xlu0 %6659, %v5059
    %v6661 = vpop.permute.xlu0 %6660
    %6662 = vset.pattern.permute.xlu0 0
    %6663 = vperm.xlu0 %6662, %v5076
    %v6664 = vpop.permute.xlu0 %6663
    %6665 = vset.pattern.permute.xlu0 0
    %6666 = vperm.xlu0 %6665, %v5093
    %v6667 = vpop.permute.xlu0 %6666
    %6668 = vset.pattern.permute.xlu0 0
    %6669 = vperm.xlu0 %6668, %v5110
    %v6670 = vpop.permute.xlu0 %6669
    %6671 = vset.pattern.permute.xlu0 0
    %6672 = vperm.xlu0 %6671, %v5127
    %v6673 = vpop.permute.xlu0 %6672
    %6674 = vset.pattern.permute.xlu0 0
    %6675 = vperm.xlu0 %6674, %v5144
    %v6676 = vpop.permute.xlu0 %6675
    %6677 = vset.pattern.permute.xlu0 0
    %6678 = vperm.xlu0 %6677, %v5161
    %v6679 = vpop.permute.xlu0 %6678
    %6680 = vset.pattern.permute.xlu0 0
    %6681 = vperm.xlu0 %6680, %v5178
    %v6682 = vpop.permute.xlu0 %6681
    %6683 = vset.pattern.permute.xlu0 0
    %6684 = vperm.xlu0 %6683, %v5195
    %v6685 = vpop.permute.xlu0 %6684
    %6686 = vset.pattern.permute.xlu0 0
    %6687 = vperm.xlu0 %6686, %v5212
    %v6688 = vpop.permute.xlu0 %6687
    %6689 = vset.pattern.permute.xlu0 0
    %6690 = vperm.xlu0 %6689, %v5229
    %v6691 = vpop.permute.xlu0 %6690
    %6692 = vset.pattern.permute.xlu0 0
    %6693 = vperm.xlu0 %6692, %v5246
    %v6694 = vpop.permute.xlu0 %6693
    %6695 = vset.pattern.permute.xlu0 0
    %6696 = vperm.xlu0 %6695, %v5263
    %v6697 = vpop.permute.xlu0 %6696
    %6698 = vset.pattern.permute.xlu0 0
    %6699 = vperm.xlu0 %6698, %v5280
    %v6700 = vpop.permute.xlu0 %6699
    %6701 = vset.pattern.permute.xlu0 0
    %6702 = vperm.xlu0 %6701, %v5297
    %v6703 = vpop.permute.xlu0 %6702
    %6704 = vset.pattern.permute.xlu0 0
    %6705 = vperm.xlu0 %6704, %v5314
    %v6706 = vpop.permute.xlu0 %6705
    %6707 = vset.pattern.permute.xlu0 0
    %6708 = vperm.xlu0 %6707, %v5331
    %v6709 = vpop.permute.xlu0 %6708
    %6710 = vset.pattern.permute.xlu0 0
    %6711 = vperm.xlu0 %6710, %v5348
    %v6712 = vpop.permute.xlu0 %6711
    %6713 = vset.pattern.permute.xlu0 0
    %6714 = vperm.xlu0 %6713, %v5365
    %v6715 = vpop.permute.xlu0 %6714
    %6716 = vset.pattern.permute.xlu0 0
    %6717 = vperm.xlu0 %6716, %v5382
    %v6718 = vpop.permute.xlu0 %6717
    %6719 = vset.pattern.permute.xlu0 0
    %6720 = vperm.xlu0 %6719, %v5399
    %v6721 = vpop.permute.xlu0 %6720
    %6722 = vset.pattern.permute.xlu0 0
    %6723 = vperm.xlu0 %6722, %v5416
    %v6724 = vpop.permute.xlu0 %6723
    %6725 = vset.pattern.permute.xlu0 0
    %6726 = vperm.xlu0 %6725, %v5433
    %v6727 = vpop.permute.xlu0 %6726
    %6728 = vset.pattern.permute.xlu0 0
    %6729 = vperm.xlu0 %6728, %v5450
    %v6730 = vpop.permute.xlu0 %6729
    %6731 = vset.pattern.permute.xlu0 0
    %6732 = vperm.xlu0 %6731, %v5467
    %v6733 = vpop.permute.xlu0 %6732
    %6734 = vset.pattern.permute.xlu0 0
    %6735 = vperm.xlu0 %6734, %v5484
    %v6736 = vpop.permute.xlu0 %6735
    %6737 = vset.pattern.permute.xlu0 0
    %6738 = vperm.xlu0 %6737, %v5501
    %v6739 = vpop.permute.xlu0 %6738
    %6740 = vset.pattern.permute.xlu0 0
    %6741 = vperm.xlu0 %6740, %v5518
    %v6742 = vpop.permute.xlu0 %6741
    %6743 = vset.pattern.permute.xlu0 0
    %6744 = vperm.xlu0 %6743, %v5535
    %v6745 = vpop.permute.xlu0 %6744
    %6746 = vset.pattern.permute.xlu0 0
    %6747 = vperm.xlu0 %6746, %v5552
    %v6748 = vpop.permute.xlu0 %6747
    %6749 = vset.pattern.permute.xlu0 0
    %6750 = vperm.xlu0 %6749, %v5569
    %v6751 = vpop.permute.xlu0 %6750
    %6752 = vset.pattern.permute.xlu0 0
    %6753 = vperm.xlu0 %6752, %v5586
    %v6754 = vpop.permute.xlu0 %6753
    %6755 = vset.pattern.permute.xlu0 0
    %6756 = vperm.xlu0 %6755, %v5603
    %v6757 = vpop.permute.xlu0 %6756
    %6758 = vset.pattern.permute.xlu0 0
    %6759 = vperm.xlu0 %6758, %v5620
    %v6760 = vpop.permute.xlu0 %6759
    %6761 = vset.pattern.permute.xlu0 0
    %6762 = vperm.xlu0 %6761, %v5637
    %v6763 = vpop.permute.xlu0 %6762
    %6764 = vset.pattern.permute.xlu0 0
    %6765 = vperm.xlu0 %6764, %v5654
    %v6766 = vpop.permute.xlu0 %6765
    %6767 = vset.pattern.permute.xlu0 0
    %6768 = vperm.xlu0 %6767, %v5671
    %v6769 = vpop.permute.xlu0 %6768
    %6770 = vset.pattern.permute.xlu0 0
    %6771 = vperm.xlu0 %6770, %v5688
    %v6772 = vpop.permute.xlu0 %6771
    %6773 = vset.pattern.permute.xlu0 0
    %6774 = vperm.xlu0 %6773, %v5705
    %v6775 = vpop.permute.xlu0 %6774
    %6776 = vset.pattern.permute.xlu0 0
    %6777 = vperm.xlu0 %6776, %v5722
    %v6778 = vpop.permute.xlu0 %6777
    %6779 = vset.pattern.permute.xlu0 0
    %6780 = vperm.xlu0 %6779, %v5739
    %v6781 = vpop.permute.xlu0 %6780
    %6782 = vset.pattern.permute.xlu0 0
    %6783 = vperm.xlu0 %6782, %v5756
    %v6784 = vpop.permute.xlu0 %6783
    %6785 = vset.pattern.permute.xlu0 0
    %6786 = vperm.xlu0 %6785, %v5773
    %v6787 = vpop.permute.xlu0 %6786
    %6788 = vset.pattern.permute.xlu0 0
    %6789 = vperm.xlu0 %6788, %v5790
    %v6790 = vpop.permute.xlu0 %6789
    %6791 = vset.pattern.permute.xlu0 0
    %6792 = vperm.xlu0 %6791, %v5807
    %v6793 = vpop.permute.xlu0 %6792
    %6794 = vset.pattern.permute.xlu0 0
    %6795 = vperm.xlu0 %6794, %v5824
    %v6796 = vpop.permute.xlu0 %6795
    %6797 = vset.pattern.permute.xlu0 0
    %6798 = vperm.xlu0 %6797, %v5841
    %v6799 = vpop.permute.xlu0 %6798
    %6800 = vset.pattern.permute.xlu0 0
    %6801 = vperm.xlu0 %6800, %v5858
    %v6802 = vpop.permute.xlu0 %6801
    %6803 = vset.pattern.permute.xlu0 0
    %6804 = vperm.xlu0 %6803, %v5875
    %v6805 = vpop.permute.xlu0 %6804
    %6806 = vset.pattern.permute.xlu0 0
    %6807 = vperm.xlu0 %6806, %v5892
    %v6808 = vpop.permute.xlu0 %6807
    %6809 = vset.pattern.permute.xlu0 0
    %6810 = vperm.xlu0 %6809, %v5909
    %v6811 = vpop.permute.xlu0 %6810
    %6812 = vset.pattern.permute.xlu0 0
    %6813 = vperm.xlu0 %6812, %v5926
    %v6814 = vpop.permute.xlu0 %6813
    %6815 = vset.pattern.permute.xlu0 0
    %6816 = vperm.xlu0 %6815, %v5943
    %v6817 = vpop.permute.xlu0 %6816
    %6818 = vset.pattern.permute.xlu0 0
    %6819 = vperm.xlu0 %6818, %v5960
    %v6820 = vpop.permute.xlu0 %6819
    %6821 = vset.pattern.permute.xlu0 0
    %6822 = vperm.xlu0 %6821, %v5977
    %v6823 = vpop.permute.xlu0 %6822
    %6824 = vset.pattern.permute.xlu0 0
    %6825 = vperm.xlu0 %6824, %v5994
    %v6826 = vpop.permute.xlu0 %6825
    %6827 = vset.pattern.permute.xlu0 0
    %6828 = vperm.xlu0 %6827, %v6011
    %v6829 = vpop.permute.xlu0 %6828
    %6830 = vset.pattern.permute.xlu0 0
    %6831 = vperm.xlu0 %6830, %v6028
    %v6832 = vpop.permute.xlu0 %6831
    %6833 = vset.pattern.permute.xlu0 0
    %6834 = vperm.xlu0 %6833, %v6045
    %v6835 = vpop.permute.xlu0 %6834
    %6836 = vset.pattern.permute.xlu0 0
    %6837 = vperm.xlu0 %6836, %v6062
    %v6838 = vpop.permute.xlu0 %6837
    %6839 = vset.pattern.permute.xlu0 0
    %6840 = vperm.xlu0 %6839, %v6079
    %v6841 = vpop.permute.xlu0 %6840
    %6842 = vset.pattern.permute.xlu0 0
    %6843 = vperm.xlu0 %6842, %v6096
    %v6844 = vpop.permute.xlu0 %6843
    %6845 = vset.pattern.permute.xlu0 0
    %6846 = vperm.xlu0 %6845, %v6113
    %v6847 = vpop.permute.xlu0 %6846
    %6848 = vset.pattern.permute.xlu0 0
    %6849 = vperm.xlu0 %6848, %v6130
    %v6850 = vpop.permute.xlu0 %6849
    %6851 = vset.pattern.permute.xlu0 0
    %6852 = vperm.xlu0 %6851, %v6147
    %v6853 = vpop.permute.xlu0 %6852
    %6854 = vset.pattern.permute.xlu0 0
    %6855 = vperm.xlu0 %6854, %v6164
    %v6856 = vpop.permute.xlu0 %6855
    %6857 = vset.pattern.permute.xlu0 0
    %6858 = vperm.xlu0 %6857, %v6181
    %v6859 = vpop.permute.xlu0 %6858
    %6860 = vset.pattern.permute.xlu0 0
    %6861 = vperm.xlu0 %6860, %v6198
    %v6862 = vpop.permute.xlu0 %6861
    %6863 = vset.pattern.permute.xlu0 0
    %6864 = vperm.xlu0 %6863, %v6215
    %v6865 = vpop.permute.xlu0 %6864
    %6866 = vset.pattern.permute.xlu0 0
    %6867 = vperm.xlu0 %6866, %v6232
    %v6868 = vpop.permute.xlu0 %6867
    %6869 = vset.pattern.permute.xlu0 0
    %6870 = vperm.xlu0 %6869, %v6249
    %v6871 = vpop.permute.xlu0 %6870
    %6872 = vset.pattern.permute.xlu0 0
    %6873 = vperm.xlu0 %6872, %v6266
    %v6874 = vpop.permute.xlu0 %6873
    %6875 = vset.pattern.permute.xlu0 0
    %6876 = vperm.xlu0 %6875, %v6283
    %v6877 = vpop.permute.xlu0 %6876
    %6878 = vset.pattern.permute.xlu0 0
    %6879 = vperm.xlu0 %6878, %v6300
    %v6880 = vpop.permute.xlu0 %6879
    %6881 = vset.pattern.permute.xlu0 0
    %6882 = vperm.xlu0 %6881, %v6317
    %v6883 = vpop.permute.xlu0 %6882
    %6884 = vset.pattern.permute.xlu0 0
    %6885 = vperm.xlu0 %6884, %v6334
    %v6886 = vpop.permute.xlu0 %6885
    %6887 = vset.pattern.permute.xlu0 0
    %6888 = vperm.xlu0 %6887, %v6351
    %v6889 = vpop.permute.xlu0 %6888
    %6890 = vset.pattern.permute.xlu0 0
    %6891 = vperm.xlu0 %6890, %v6368
    %v6892 = vpop.permute.xlu0 %6891
    %6893 = vset.pattern.permute.xlu0 0
    %6894 = vperm.xlu0 %6893, %v6385
    %v6895 = vpop.permute.xlu0 %6894
    %6896 = vset.pattern.permute.xlu0 0
    %6897 = vperm.xlu0 %6896, %v6402
    %v6898 = vpop.permute.xlu0 %6897
    %6899 = vset.pattern.permute.xlu0 0
    %6900 = vperm.xlu0 %6899, %v6419
    %v6901 = vpop.permute.xlu0 %6900
    %6902 = vset.pattern.permute.xlu0 0
    %6903 = vperm.xlu0 %6902, %v6436
    %v6904 = vpop.permute.xlu0 %6903
    %6905 = vset.pattern.permute.xlu0 0
    %6906 = vperm.xlu0 %6905, %v6453
    %v6907 = vpop.permute.xlu0 %6906
    %6908 = vset.pattern.permute.xlu0 0
    %6909 = vperm.xlu0 %6908, %v6470
    %v6910 = vpop.permute.xlu0 %6909
    %6911 = vset.pattern.permute.xlu0 0
    %6912 = vperm.xlu0 %6911, %v6487
    %v6913 = vpop.permute.xlu0 %6912
    %6914 = vset.pattern.permute.xlu0 0
    %6915 = vperm.xlu0 %6914, %v6504
    %v6916 = vpop.permute.xlu0 %6915
    %6917 = vset.pattern.permute.xlu0 0
    %6918 = vperm.xlu0 %6917, %v6521
    %v6919 = vpop.permute.xlu0 %6918
    %6920 = vset.pattern.permute.xlu0 0
    %6921 = vperm.xlu0 %6920, %v6538
    %v6922 = vpop.permute.xlu0 %6921
    %v6923 = vlaneseq
    %v6924 = vand.u32 %v6923, 127
    %v6925 = vlaneseq
    %v6926 = vshrl.u32 %v6925, 7
    %v6927 = vsub.s32 %v6924, %v6926
    %v6928 = vrot.slane %v6541, %v6927
    %v6929 = vadd.s32 %v6924, 4294967288
    %v6930 = vlaneseq
    %v6931 = vshrl.u32 %v6930, 7
    %v6932 = vsub.s32 %v6929, %v6931
    %v6933 = vrot.slane %v6544, %v6932
    %vm6934 = vcmask 130112
    %v6935 = vsel %vm6934, %v6933, %v6928
    %v6936 = vadd.s32 %v6924, 4294967280
    %v6937 = vlaneseq
    %v6938 = vshrl.u32 %v6937, 7
    %v6939 = vsub.s32 %v6936, %v6938
    %v6940 = vrot.slane %v6547, %v6939
    %vm6941 = vcmask 195712
    %v6942 = vsel %vm6941, %v6940, %v6935
    %v6943 = vadd.s32 %v6924, 4294967272
    %v6944 = vlaneseq
    %v6945 = vshrl.u32 %v6944, 7
    %v6946 = vsub.s32 %v6943, %v6945
    %v6947 = vrot.slane %v6550, %v6946
    %vm6948 = vcmask 261312
    %v6949 = vsel %vm6948, %v6947, %v6942
    %v6950 = vadd.s32 %v6924, 4294967264
    %v6951 = vlaneseq
    %v6952 = vshrl.u32 %v6951, 7
    %v6953 = vsub.s32 %v6950, %v6952
    %v6954 = vrot.slane %v6553, %v6953
    %vm6955 = vcmask 326912
    %v6956 = vsel %vm6955, %v6954, %v6949
    %v6957 = vadd.s32 %v6924, 4294967256
    %v6958 = vlaneseq
    %v6959 = vshrl.u32 %v6958, 7
    %v6960 = vsub.s32 %v6957, %v6959
    %v6961 = vrot.slane %v6556, %v6960
    %vm6962 = vcmask 392512
    %v6963 = vsel %vm6962, %v6961, %v6956
    %v6964 = vadd.s32 %v6924, 4294967248
    %v6965 = vlaneseq
    %v6966 = vshrl.u32 %v6965, 7
    %v6967 = vsub.s32 %v6964, %v6966
    %v6968 = vrot.slane %v6559, %v6967
    %vm6969 = vcmask 458112
    %v6970 = vsel %vm6969, %v6968, %v6963
    %v6971 = vadd.s32 %v6924, 4294967240
    %v6972 = vlaneseq
    %v6973 = vshrl.u32 %v6972, 7
    %v6974 = vsub.s32 %v6971, %v6973
    %v6975 = vrot.slane %v6562, %v6974
    %vm6976 = vcmask 523712
    %v6977 = vsel %vm6976, %v6975, %v6970
    %v6978 = vadd.s32 %v6924, 4294967232
    %v6979 = vlaneseq
    %v6980 = vshrl.u32 %v6979, 7
    %v6981 = vsub.s32 %v6978, %v6980
    %v6982 = vrot.slane %v6565, %v6981
    %vm6983 = vcmask 589312
    %v6984 = vsel %vm6983, %v6982, %v6977
    %v6985 = vadd.s32 %v6924, 4294967224
    %v6986 = vlaneseq
    %v6987 = vshrl.u32 %v6986, 7
    %v6988 = vsub.s32 %v6985, %v6987
    %v6989 = vrot.slane %v6568, %v6988
    %vm6990 = vcmask 654912
    %v6991 = vsel %vm6990, %v6989, %v6984
    %v6992 = vadd.s32 %v6924, 4294967216
    %v6993 = vlaneseq
    %v6994 = vshrl.u32 %v6993, 7
    %v6995 = vsub.s32 %v6992, %v6994
    %v6996 = vrot.slane %v6571, %v6995
    %vm6997 = vcmask 720512
    %v6998 = vsel %vm6997, %v6996, %v6991
    %v6999 = vadd.s32 %v6924, 4294967208
    %v7000 = vlaneseq
    %v7001 = vshrl.u32 %v7000, 7
    %v7002 = vsub.s32 %v6999, %v7001
    %v7003 = vrot.slane %v6574, %v7002
    %vm7004 = vcmask 786112
    %v7005 = vsel %vm7004, %v7003, %v6998
    %v7006 = vadd.s32 %v6924, 4294967200
    %v7007 = vlaneseq
    %v7008 = vshrl.u32 %v7007, 7
    %v7009 = vsub.s32 %v7006, %v7008
    %v7010 = vrot.slane %v6577, %v7009
    %vm7011 = vcmask 851712
    %v7012 = vsel %vm7011, %v7010, %v7005
    %v7013 = vadd.s32 %v6924, 4294967192
    %v7014 = vlaneseq
    %v7015 = vshrl.u32 %v7014, 7
    %v7016 = vsub.s32 %v7013, %v7015
    %v7017 = vrot.slane %v6580, %v7016
    %vm7018 = vcmask 917312
    %v7019 = vsel %vm7018, %v7017, %v7012
    %v7020 = vadd.s32 %v6924, 4294967184
    %v7021 = vlaneseq
    %v7022 = vshrl.u32 %v7021, 7
    %v7023 = vsub.s32 %v7020, %v7022
    %v7024 = vrot.slane %v6583, %v7023
    %vm7025 = vcmask 982912
    %v7026 = vsel %vm7025, %v7024, %v7019
    %v7027 = vadd.s32 %v6924, 4294967176
    %v7028 = vlaneseq
    %v7029 = vshrl.u32 %v7028, 7
    %v7030 = vsub.s32 %v7027, %v7029
    %v7031 = vrot.slane %v6586, %v7030
    %vm7032 = vcmask 1048512
    %v7033 = vsel %vm7032, %v7031, %v7026
    %v7034 = vlaneseq
    %v7035 = vshrl.u32 %v7034, 7
    %v7036 = vsub.s32 %v6924, %v7035
    %v7037 = vrot.slane %v6589, %v7036
    %v7038 = vlaneseq
    %v7039 = vshrl.u32 %v7038, 7
    %v7040 = vsub.s32 %v6929, %v7039
    %v7041 = vrot.slane %v6592, %v7040
    %v7042 = vsel %vm6934, %v7041, %v7037
    %v7043 = vlaneseq
    %v7044 = vshrl.u32 %v7043, 7
    %v7045 = vsub.s32 %v6936, %v7044
    %v7046 = vrot.slane %v6595, %v7045
    %v7047 = vsel %vm6941, %v7046, %v7042
    %v7048 = vlaneseq
    %v7049 = vshrl.u32 %v7048, 7
    %v7050 = vsub.s32 %v6943, %v7049
    %v7051 = vrot.slane %v6598, %v7050
    %v7052 = vsel %vm6948, %v7051, %v7047
    %v7053 = vlaneseq
    %v7054 = vshrl.u32 %v7053, 7
    %v7055 = vsub.s32 %v6950, %v7054
    %v7056 = vrot.slane %v6601, %v7055
    %v7057 = vsel %vm6955, %v7056, %v7052
    %v7058 = vlaneseq
    %v7059 = vshrl.u32 %v7058, 7
    %v7060 = vsub.s32 %v6957, %v7059
    %v7061 = vrot.slane %v6604, %v7060
    %v7062 = vsel %vm6962, %v7061, %v7057
    %v7063 = vlaneseq
    %v7064 = vshrl.u32 %v7063, 7
    %v7065 = vsub.s32 %v6964, %v7064
    %v7066 = vrot.slane %v6607, %v7065
    %v7067 = vsel %vm6969, %v7066, %v7062
    %v7068 = vlaneseq
    %v7069 = vshrl.u32 %v7068, 7
    %v7070 = vsub.s32 %v6971, %v7069
    %v7071 = vrot.slane %v6610, %v7070
    %v7072 = vsel %vm6976, %v7071, %v7067
    %v7073 = vlaneseq
    %v7074 = vshrl.u32 %v7073, 7
    %v7075 = vsub.s32 %v6978, %v7074
    %v7076 = vrot.slane %v6613, %v7075
    %v7077 = vsel %vm6983, %v7076, %v7072
    %v7078 = vlaneseq
    %v7079 = vshrl.u32 %v7078, 7
    %v7080 = vsub.s32 %v6985, %v7079
    %v7081 = vrot.slane %v6616, %v7080
    %v7082 = vsel %vm6990, %v7081, %v7077
    %v7083 = vlaneseq
    %v7084 = vshrl.u32 %v7083, 7
    %v7085 = vsub.s32 %v6992, %v7084
    %v7086 = vrot.slane %v6619, %v7085
    %v7087 = vsel %vm6997, %v7086, %v7082
    %v7088 = vlaneseq
    %v7089 = vshrl.u32 %v7088, 7
    %v7090 = vsub.s32 %v6999, %v7089
    %v7091 = vrot.slane %v6622, %v7090
    %v7092 = vsel %vm7004, %v7091, %v7087
    %v7093 = vlaneseq
    %v7094 = vshrl.u32 %v7093, 7
    %v7095 = vsub.s32 %v7006, %v7094
    %v7096 = vrot.slane %v6625, %v7095
    %v7097 = vsel %vm7011, %v7096, %v7092
    %v7098 = vlaneseq
    %v7099 = vshrl.u32 %v7098, 7
    %v7100 = vsub.s32 %v7013, %v7099
    %v7101 = vrot.slane %v6628, %v7100
    %v7102 = vsel %vm7018, %v7101, %v7097
    %v7103 = vlaneseq
    %v7104 = vshrl.u32 %v7103, 7
    %v7105 = vsub.s32 %v7020, %v7104
    %v7106 = vrot.slane %v6631, %v7105
    %v7107 = vsel %vm7025, %v7106, %v7102
    %v7108 = vlaneseq
    %v7109 = vshrl.u32 %v7108, 7
    %v7110 = vsub.s32 %v7027, %v7109
    %v7111 = vrot.slane %v6634, %v7110
    %v7112 = vsel %vm7032, %v7111, %v7107
    %v7113 = vlaneseq
    %v7114 = vshrl.u32 %v7113, 7
    %v7115 = vsub.s32 %v6924, %v7114
    %v7116 = vrot.slane %v6637, %v7115
    %v7117 = vlaneseq
    %v7118 = vshrl.u32 %v7117, 7
    %v7119 = vsub.s32 %v6929, %v7118
    %v7120 = vrot.slane %v6640, %v7119
    %v7121 = vsel %vm6934, %v7120, %v7116
    %v7122 = vlaneseq
    %v7123 = vshrl.u32 %v7122, 7
    %v7124 = vsub.s32 %v6936, %v7123
    %v7125 = vrot.slane %v6643, %v7124
    %v7126 = vsel %vm6941, %v7125, %v7121
    %v7127 = vlaneseq
    %v7128 = vshrl.u32 %v7127, 7
    %v7129 = vsub.s32 %v6943, %v7128
    %v7130 = vrot.slane %v6646, %v7129
    %v7131 = vsel %vm6948, %v7130, %v7126
    %v7132 = vlaneseq
    %v7133 = vshrl.u32 %v7132, 7
    %v7134 = vsub.s32 %v6950, %v7133
    %v7135 = vrot.slane %v6649, %v7134
    %v7136 = vsel %vm6955, %v7135, %v7131
    %v7137 = vlaneseq
    %v7138 = vshrl.u32 %v7137, 7
    %v7139 = vsub.s32 %v6957, %v7138
    %v7140 = vrot.slane %v6652, %v7139
    %v7141 = vsel %vm6962, %v7140, %v7136
    %v7142 = vlaneseq
    %v7143 = vshrl.u32 %v7142, 7
    %v7144 = vsub.s32 %v6964, %v7143
    %v7145 = vrot.slane %v6655, %v7144
    %v7146 = vsel %vm6969, %v7145, %v7141
    %v7147 = vlaneseq
    %v7148 = vshrl.u32 %v7147, 7
    %v7149 = vsub.s32 %v6971, %v7148
    %v7150 = vrot.slane %v6658, %v7149
    %v7151 = vsel %vm6976, %v7150, %v7146
    %v7152 = vlaneseq
    %v7153 = vshrl.u32 %v7152, 7
    %v7154 = vsub.s32 %v6978, %v7153
    %v7155 = vrot.slane %v6661, %v7154
    %v7156 = vsel %vm6983, %v7155, %v7151
    %v7157 = vlaneseq
    %v7158 = vshrl.u32 %v7157, 7
    %v7159 = vsub.s32 %v6985, %v7158
    %v7160 = vrot.slane %v6664, %v7159
    %v7161 = vsel %vm6990, %v7160, %v7156
    %v7162 = vlaneseq
    %v7163 = vshrl.u32 %v7162, 7
    %v7164 = vsub.s32 %v6992, %v7163
    %v7165 = vrot.slane %v6667, %v7164
    %v7166 = vsel %vm6997, %v7165, %v7161
    %v7167 = vlaneseq
    %v7168 = vshrl.u32 %v7167, 7
    %v7169 = vsub.s32 %v6999, %v7168
    %v7170 = vrot.slane %v6670, %v7169
    %v7171 = vsel %vm7004, %v7170, %v7166
    %v7172 = vlaneseq
    %v7173 = vshrl.u32 %v7172, 7
    %v7174 = vsub.s32 %v7006, %v7173
    %v7175 = vrot.slane %v6673, %v7174
    %v7176 = vsel %vm7011, %v7175, %v7171
    %v7177 = vlaneseq
    %v7178 = vshrl.u32 %v7177, 7
    %v7179 = vsub.s32 %v7013, %v7178
    %v7180 = vrot.slane %v6676, %v7179
    %v7181 = vsel %vm7018, %v7180, %v7176
    %v7182 = vlaneseq
    %v7183 = vshrl.u32 %v7182, 7
    %v7184 = vsub.s32 %v7020, %v7183
    %v7185 = vrot.slane %v6679, %v7184
    %v7186 = vsel %vm7025, %v7185, %v7181
    %v7187 = vlaneseq
    %v7188 = vshrl.u32 %v7187, 7
    %v7189 = vsub.s32 %v7027, %v7188
    %v7190 = vrot.slane %v6682, %v7189
    %v7191 = vsel %vm7032, %v7190, %v7186
    %v7192 = vlaneseq
    %v7193 = vshrl.u32 %v7192, 7
    %v7194 = vsub.s32 %v6924, %v7193
    %v7195 = vrot.slane %v6685, %v7194
    %v7196 = vlaneseq
    %v7197 = vshrl.u32 %v7196, 7
    %v7198 = vsub.s32 %v6929, %v7197
    %v7199 = vrot.slane %v6688, %v7198
    %v7200 = vsel %vm6934, %v7199, %v7195
    %v7201 = vlaneseq
    %v7202 = vshrl.u32 %v7201, 7
    %v7203 = vsub.s32 %v6936, %v7202
    %v7204 = vrot.slane %v6691, %v7203
    %v7205 = vsel %vm6941, %v7204, %v7200
    %v7206 = vlaneseq
    %v7207 = vshrl.u32 %v7206, 7
    %v7208 = vsub.s32 %v6943, %v7207
    %v7209 = vrot.slane %v6694, %v7208
    %v7210 = vsel %vm6948, %v7209, %v7205
    %v7211 = vlaneseq
    %v7212 = vshrl.u32 %v7211, 7
    %v7213 = vsub.s32 %v6950, %v7212
    %v7214 = vrot.slane %v6697, %v7213
    %v7215 = vsel %vm6955, %v7214, %v7210
    %v7216 = vlaneseq
    %v7217 = vshrl.u32 %v7216, 7
    %v7218 = vsub.s32 %v6957, %v7217
    %v7219 = vrot.slane %v6700, %v7218
    %v7220 = vsel %vm6962, %v7219, %v7215
    %v7221 = vlaneseq
    %v7222 = vshrl.u32 %v7221, 7
    %v7223 = vsub.s32 %v6964, %v7222
    %v7224 = vrot.slane %v6703, %v7223
    %v7225 = vsel %vm6969, %v7224, %v7220
    %v7226 = vlaneseq
    %v7227 = vshrl.u32 %v7226, 7
    %v7228 = vsub.s32 %v6971, %v7227
    %v7229 = vrot.slane %v6706, %v7228
    %v7230 = vsel %vm6976, %v7229, %v7225
    %v7231 = vlaneseq
    %v7232 = vshrl.u32 %v7231, 7
    %v7233 = vsub.s32 %v6978, %v7232
    %v7234 = vrot.slane %v6709, %v7233
    %v7235 = vsel %vm6983, %v7234, %v7230
    %v7236 = vlaneseq
    %v7237 = vshrl.u32 %v7236, 7
    %v7238 = vsub.s32 %v6985, %v7237
    %v7239 = vrot.slane %v6712, %v7238
    %v7240 = vsel %vm6990, %v7239, %v7235
    %v7241 = vlaneseq
    %v7242 = vshrl.u32 %v7241, 7
    %v7243 = vsub.s32 %v6992, %v7242
    %v7244 = vrot.slane %v6715, %v7243
    %v7245 = vsel %vm6997, %v7244, %v7240
    %v7246 = vlaneseq
    %v7247 = vshrl.u32 %v7246, 7
    %v7248 = vsub.s32 %v6999, %v7247
    %v7249 = vrot.slane %v6718, %v7248
    %v7250 = vsel %vm7004, %v7249, %v7245
    %v7251 = vlaneseq
    %v7252 = vshrl.u32 %v7251, 7
    %v7253 = vsub.s32 %v7006, %v7252
    %v7254 = vrot.slane %v6721, %v7253
    %v7255 = vsel %vm7011, %v7254, %v7250
    %v7256 = vlaneseq
    %v7257 = vshrl.u32 %v7256, 7
    %v7258 = vsub.s32 %v7013, %v7257
    %v7259 = vrot.slane %v6724, %v7258
    %v7260 = vsel %vm7018, %v7259, %v7255
    %v7261 = vlaneseq
    %v7262 = vshrl.u32 %v7261, 7
    %v7263 = vsub.s32 %v7020, %v7262
    %v7264 = vrot.slane %v6727, %v7263
    %v7265 = vsel %vm7025, %v7264, %v7260
    %v7266 = vlaneseq
    %v7267 = vshrl.u32 %v7266, 7
    %v7268 = vsub.s32 %v7027, %v7267
    %v7269 = vrot.slane %v6730, %v7268
    %v7270 = vsel %vm7032, %v7269, %v7265
    %v7271 = vlaneseq
    %v7272 = vshrl.u32 %v7271, 7
    %v7273 = vsub.s32 %v6924, %v7272
    %v7274 = vrot.slane %v6733, %v7273
    %v7275 = vlaneseq
    %v7276 = vshrl.u32 %v7275, 7
    %v7277 = vsub.s32 %v6929, %v7276
    %v7278 = vrot.slane %v6736, %v7277
    %v7279 = vsel %vm6934, %v7278, %v7274
    %v7280 = vlaneseq
    %v7281 = vshrl.u32 %v7280, 7
    %v7282 = vsub.s32 %v6936, %v7281
    %v7283 = vrot.slane %v6739, %v7282
    %v7284 = vsel %vm6941, %v7283, %v7279
    %v7285 = vlaneseq
    %v7286 = vshrl.u32 %v7285, 7
    %v7287 = vsub.s32 %v6943, %v7286
    %v7288 = vrot.slane %v6742, %v7287
    %v7289 = vsel %vm6948, %v7288, %v7284
    %v7290 = vlaneseq
    %v7291 = vshrl.u32 %v7290, 7
    %v7292 = vsub.s32 %v6950, %v7291
    %v7293 = vrot.slane %v6745, %v7292
    %v7294 = vsel %vm6955, %v7293, %v7289
    %v7295 = vlaneseq
    %v7296 = vshrl.u32 %v7295, 7
    %v7297 = vsub.s32 %v6957, %v7296
    %v7298 = vrot.slane %v6748, %v7297
    %v7299 = vsel %vm6962, %v7298, %v7294
    %v7300 = vlaneseq
    %v7301 = vshrl.u32 %v7300, 7
    %v7302 = vsub.s32 %v6964, %v7301
    %v7303 = vrot.slane %v6751, %v7302
    %v7304 = vsel %vm6969, %v7303, %v7299
    %v7305 = vlaneseq
    %v7306 = vshrl.u32 %v7305, 7
    %v7307 = vsub.s32 %v6971, %v7306
    %v7308 = vrot.slane %v6754, %v7307
    %v7309 = vsel %vm6976, %v7308, %v7304
    %v7310 = vlaneseq
    %v7311 = vshrl.u32 %v7310, 7
    %v7312 = vsub.s32 %v6978, %v7311
    %v7313 = vrot.slane %v6757, %v7312
    %v7314 = vsel %vm6983, %v7313, %v7309
    %v7315 = vlaneseq
    %v7316 = vshrl.u32 %v7315, 7
    %v7317 = vsub.s32 %v6985, %v7316
    %v7318 = vrot.slane %v6760, %v7317
    %v7319 = vsel %vm6990, %v7318, %v7314
    %v7320 = vlaneseq
    %v7321 = vshrl.u32 %v7320, 7
    %v7322 = vsub.s32 %v6992, %v7321
    %v7323 = vrot.slane %v6763, %v7322
    %v7324 = vsel %vm6997, %v7323, %v7319
    %v7325 = vlaneseq
    %v7326 = vshrl.u32 %v7325, 7
    %v7327 = vsub.s32 %v6999, %v7326
    %v7328 = vrot.slane %v6766, %v7327
    %v7329 = vsel %vm7004, %v7328, %v7324
    %v7330 = vlaneseq
    %v7331 = vshrl.u32 %v7330, 7
    %v7332 = vsub.s32 %v7006, %v7331
    %v7333 = vrot.slane %v6769, %v7332
    %v7334 = vsel %vm7011, %v7333, %v7329
    %v7335 = vlaneseq
    %v7336 = vshrl.u32 %v7335, 7
    %v7337 = vsub.s32 %v7013, %v7336
    %v7338 = vrot.slane %v6772, %v7337
    %v7339 = vsel %vm7018, %v7338, %v7334
    %v7340 = vlaneseq
    %v7341 = vshrl.u32 %v7340, 7
    %v7342 = vsub.s32 %v7020, %v7341
    %v7343 = vrot.slane %v6775, %v7342
    %v7344 = vsel %vm7025, %v7343, %v7339
    %v7345 = vlaneseq
    %v7346 = vshrl.u32 %v7345, 7
    %v7347 = vsub.s32 %v7027, %v7346
    %v7348 = vrot.slane %v6778, %v7347
    %v7349 = vsel %vm7032, %v7348, %v7344
    %v7350 = vlaneseq
    %v7351 = vshrl.u32 %v7350, 7
    %v7352 = vsub.s32 %v6924, %v7351
    %v7353 = vrot.slane %v6781, %v7352
    %v7354 = vlaneseq
    %v7355 = vshrl.u32 %v7354, 7
    %v7356 = vsub.s32 %v6929, %v7355
    %v7357 = vrot.slane %v6784, %v7356
    %v7358 = vsel %vm6934, %v7357, %v7353
    %v7359 = vlaneseq
    %v7360 = vshrl.u32 %v7359, 7
    %v7361 = vsub.s32 %v6936, %v7360
    %v7362 = vrot.slane %v6787, %v7361
    %v7363 = vsel %vm6941, %v7362, %v7358
    %v7364 = vlaneseq
    %v7365 = vshrl.u32 %v7364, 7
    %v7366 = vsub.s32 %v6943, %v7365
    %v7367 = vrot.slane %v6790, %v7366
    %v7368 = vsel %vm6948, %v7367, %v7363
    %v7369 = vlaneseq
    %v7370 = vshrl.u32 %v7369, 7
    %v7371 = vsub.s32 %v6950, %v7370
    %v7372 = vrot.slane %v6793, %v7371
    %v7373 = vsel %vm6955, %v7372, %v7368
    %v7374 = vlaneseq
    %v7375 = vshrl.u32 %v7374, 7
    %v7376 = vsub.s32 %v6957, %v7375
    %v7377 = vrot.slane %v6796, %v7376
    %v7378 = vsel %vm6962, %v7377, %v7373
    %v7379 = vlaneseq
    %v7380 = vshrl.u32 %v7379, 7
    %v7381 = vsub.s32 %v6964, %v7380
    %v7382 = vrot.slane %v6799, %v7381
    %v7383 = vsel %vm6969, %v7382, %v7378
    %v7384 = vlaneseq
    %v7385 = vshrl.u32 %v7384, 7
    %v7386 = vsub.s32 %v6971, %v7385
    %v7387 = vrot.slane %v6802, %v7386
    %v7388 = vsel %vm6976, %v7387, %v7383
    %v7389 = vlaneseq
    %v7390 = vshrl.u32 %v7389, 7
    %v7391 = vsub.s32 %v6978, %v7390
    %v7392 = vrot.slane %v6805, %v7391
    %v7393 = vsel %vm6983, %v7392, %v7388
    %v7394 = vlaneseq
    %v7395 = vshrl.u32 %v7394, 7
    %v7396 = vsub.s32 %v6985, %v7395
    %v7397 = vrot.slane %v6808, %v7396
    %v7398 = vsel %vm6990, %v7397, %v7393
    %v7399 = vlaneseq
    %v7400 = vshrl.u32 %v7399, 7
    %v7401 = vsub.s32 %v6992, %v7400
    %v7402 = vrot.slane %v6811, %v7401
    %v7403 = vsel %vm6997, %v7402, %v7398
    %v7404 = vlaneseq
    %v7405 = vshrl.u32 %v7404, 7
    %v7406 = vsub.s32 %v6999, %v7405
    %v7407 = vrot.slane %v6814, %v7406
    %v7408 = vsel %vm7004, %v7407, %v7403
    %v7409 = vlaneseq
    %v7410 = vshrl.u32 %v7409, 7
    %v7411 = vsub.s32 %v7006, %v7410
    %v7412 = vrot.slane %v6817, %v7411
    %v7413 = vsel %vm7011, %v7412, %v7408
    %v7414 = vlaneseq
    %v7415 = vshrl.u32 %v7414, 7
    %v7416 = vsub.s32 %v7013, %v7415
    %v7417 = vrot.slane %v6820, %v7416
    %v7418 = vsel %vm7018, %v7417, %v7413
    %v7419 = vlaneseq
    %v7420 = vshrl.u32 %v7419, 7
    %v7421 = vsub.s32 %v7020, %v7420
    %v7422 = vrot.slane %v6823, %v7421
    %v7423 = vsel %vm7025, %v7422, %v7418
    %v7424 = vlaneseq
    %v7425 = vshrl.u32 %v7424, 7
    %v7426 = vsub.s32 %v7027, %v7425
    %v7427 = vrot.slane %v6826, %v7426
    %v7428 = vsel %vm7032, %v7427, %v7423
    %v7429 = vlaneseq
    %v7430 = vshrl.u32 %v7429, 7
    %v7431 = vsub.s32 %v6924, %v7430
    %v7432 = vrot.slane %v6829, %v7431
    %v7433 = vlaneseq
    %v7434 = vshrl.u32 %v7433, 7
    %v7435 = vsub.s32 %v6929, %v7434
    %v7436 = vrot.slane %v6832, %v7435
    %v7437 = vsel %vm6934, %v7436, %v7432
    %v7438 = vlaneseq
    %v7439 = vshrl.u32 %v7438, 7
    %v7440 = vsub.s32 %v6936, %v7439
    %v7441 = vrot.slane %v6835, %v7440
    %v7442 = vsel %vm6941, %v7441, %v7437
    %v7443 = vlaneseq
    %v7444 = vshrl.u32 %v7443, 7
    %v7445 = vsub.s32 %v6943, %v7444
    %v7446 = vrot.slane %v6838, %v7445
    %v7447 = vsel %vm6948, %v7446, %v7442
    %v7448 = vlaneseq
    %v7449 = vshrl.u32 %v7448, 7
    %v7450 = vsub.s32 %v6950, %v7449
    %v7451 = vrot.slane %v6841, %v7450
    %v7452 = vsel %vm6955, %v7451, %v7447
    %v7453 = vlaneseq
    %v7454 = vshrl.u32 %v7453, 7
    %v7455 = vsub.s32 %v6957, %v7454
    %v7456 = vrot.slane %v6844, %v7455
    %v7457 = vsel %vm6962, %v7456, %v7452
    %v7458 = vlaneseq
    %v7459 = vshrl.u32 %v7458, 7
    %v7460 = vsub.s32 %v6964, %v7459
    %v7461 = vrot.slane %v6847, %v7460
    %v7462 = vsel %vm6969, %v7461, %v7457
    %v7463 = vlaneseq
    %v7464 = vshrl.u32 %v7463, 7
    %v7465 = vsub.s32 %v6971, %v7464
    %v7466 = vrot.slane %v6850, %v7465
    %v7467 = vsel %vm6976, %v7466, %v7462
    %v7468 = vlaneseq
    %v7469 = vshrl.u32 %v7468, 7
    %v7470 = vsub.s32 %v6978, %v7469
    %v7471 = vrot.slane %v6853, %v7470
    %v7472 = vsel %vm6983, %v7471, %v7467
    %v7473 = vlaneseq
    %v7474 = vshrl.u32 %v7473, 7
    %v7475 = vsub.s32 %v6985, %v7474
    %v7476 = vrot.slane %v6856, %v7475
    %v7477 = vsel %vm6990, %v7476, %v7472
    %v7478 = vlaneseq
    %v7479 = vshrl.u32 %v7478, 7
    %v7480 = vsub.s32 %v6992, %v7479
    %v7481 = vrot.slane %v6859, %v7480
    %v7482 = vsel %vm6997, %v7481, %v7477
    %v7483 = vlaneseq
    %v7484 = vshrl.u32 %v7483, 7
    %v7485 = vsub.s32 %v6999, %v7484
    %v7486 = vrot.slane %v6862, %v7485
    %v7487 = vsel %vm7004, %v7486, %v7482
    %v7488 = vlaneseq
    %v7489 = vshrl.u32 %v7488, 7
    %v7490 = vsub.s32 %v7006, %v7489
    %v7491 = vrot.slane %v6865, %v7490
    %v7492 = vsel %vm7011, %v7491, %v7487
    %v7493 = vlaneseq
    %v7494 = vshrl.u32 %v7493, 7
    %v7495 = vsub.s32 %v7013, %v7494
    %v7496 = vrot.slane %v6868, %v7495
    %v7497 = vsel %vm7018, %v7496, %v7492
    %v7498 = vlaneseq
    %v7499 = vshrl.u32 %v7498, 7
    %v7500 = vsub.s32 %v7020, %v7499
    %v7501 = vrot.slane %v6871, %v7500
    %v7502 = vsel %vm7025, %v7501, %v7497
    %v7503 = vlaneseq
    %v7504 = vshrl.u32 %v7503, 7
    %v7505 = vsub.s32 %v7027, %v7504
    %v7506 = vrot.slane %v6874, %v7505
    %v7507 = vsel %vm7032, %v7506, %v7502
    %v7508 = vlaneseq
    %v7509 = vshrl.u32 %v7508, 7
    %v7510 = vsub.s32 %v6924, %v7509
    %v7511 = vrot.slane %v6877, %v7510
    %v7512 = vlaneseq
    %v7513 = vshrl.u32 %v7512, 7
    %v7514 = vsub.s32 %v6929, %v7513
    %v7515 = vrot.slane %v6880, %v7514
    %v7516 = vsel %vm6934, %v7515, %v7511
    %v7517 = vlaneseq
    %v7518 = vshrl.u32 %v7517, 7
    %v7519 = vsub.s32 %v6936, %v7518
    %v7520 = vrot.slane %v6883, %v7519
    %v7521 = vsel %vm6941, %v7520, %v7516
    %v7522 = vlaneseq
    %v7523 = vshrl.u32 %v7522, 7
    %v7524 = vsub.s32 %v6943, %v7523
    %v7525 = vrot.slane %v6886, %v7524
    %v7526 = vsel %vm6948, %v7525, %v7521
    %v7527 = vlaneseq
    %v7528 = vshrl.u32 %v7527, 7
    %v7529 = vsub.s32 %v6950, %v7528
    %v7530 = vrot.slane %v6889, %v7529
    %v7531 = vsel %vm6955, %v7530, %v7526
    %v7532 = vlaneseq
    %v7533 = vshrl.u32 %v7532, 7
    %v7534 = vsub.s32 %v6957, %v7533
    %v7535 = vrot.slane %v6892, %v7534
    %v7536 = vsel %vm6962, %v7535, %v7531
    %v7537 = vlaneseq
    %v7538 = vshrl.u32 %v7537, 7
    %v7539 = vsub.s32 %v6964, %v7538
    %v7540 = vrot.slane %v6895, %v7539
    %v7541 = vsel %vm6969, %v7540, %v7536
    %v7542 = vlaneseq
    %v7543 = vshrl.u32 %v7542, 7
    %v7544 = vsub.s32 %v6971, %v7543
    %v7545 = vrot.slane %v6898, %v7544
    %v7546 = vsel %vm6976, %v7545, %v7541
    %v7547 = vlaneseq
    %v7548 = vshrl.u32 %v7547, 7
    %v7549 = vsub.s32 %v6978, %v7548
    %v7550 = vrot.slane %v6901, %v7549
    %v7551 = vsel %vm6983, %v7550, %v7546
    %v7552 = vlaneseq
    %v7553 = vshrl.u32 %v7552, 7
    %v7554 = vsub.s32 %v6985, %v7553
    %v7555 = vrot.slane %v6904, %v7554
    %v7556 = vsel %vm6990, %v7555, %v7551
    %v7557 = vlaneseq
    %v7558 = vshrl.u32 %v7557, 7
    %v7559 = vsub.s32 %v6992, %v7558
    %v7560 = vrot.slane %v6907, %v7559
    %v7561 = vsel %vm6997, %v7560, %v7556
    %v7562 = vlaneseq
    %v7563 = vshrl.u32 %v7562, 7
    %v7564 = vsub.s32 %v6999, %v7563
    %v7565 = vrot.slane %v6910, %v7564
    %v7566 = vsel %vm7004, %v7565, %v7561
    %v7567 = vlaneseq
    %v7568 = vshrl.u32 %v7567, 7
    %v7569 = vsub.s32 %v7006, %v7568
    %v7570 = vrot.slane %v6913, %v7569
    %v7571 = vsel %vm7011, %v7570, %v7566
    %v7572 = vlaneseq
    %v7573 = vshrl.u32 %v7572, 7
    %v7574 = vsub.s32 %v7013, %v7573
    %v7575 = vrot.slane %v6916, %v7574
    %v7576 = vsel %vm7018, %v7575, %v7571
    %v7577 = vlaneseq
    %v7578 = vshrl.u32 %v7577, 7
    %v7579 = vsub.s32 %v7020, %v7578
    %v7580 = vrot.slane %v6919, %v7579
    %v7581 = vsel %vm7025, %v7580, %v7576
    %v7582 = vlaneseq
    %v7583 = vshrl.u32 %v7582, 7
    %v7584 = vsub.s32 %v7027, %v7583
    %v7585 = vrot.slane %v6922, %v7584
    %v7586 = vsel %vm7032, %v7585, %v7581
    %vm7587 = vcmask 1041409
    %v7588 = vsel %vm7587, %v7349, %v7033
    %v7589 = vsel %vm7587, %v7428, %v7112
    %v7590 = vsel %vm7587, %v7507, %v7191
    %v7591 = vsel %vm7587, %v7586, %v7270
    %v7592 = vcombine.low %v7588, %v7589
    %v7593 = vcombine.low %v7590, %v7591
    %v7595 = vunpack.c.l.s4 1983009808
    %v7596 = vunpack.c.0.s8 %v7595
    %v7597 = vlaneseq
    %v7598 = vshrl.u32 %v7597, 7
    %v7599 = vsub.s32 %v7596, %v7598
    %v7600 = vrot.slane %v7592, %v7599
    %v7602 = vunpack.c.l.s4 1983009808
    %v7603 = vunpack.c.0.s8 %v7602
    %v7604 = vlaneseq
    %v7605 = vshrl.u32 %v7604, 7
    %v7606 = vsub.s32 %v7603, %v7605
    %v7607 = vrot.slane %v7593, %v7606
    %v7608 = vcombine.low %v7600, %v7607
    %7610 = vst [vmem:[#allocation2] sm:$0xff] %v7608
    // Predicated region
    $region6: #{tpu_custom_call.1} parent=1 // pred_check
      _
    $region7: #{tpu_custom_call.1} parent=1 // pred_check_branch
      %7612 = sbr.rel (0) target = $region9
    $region8: #{tpu_custom_call.1} parent=1 // pred_region
      %s7614 = ssub.s32 128, 128
      %7615 = vsyncadd [#allocation3], %s7614
      %s7617 = sshll.u32 [#allocation2], 4
      %s7618 = int_to_ptr.vmem [resolvable:$true] %s7617
      %7620 = dma.vmem_to_hbm [thread:$0]  %s7618, 128, %s1, [#allocation3]
    $region9: #{tpu_custom_call.1} parent=1 // pred_fallthru
      _
    // Predicated region
    $region10: #{tpu_custom_call.1} parent=1 // pred_check
      _
    $region11: #{tpu_custom_call.1} parent=1 // pred_check_branch
      %7622 = sbr.rel (0) target = $region13
    $region12: #{tpu_custom_call.1} parent=1 // pred_region
      %7623 = dma.done [#allocation3], 128
    $region13: #{tpu_custom_call.1} parent=1 // pred_fallthru
      _
    %7624 = vsyncpa [#allocation3], 1

</llo_original>
